<compile_context>
chip_gen: v7x
topology: tpu7x:2x2x1
jax: 0.10.0
libtpu: 0.0.40
codegen_flags: <defaults>
</compile_context>

<pallas_src>
import functools
import math

import jax
import jax.numpy as jnp
from jax import lax
from jax.experimental import pallas as pl
from jax.experimental.pallas import tpu as pltpu


def _gen_timing_signal(length, channels, min_timescale=1.0, max_timescale=1.0e4):
    """Sinusoidal timing signal, same construction as the PyTorch reference."""
    position = jnp.arange(length, dtype=jnp.float32)
    num_timescales = channels // 2
    log_timescale_increment = (
        math.log(float(max_timescale) / float(min_timescale))
        / max(float(num_timescales) - 1.0, 1.0)
    )
    inv_timescales = min_timescale * jnp.exp(
        jnp.arange(num_timescales, dtype=jnp.float32) * -log_timescale_increment
    )
    scaled_time = position[:, None] * inv_timescales[None, :]
    signal = jnp.concatenate([jnp.sin(scaled_time), jnp.cos(scaled_time)], axis=1)
    signal = jnp.pad(signal, ((0, 0), (0, channels % 2)))
    return signal.reshape(1, length, channels)  # [1, length, channels]


def _encoder_act_kernel(
    x_ref,        # [TILE_L, E] bf16  input tile (one batch row, TILE_L tokens)
    wproj_ref,    # [E, H] bf16       embedding_proj weight (transposed PyTorch layout)
    time_ref,     # [TILE_L, H] f32   timing-signal tile (shared across batch)
    pos_ref,      # [max_hop, H] f32  per-hop position signal
    wp_ref,       # [1, H] f32        ACT halting-linear weight (row vector)
    bp_ref,       # [1, 1] f32        ACT halting-linear bias (init 1.0)
    ln1_g_ref,    # [1, H]            EncoderLayer pre-LN gamma
    ln1_b_ref,    # [1, H]
    w1_ref,       # [H, F] bf16       FFN weights
    b1_ref,       # [1, F]
    w2_ref,       # [F, H] bf16
    b2_ref,       # [1, H]
    lnf_g_ref,    # [1, H]            final Encoder layer_norm gamma
    lnf_b_ref,    # [1, H]
    y_ref,        # [TILE_L, H]       output y
    rem_ref,      # [TILE_L, 1]       output remainders
    nup_ref,      # [TILE_L, 1]       output n_updates
    *,
    max_hop,
    threshold,
    eps,
):
    # input_dropout(p=0.0) -> identity; embedding_proj (no bias): x arrives
    # pre-cast to bf16 in the wrapper, f32 accumulation on the MXU.
    state0 = jnp.dot(x_ref[...], wproj_ref[...], preferred_element_type=jnp.float32)

    time = time_ref[...]
    wp_row = wp_ref[...]          # [1, H]
    bp = bp_ref[...]              # [1, 1]
    ln1_g = ln1_g_ref[...]
    ln1_b = ln1_b_ref[...]
    w1 = w1_ref[...]
    b1 = b1_ref[...]
    w2 = w2_ref[...]
    b2 = b2_ref[...]

    n = state0.shape[0]

    def layer_norm(v, g, b):
        # Two-pass LN (var of v - mu): robust to the residual state growing over hops.
        mu = jnp.mean(v, axis=-1, keepdims=True)
        d = v - mu
        var = jnp.mean(d * d, axis=-1, keepdims=True)
        return d * lax.rsqrt(var + eps) * g + b

    def enc_layer(s):
        # TODO(synk): the EncoderLayer class is not provided in the reference; only a
        # pre-LayerNorm position-wise FFN sublayer with residual is implemented here
        # (the multi-head self-attention sublayer is omitted, not faked).
        s_norm = layer_norm(s, ln1_g, ln1_b).astype(jnp.bfloat16)
        hid = jnp.dot(s_norm, w1, preferred_element_type=jnp.float32) + b1
        # ReLU in f32, then carry the [TILE_L, F] intermediate in bf16
        # (ReLU commutes with the cast; halves the largest per-hop VMEM tenant).
        hid = jnp.maximum(hid, 0.0).astype(jnp.bfloat16)
        ffn = jnp.dot(hid, w2, preferred_element_type=jnp.float32) + b2
        return s + ffn

    def step_fn(step, carry):
        state, hp, rem, nup, prev = carry
        # state = state + time_enc[:, :L, :] + pos_enc[:, step, :]
        state = state + time
        state = state + pos_ref[pl.ds(step, 1), :]
        # p = sigmoid(Linear(state)).squeeze(-1): width-1 projection on the
        # VPU (mul) + XLU (lane reduce) so the MXU is left for the FFN matmuls.
        p = jax.nn.sigmoid(
            jnp.sum(state * wp_row, axis=-1, keepdims=True) + bp
        )  # [TILE_L, 1]
        still_running = (hp < 1.0).astype(jnp.float32)
        new_halted = ((hp + p * still_running) > threshold).astype(jnp.float32) * still_running
        still_running = ((hp + p * still_running) <= threshold).astype(jnp.float32) * still_running
        hp = hp + p * still_running
        rem = rem + new_halted * (1.0 - hp)
        hp = hp + new_halted * rem
        nup = nup + still_running + new_halted
        uw = p * still_running + new_halted * rem
        state = enc_layer(state)
        prev = state * uw + prev * (1.0 - uw)
        return (state, hp, rem, nup, prev)

    zeros_col = jnp.zeros((n, 1), jnp.float32)
    carry0 = (state0, zeros_col, zeros_col, zeros_col, jnp.zeros_like(state0))
    # Full unroll for small hop counts (lets the LLO scheduler pipeline MXU pushes
    # across hop boundaries); partial unroll for large hop counts to avoid
    # vreg-spill from long live ranges of the big f32 carries.
    unroll = True if max_hop <= 6 else 2
    _, _, rem, nup, prev = lax.fori_loop(0, max_hop, step_fn, carry0, unroll=unroll)

    # Encoder's final LayerNorm on the ACT-weighted state.
    # TODO(synk): eps=1e-6 matches the custom LayerNorm used in this repo family;
    # nn.LayerNorm's default would be 1e-5.
    y_ref[...] = layer_norm(prev, lnf_g_ref[...], lnf_b_ref[...])
    rem_ref[...] = rem
    nup_ref[...] = nup


def init_params(key, embedding_size, hidden_size, num_layers, filter_size, max_length):
    ks = jax.random.split(key, 4)
    scale = 0.05
    return {
        "w_proj": scale * jax.random.normal(ks[0], (embedding_size, hidden_size), jnp.float32),
        "w_p": scale * jax.random.normal(ks[1], (hidden_size, 1), jnp.float32),
        "b_p": jnp.ones((1, 1), jnp.float32),  # self.p.bias.data.fill_(1)
        "ln1_g": jnp.ones((1, hidden_size), jnp.float32),
        "ln1_b": jnp.zeros((1, hidden_size), jnp.float32),
        "w1": scale * jax.random.normal(ks[2], (hidden_size, filter_size), jnp.float32),
        "b1": jnp.zeros((1, filter_size), jnp.float32),
        "w2": scale * jax.random.normal(ks[3], (filter_size, hidden_size), jnp.float32),
        "b2": jnp.zeros((1, hidden_size), jnp.float32),
        "lnf_g": jnp.ones((1, hidden_size), jnp.float32),
        "lnf_b": jnp.zeros((1, hidden_size), jnp.float32),
        "timing_signal": _gen_timing_signal(max_length, hidden_size),
        "position_signal": _gen_timing_signal(num_layers, hidden_size),
    }


def _round_up(x, m):
    return ((x + m - 1) // m) * m


def _tpu_budget():
    """(target_tile_l, vmem_limit_bytes, is_dual_core) gated on the TPU generation."""
    vmem_bytes = None
    try:
        info = pltpu.get_tpu_info()
        vmem_bytes = getattr(info, "vmem_capacity_bytes", None)
    except Exception:
        vmem_bytes = None
    if vmem_bytes is None:
        try:
            kind = jax.devices()[0].device_kind.lower()
        except Exception:
            kind = ""
        vmem_bytes = 64 * 2**20 if ("v7" in kind or "tpu7" in kind) else 128 * 2**20
    if vmem_bytes >= 100 * 2**20:
        # v5e / v6e (and v4/v5p): 128 MiB physical VMEM, single TensorCore.
        return 512, 64 * 2**20, False
    # v7x: 64 MiB physical VMEM (32 MiB scoped default), 2 TensorCores per chip.
    return 256, 32 * 2**20, True


def encoder_forward(inputs, mask, params, *, num_layers):
    """inputs: [B, L, E].  mask is unused in the universal+ACT path (kept for parity)."""
    del mask
    B, L, E = inputs.shape
    H = params["w_proj"].shape[1]
    # previous_state = zeros_like(inputs) is blended with the hidden-size state,
    # so the ACT path only makes sense when embedding_size == hidden_size.
    assert E == H, "ACT path requires embedding_size == hidden_size"

    target_tile_l, vmem_limit, dual_core = _tpu_budget()

    # Pad the sequence so TILE_L is always a multiple of 128: the MXU never sees
    # a sub-128 M dimension, stores stay unmasked, and tiling is deterministic.
    if L <= target_tile_l:
        TILE_L = _round_up(L, 128)
    else:
        TILE_L = target_tile_l                 # target is a multiple of 128
    L_pad = _round_up(L, TILE_L)
    # v7x: the two TensorCores are sharded over the 'parallel' grid axes — make
    # sure there are at least 2 grid points so a core isn't left idle.
    if dual_core and B * (L_pad // TILE_L) < 2 and TILE_L >= 256:
        TILE_L //= 2
    grid = (L_pad // TILE_L, B)                # seq-tiles outer, batch inner

    # x is only consumed as the bf16 LHS of embedding_proj — cast in the wrapper
    # so its HBM->VMEM tile (and double-buffered VMEM footprint) is halved.
    x = inputs.astype(jnp.bfloat16)
    timing = params["timing_signal"][:, :L, :].astype(jnp.float32)  # [1, L, H]
    if L_pad != L:
        x = jnp.pad(x, ((0, 0), (0, L_pad - L), (0, 0)))
        timing = jnp.pad(timing, ((0, 0), (0, L_pad - L), (0, 0)))
    pos = params["position_signal"][0]         # [num_layers, H]
    wproj = params["w_proj"].astype(jnp.bfloat16)
    w1 = params["w1"].astype(jnp.bfloat16)
    w2 = params["w2"].astype(jnp.bfloat16)
    wp_row = params["w_p"].reshape(1, H)

    args = (
        x, wproj, timing, pos, wp_row, params["b_p"],
        params["ln1_g"], params["ln1_b"],
        w1, params["b1"], w2, params["b2"],
        params["lnf_g"], params["lnf_b"],
    )

    def const_spec(a):
        # Constant across the whole grid: keep a single VMEM-resident copy
        # (default double-buffering would just duplicate the weights in VMEM).
        nd = a.ndim
        return pl.BlockSpec(a.shape, lambda j, b, _nd=nd: (0,) * _nd,
                            pipeline_mode=pl.Buffered(1))

    in_specs = [
        pl.BlockSpec((pl.Squeezed(), TILE_L, E), lambda j, b: (b, j, 0)),   # x (bf16)
        const_spec(wproj),
        # Timing: batch block index fixed at 0 and batch is the INNER grid axis,
        # so the same [TILE_L, H] timing tile is reused (no re-DMA) for B-1 of
        # every B grid steps.
        pl.BlockSpec((pl.Squeezed(), TILE_L, H), lambda j, b: (0, j, 0)),
        const_spec(pos),
        const_spec(wp_row),
        const_spec(params["b_p"]),
        const_spec(params["ln1_g"]),
        const_spec(params["ln1_b"]),
        const_spec(w1),
        const_spec(params["b1"]),
        const_spec(w2),
        const_spec(params["b2"]),
        const_spec(params["lnf_g"]),
        const_spec(params["lnf_b"]),
    ]
    out_specs = (
        pl.BlockSpec((pl.Squeezed(), TILE_L, H), lambda j, b: (b, j, 0)),
        pl.BlockSpec((pl.Squeezed(), TILE_L, 1), lambda j, b: (b, j, 0)),
        pl.BlockSpec((pl.Squeezed(), TILE_L, 1), lambda j, b: (b, j, 0)),
    )

    kernel = functools.partial(
        _encoder_act_kernel, max_hop=num_layers, threshold=1.0 - 0.1, eps=1e-6
    )

    y, rem, nup = pl.pallas_call(
        kernel,
        out_shape=(
            jax.ShapeDtypeStruct((B, L_pad, H), jnp.float32),
            jax.ShapeDtypeStruct((B, L_pad, 1), jnp.float32),
            jax.ShapeDtypeStruct((B, L_pad, 1), jnp.float32),
        ),
        grid=grid,
        in_specs=in_specs,
        out_specs=out_specs,
        compiler_params=pltpu.CompilerParams(
            dimension_semantics=("parallel", "parallel"),
            vmem_limit_bytes=vmem_limit,
        ),
    )(*args)

    y = y[:, :L, :]
    remainders = rem[:, :L, 0]
    n_updates = nup[:, :L, 0]
    return y, (remainders, n_updates)


def encoder_reference(inputs, params, *, num_layers, eps=1e-6, threshold=0.9):
    """Pure-JAX f32 reference of the same forward (fixed max_hop loop)."""
    B, L, _ = inputs.shape
    x = inputs.astype(jnp.float32)
    state = x @ params["w_proj"]
    time = params["timing_signal"][:, :L, :]
    pos = params["position_signal"][0]
    wp = params["w_p"][:, 0]
    bp = params["b_p"][0, 0]

    def layer_norm(v, g, b):
        mu = jnp.mean(v, axis=-1, keepdims=True)
        d = v - mu
        var = jnp.mean(d * d, axis=-1, keepdims=True)
        return d * lax.rsqrt(var + eps) * g + b

    def enc_layer(s):
        s_norm = layer_norm(s, params["ln1_g"], params["ln1_b"])
        hid = jnp.maximum(s_norm @ params["w1"] + params["b1"], 0.0)
        return s + hid @ params["w2"] + params["b2"]

    hp = jnp.zeros((B, L), jnp.float32)
    rem = jnp.zeros((B, L), jnp.float32)
    nup = jnp.zeros((B, L), jnp.float32)
    prev = jnp.zeros_like(state)
    for step in range(num_layers):
        state = state + time
        state = state + pos[step][None, None, :]
        p = jax.nn.sigmoid(jnp.einsum("blh,h->bl", state, wp) + bp)
        still = (hp < 1.0).astype(jnp.float32)
        new_halted = ((hp + p * still) > threshold).astype(jnp.float32) * still
        still = ((hp + p * still) <= threshold).astype(jnp.float32) * still
        hp = hp + p * still
        rem = rem + new_halted * (1.0 - hp)
        hp = hp + new_halted * rem
        nup = nup + still + new_halted
        uw = (p * still + new_halted * rem)[..., None]
        state = enc_layer(state)
        prev = state * uw + prev * (1.0 - uw)
    y = layer_norm(prev, params["lnf_g"], params["lnf_b"])
    return y, (rem, nup)


if __name__ == "__main__":
    # Small shapes consistent with the module; ACT requires embedding_size == hidden_size.
    B, L = 2, 8
    embedding_size = hidden_size = 32
    num_layers = 2
    filter_size = 64
    max_length = 64

    key = jax.random.PRNGKey(0)
    k_inp, k_par = jax.random.split(key)
    inputs = jax.random.normal(k_inp, (B, L, embedding_size), jnp.float32)
    mask = None  # unused in the universal + ACT branch

    params = init_params(k_par, embedding_size, hidden_size, num_layers,
                         filter_size, max_length)

    y, (remainders, n_updates) = encoder_forward(inputs, mask, params,
                                                 num_layers=num_layers)
    jax.block_until_ready((y, remainders, n_updates))

    assert y.shape == (B, L, hidden_size)
    assert remainders.shape == (B, L)
    assert n_updates.shape == (B, L)
    assert bool(jnp.all(jnp.isfinite(y)))

    # Tolerance-checked pure-JAX reference (f32 everywhere; kernel uses bf16 matmuls).
    y_ref, (rem_ref, nup_ref) = encoder_reference(inputs, params, num_layers=num_layers)
    assert float(jnp.max(jnp.abs(y - y_ref))) < 5e-2
    assert float(jnp.max(jnp.abs(remainders - rem_ref))) < 5e-2
    assert float(jnp.max(jnp.abs(n_updates - nup_ref))) < 5e-2

    print("KERNEL_OK")
</pallas_src>

<mosaic_0001>
module attributes {stable_mosaic.version = 11 : i64} {
  func.func @_encoder_act_kernel(%arg0: i32, %arg1: i32, %arg2: memref<1x128x32xbf16, #tpu.memory_space<vmem>>, %arg3: memref<32x32xbf16, #tpu.memory_space<vmem>>, %arg4: memref<1x128x32xf32, #tpu.memory_space<vmem>>, %arg5: memref<2x32xf32, #tpu.memory_space<vmem>>, %arg6: memref<1x32xf32, #tpu.memory_space<vmem>>, %arg7: memref<1x1xf32, #tpu.memory_space<vmem>>, %arg8: memref<1x32xf32, #tpu.memory_space<vmem>>, %arg9: memref<1x32xf32, #tpu.memory_space<vmem>>, %arg10: memref<32x64xbf16, #tpu.memory_space<vmem>>, %arg11: memref<1x64xf32, #tpu.memory_space<vmem>>, %arg12: memref<64x32xbf16, #tpu.memory_space<vmem>>, %arg13: memref<1x32xf32, #tpu.memory_space<vmem>>, %arg14: memref<1x32xf32, #tpu.memory_space<vmem>>, %arg15: memref<1x32xf32, #tpu.memory_space<vmem>>, %arg16: memref<1x128x32xf32, #tpu.memory_space<vmem>>, %arg17: memref<1x128x1xf32, #tpu.memory_space<vmem>>, %arg18: memref<1x128x1xf32, #tpu.memory_space<vmem>>) attributes {dimension_semantics = [#tpu.dimension_semantics<parallel>, #tpu.dimension_semantics<parallel>], iteration_bounds = array<i64: 1, 2>, scalar_prefetch = 0 : i64, scratch_operands = 0 : i64, tpu.core_type = #tpu.core_type<tc>, window_params = [{transform_indices = @transform_0, window_bounds = array<i64: 1, 128, 32>}, {pipeline_mode = #tpu.pipeline_mode<synchronous>, transform_indices = @transform_1, window_bounds = array<i64: 32, 32>}, {transform_indices = @transform_2, window_bounds = array<i64: 1, 128, 32>}, {pipeline_mode = #tpu.pipeline_mode<synchronous>, transform_indices = @transform_3, window_bounds = array<i64: 2, 32>}, {pipeline_mode = #tpu.pipeline_mode<synchronous>, transform_indices = @transform_4, window_bounds = array<i64: 1, 32>}, {pipeline_mode = #tpu.pipeline_mode<synchronous>, transform_indices = @transform_5, window_bounds = array<i64: 1, 1>}, {pipeline_mode = #tpu.pipeline_mode<synchronous>, transform_indices = @transform_6, window_bounds = array<i64: 1, 32>}, {pipeline_mode = #tpu.pipeline_mode<synchronous>, transform_indices = @transform_7, window_bounds = array<i64: 1, 32>}, {pipeline_mode = #tpu.pipeline_mode<synchronous>, transform_indices = @transform_8, window_bounds = array<i64: 32, 64>}, {pipeline_mode = #tpu.pipeline_mode<synchronous>, transform_indices = @transform_9, window_bounds = array<i64: 1, 64>}, {pipeline_mode = #tpu.pipeline_mode<synchronous>, transform_indices = @transform_10, window_bounds = array<i64: 64, 32>}, {pipeline_mode = #tpu.pipeline_mode<synchronous>, transform_indices = @transform_11, window_bounds = array<i64: 1, 32>}, {pipeline_mode = #tpu.pipeline_mode<synchronous>, transform_indices = @transform_12, window_bounds = array<i64: 1, 32>}, {pipeline_mode = #tpu.pipeline_mode<synchronous>, transform_indices = @transform_13, window_bounds = array<i64: 1, 32>}, {transform_indices = @transform_14, window_bounds = array<i64: 1, 128, 32>}, {transform_indices = @transform_15, window_bounds = array<i64: 1, 128, 1>}, {transform_indices = @transform_16, window_bounds = array<i64: 1, 128, 1>}]} {
    %c0 = arith.constant 0 : index
    %c0_0 = arith.constant 0 : index
    %c0_1 = arith.constant 0 : index
    %0 = vector.load %arg2[%c0, %c0_0, %c0_1] : memref<1x128x32xbf16, #tpu.memory_space<vmem>>, vector<1x128x32xbf16>
    %1 = vector.shape_cast %0 : vector<1x128x32xbf16> to vector<128x32xbf16>
    %c0_2 = arith.constant 0 : index
    %c0_3 = arith.constant 0 : index
    %2 = vector.load %arg3[%c0_2, %c0_3] : memref<32x32xbf16, #tpu.memory_space<vmem>>, vector<32x32xbf16>
    %cst = arith.constant dense<0.000000e+00> : vector<128x32xf32>
    %3 = tpu.matmul %1, %2, %cst {dimension_numbers = #tpu.dot_dimension_numbers<[1], [0], [0], [1], [0, 0, 1, 1], [], []>} : vector<128x32xbf16>, vector<32x32xbf16>, vector<128x32xf32> -> vector<128x32xf32>
    %c0_4 = arith.constant 0 : index
    %c0_5 = arith.constant 0 : index
    %c0_6 = arith.constant 0 : index
    %4 = vector.load %arg4[%c0_4, %c0_5, %c0_6] : memref<1x128x32xf32, #tpu.memory_space<vmem>>, vector<1x128x32xf32>
    %5 = vector.shape_cast %4 : vector<1x128x32xf32> to vector<128x32xf32>
    %c0_7 = arith.constant 0 : index
    %c0_8 = arith.constant 0 : index
    %6 = vector.load %arg6[%c0_7, %c0_8] : memref<1x32xf32, #tpu.memory_space<vmem>>, vector<1x32xf32>
    %c0_9 = arith.constant 0 : index
    %c0_10 = arith.constant 0 : index
    %7 = vector.load %arg7[%c0_9, %c0_10] : memref<1x1xf32, #tpu.memory_space<vmem>>, vector<1x1xf32>
    %c0_11 = arith.constant 0 : index
    %c0_12 = arith.constant 0 : index
    %8 = vector.load %arg8[%c0_11, %c0_12] : memref<1x32xf32, #tpu.memory_space<vmem>>, vector<1x32xf32>
    %c0_13 = arith.constant 0 : index
    %c0_14 = arith.constant 0 : index
    %9 = vector.load %arg9[%c0_13, %c0_14] : memref<1x32xf32, #tpu.memory_space<vmem>>, vector<1x32xf32>
    %c0_15 = arith.constant 0 : index
    %c0_16 = arith.constant 0 : index
    %10 = vector.load %arg10[%c0_15, %c0_16] : memref<32x64xbf16, #tpu.memory_space<vmem>>, vector<32x64xbf16>
    %c0_17 = arith.constant 0 : index
    %c0_18 = arith.constant 0 : index
    %11 = vector.load %arg11[%c0_17, %c0_18] : memref<1x64xf32, #tpu.memory_space<vmem>>, vector<1x64xf32>
    %c0_19 = arith.constant 0 : index
    %c0_20 = arith.constant 0 : index
    %12 = vector.load %arg12[%c0_19, %c0_20] : memref<64x32xbf16, #tpu.memory_space<vmem>>, vector<64x32xbf16>
    %c0_21 = arith.constant 0 : index
    %c0_22 = arith.constant 0 : index
    %13 = vector.load %arg13[%c0_21, %c0_22] : memref<1x32xf32, #tpu.memory_space<vmem>>, vector<1x32xf32>
    %cst_23 = arith.constant 0.000000e+00 : f32
    %14 = vector.broadcast %cst_23 : f32 to vector<128x1xf32>
    %cst_24 = arith.constant 0.000000e+00 : f32
    %15 = vector.broadcast %cst_24 : f32 to vector<128x32xf32>
    %c0_i32 = arith.constant 0 : i32
    %16 = arith.addf %3, %5 : vector<128x32xf32>
    %17 = arith.index_cast %c0_i32 : i32 to index
    %c0_25 = arith.constant 0 : index
    %18 = vector.load %arg5[%17, %c0_25] : memref<2x32xf32, #tpu.memory_space<vmem>>, vector<1x32xf32>
    %19 = vector.broadcast %18 : vector<1x32xf32> to vector<128x32xf32>
    %20 = arith.addf %16, %19 : vector<128x32xf32>
    %21 = vector.broadcast %6 : vector<1x32xf32> to vector<128x32xf32>
    %22 = arith.mulf %20, %21 : vector<128x32xf32>
    %cst_26 = arith.constant dense<0.000000e+00> : vector<128xf32>
    %23 = vector.multi_reduction <add>, %22, %cst_26 [1] : vector<128x32xf32> to vector<128xf32>
    %24 = vector.shape_cast %23 : vector<128xf32> to vector<128x1xf32>
    %25 = vector.broadcast %7 : vector<1x1xf32> to vector<128x1xf32>
    %26 = arith.addf %24, %25 : vector<128x1xf32>
    %27 = arith.negf %26 : vector<128x1xf32>
    %28 = math.exp %27 : vector<128x1xf32>
    %cst_27 = arith.constant 1.000000e+00 : f32
    %29 = vector.broadcast %cst_27 : f32 to vector<128x1xf32>
    %30 = arith.addf %29, %28 : vector<128x1xf32>
    %31 = arith.divf %29, %30 : vector<128x1xf32>
    %cst_28 = arith.constant 1.000000e+00 : f32
    %32 = vector.broadcast %cst_28 : f32 to vector<128x1xf32>
    %33 = arith.cmpf olt, %14, %32 : vector<128x1xf32>
    %34 = arith.extui %33 : vector<128x1xi1> to vector<128x1xi32>
    %35 = arith.sitofp %34 : vector<128x1xi32> to vector<128x1xf32>
    %36 = arith.mulf %31, %35 : vector<128x1xf32>
    %37 = arith.addf %14, %36 : vector<128x1xf32>
    %cst_29 = arith.constant 0.899999976 : f32
    %38 = vector.broadcast %cst_29 : f32 to vector<128x1xf32>
    %39 = arith.cmpf ogt, %37, %38 : vector<128x1xf32>
    %40 = arith.extui %39 : vector<128x1xi1> to vector<128x1xi32>
    %41 = arith.sitofp %40 : vector<128x1xi32> to vector<128x1xf32>
    %42 = arith.mulf %41, %35 : vector<128x1xf32>
    %43 = arith.mulf %31, %35 : vector<128x1xf32>
    %44 = arith.addf %14, %43 : vector<128x1xf32>
    %cst_30 = arith.constant 0.899999976 : f32
    %45 = vector.broadcast %cst_30 : f32 to vector<128x1xf32>
    %46 = arith.cmpf ole, %44, %45 : vector<128x1xf32>
    %47 = arith.extui %46 : vector<128x1xi1> to vector<128x1xi32>
    %48 = arith.sitofp %47 : vector<128x1xi32> to vector<128x1xf32>
    %49 = arith.mulf %48, %35 : vector<128x1xf32>
    %50 = arith.mulf %31, %49 : vector<128x1xf32>
    %51 = arith.addf %14, %50 : vector<128x1xf32>
    %cst_31 = arith.constant 1.000000e+00 : f32
    %52 = vector.broadcast %cst_31 : f32 to vector<128x1xf32>
    %53 = arith.subf %52, %51 : vector<128x1xf32>
    %54 = arith.mulf %42, %53 : vector<128x1xf32>
    %55 = arith.addf %14, %54 : vector<128x1xf32>
    %56 = arith.mulf %42, %55 : vector<128x1xf32>
    %57 = arith.addf %51, %56 : vector<128x1xf32>
    %58 = arith.addf %14, %49 : vector<128x1xf32>
    %59 = arith.addf %58, %42 : vector<128x1xf32>
    %60 = arith.mulf %31, %49 : vector<128x1xf32>
    %61 = arith.mulf %42, %55 : vector<128x1xf32>
    %62 = arith.addf %60, %61 : vector<128x1xf32>
    %cst_32 = arith.constant dense<0.000000e+00> : vector<128xf32>
    %63 = vector.multi_reduction <add>, %20, %cst_32 [1] : vector<128x32xf32> to vector<128xf32>
    %64 = vector.shape_cast %63 : vector<128xf32> to vector<128x1xf32>
    %cst_33 = arith.constant 3.200000e+01 : f32
    %65 = vector.broadcast %cst_33 : f32 to vector<128x1xf32>
    %66 = arith.divf %64, %65 : vector<128x1xf32>
    %67 = vector.broadcast %66 : vector<128x1xf32> to vector<128x32xf32>
    %68 = arith.subf %20, %67 : vector<128x32xf32>
    %69 = arith.mulf %68, %68 : vector<128x32xf32>
    %cst_34 = arith.constant dense<0.000000e+00> : vector<128xf32>
    %70 = vector.multi_reduction <add>, %69, %cst_34 [1] : vector<128x32xf32> to vector<128xf32>
    %71 = vector.shape_cast %70 : vector<128xf32> to vector<128x1xf32>
    %cst_35 = arith.constant 3.200000e+01 : f32
    %72 = vector.broadcast %cst_35 : f32 to vector<128x1xf32>
    %73 = arith.divf %71, %72 : vector<128x1xf32>
    %cst_36 = arith.constant 9.99999997E-7 : f32
    %74 = vector.broadcast %cst_36 : f32 to vector<128x1xf32>
    %75 = arith.addf %73, %74 : vector<128x1xf32>
    %76 = math.rsqrt %75 : vector<128x1xf32>
    %77 = vector.broadcast %76 : vector<128x1xf32> to vector<128x32xf32>
    %78 = arith.mulf %68, %77 : vector<128x32xf32>
    %79 = vector.broadcast %8 : vector<1x32xf32> to vector<128x32xf32>
    %80 = arith.mulf %78, %79 : vector<128x32xf32>
    %81 = vector.broadcast %9 : vector<1x32xf32> to vector<128x32xf32>
    %82 = arith.addf %80, %81 : vector<128x32xf32>
    %83 = arith.truncf %82 : vector<128x32xf32> to vector<128x32xbf16>
    %cst_37 = arith.constant dense<0.000000e+00> : vector<128x64xf32>
    %84 = tpu.matmul %83, %10, %cst_37 {dimension_numbers = #tpu.dot_dimension_numbers<[1], [0], [0], [1], [0, 0, 1, 1], [], []>} : vector<128x32xbf16>, vector<32x64xbf16>, vector<128x64xf32> -> vector<128x64xf32>
    %85 = vector.broadcast %11 : vector<1x64xf32> to vector<128x64xf32>
    %86 = arith.addf %84, %85 : vector<128x64xf32>
    %cst_38 = arith.constant 0.000000e+00 : f32
    %87 = vector.broadcast %cst_38 : f32 to vector<128x64xf32>
    %88 = arith.maximumf %86, %87 : vector<128x64xf32>
    %89 = arith.truncf %88 : vector<128x64xf32> to vector<128x64xbf16>
    %cst_39 = arith.constant dense<0.000000e+00> : vector<128x32xf32>
    %90 = tpu.matmul %89, %12, %cst_39 {dimension_numbers = #tpu.dot_dimension_numbers<[1], [0], [0], [1], [0, 0, 1, 1], [], []>} : vector<128x64xbf16>, vector<64x32xbf16>, vector<128x32xf32> -> vector<128x32xf32>
    %91 = vector.broadcast %13 : vector<1x32xf32> to vector<128x32xf32>
    %92 = arith.addf %90, %91 : vector<128x32xf32>
    %93 = arith.addf %20, %92 : vector<128x32xf32>
    %94 = vector.broadcast %62 : vector<128x1xf32> to vector<128x32xf32>
    %95 = arith.mulf %93, %94 : vector<128x32xf32>
    %cst_40 = arith.constant 1.000000e+00 : f32
    %96 = vector.broadcast %cst_40 : f32 to vector<128x1xf32>
    %97 = arith.subf %96, %62 : vector<128x1xf32>
    %98 = vector.broadcast %97 : vector<128x1xf32> to vector<128x32xf32>
    %99 = arith.mulf %15, %98 : vector<128x32xf32>
    %100 = arith.addf %95, %99 : vector<128x32xf32>
    %c1_i32 = arith.constant 1 : i32
    %101 = arith.addf %93, %5 : vector<128x32xf32>
    %102 = arith.index_cast %c1_i32 : i32 to index
    %c0_41 = arith.constant 0 : index
    %103 = vector.load %arg5[%102, %c0_41] : memref<2x32xf32, #tpu.memory_space<vmem>>, vector<1x32xf32>
    %104 = vector.broadcast %103 : vector<1x32xf32> to vector<128x32xf32>
    %105 = arith.addf %101, %104 : vector<128x32xf32>
    %106 = vector.broadcast %6 : vector<1x32xf32> to vector<128x32xf32>
    %107 = arith.mulf %105, %106 : vector<128x32xf32>
    %cst_42 = arith.constant dense<0.000000e+00> : vector<128xf32>
    %108 = vector.multi_reduction <add>, %107, %cst_42 [1] : vector<128x32xf32> to vector<128xf32>
    %109 = vector.shape_cast %108 : vector<128xf32> to vector<128x1xf32>
    %110 = vector.broadcast %7 : vector<1x1xf32> to vector<128x1xf32>
    %111 = arith.addf %109, %110 : vector<128x1xf32>
    %112 = arith.negf %111 : vector<128x1xf32>
    %113 = math.exp %112 : vector<128x1xf32>
    %cst_43 = arith.constant 1.000000e+00 : f32
    %114 = vector.broadcast %cst_43 : f32 to vector<128x1xf32>
    %115 = arith.addf %114, %113 : vector<128x1xf32>
    %116 = arith.divf %114, %115 : vector<128x1xf32>
    %cst_44 = arith.constant 1.000000e+00 : f32
    %117 = vector.broadcast %cst_44 : f32 to vector<128x1xf32>
    %118 = arith.cmpf olt, %57, %117 : vector<128x1xf32>
    %119 = arith.extui %118 : vector<128x1xi1> to vector<128x1xi32>
    %120 = arith.sitofp %119 : vector<128x1xi32> to vector<128x1xf32>
    %121 = arith.mulf %116, %120 : vector<128x1xf32>
    %122 = arith.addf %57, %121 : vector<128x1xf32>
    %cst_45 = arith.constant 0.899999976 : f32
    %123 = vector.broadcast %cst_45 : f32 to vector<128x1xf32>
    %124 = arith.cmpf ogt, %122, %123 : vector<128x1xf32>
    %125 = arith.extui %124 : vector<128x1xi1> to vector<128x1xi32>
    %126 = arith.sitofp %125 : vector<128x1xi32> to vector<128x1xf32>
    %127 = arith.mulf %126, %120 : vector<128x1xf32>
    %128 = arith.mulf %116, %120 : vector<128x1xf32>
    %129 = arith.addf %57, %128 : vector<128x1xf32>
    %cst_46 = arith.constant 0.899999976 : f32
    %130 = vector.broadcast %cst_46 : f32 to vector<128x1xf32>
    %131 = arith.cmpf ole, %129, %130 : vector<128x1xf32>
    %132 = arith.extui %131 : vector<128x1xi1> to vector<128x1xi32>
    %133 = arith.sitofp %132 : vector<128x1xi32> to vector<128x1xf32>
    %134 = arith.mulf %133, %120 : vector<128x1xf32>
    %135 = arith.mulf %116, %134 : vector<128x1xf32>
    %136 = arith.addf %57, %135 : vector<128x1xf32>
    %cst_47 = arith.constant 1.000000e+00 : f32
    %137 = vector.broadcast %cst_47 : f32 to vector<128x1xf32>
    %138 = arith.subf %137, %136 : vector<128x1xf32>
    %139 = arith.mulf %127, %138 : vector<128x1xf32>
    %140 = arith.addf %55, %139 : vector<128x1xf32>
    %141 = arith.mulf %127, %140 : vector<128x1xf32>
    %142 = arith.addf %136, %141 : vector<128x1xf32>
    %143 = arith.addf %59, %134 : vector<128x1xf32>
    %144 = arith.addf %143, %127 : vector<128x1xf32>
    %145 = arith.mulf %116, %134 : vector<128x1xf32>
    %146 = arith.mulf %127, %140 : vector<128x1xf32>
    %147 = arith.addf %145, %146 : vector<128x1xf32>
    %cst_48 = arith.constant dense<0.000000e+00> : vector<128xf32>
    %148 = vector.multi_reduction <add>, %105, %cst_48 [1] : vector<128x32xf32> to vector<128xf32>
    %149 = vector.shape_cast %148 : vector<128xf32> to vector<128x1xf32>
    %cst_49 = arith.constant 3.200000e+01 : f32
    %150 = vector.broadcast %cst_49 : f32 to vector<128x1xf32>
    %151 = arith.divf %149, %150 : vector<128x1xf32>
    %152 = vector.broadcast %151 : vector<128x1xf32> to vector<128x32xf32>
    %153 = arith.subf %105, %152 : vector<128x32xf32>
    %154 = arith.mulf %153, %153 : vector<128x32xf32>
    %cst_50 = arith.constant dense<0.000000e+00> : vector<128xf32>
    %155 = vector.multi_reduction <add>, %154, %cst_50 [1] : vector<128x32xf32> to vector<128xf32>
    %156 = vector.shape_cast %155 : vector<128xf32> to vector<128x1xf32>
    %cst_51 = arith.constant 3.200000e+01 : f32
    %157 = vector.broadcast %cst_51 : f32 to vector<128x1xf32>
    %158 = arith.divf %156, %157 : vector<128x1xf32>
    %cst_52 = arith.constant 9.99999997E-7 : f32
    %159 = vector.broadcast %cst_52 : f32 to vector<128x1xf32>
    %160 = arith.addf %158, %159 : vector<128x1xf32>
    %161 = math.rsqrt %160 : vector<128x1xf32>
    %162 = vector.broadcast %161 : vector<128x1xf32> to vector<128x32xf32>
    %163 = arith.mulf %153, %162 : vector<128x32xf32>
    %164 = vector.broadcast %8 : vector<1x32xf32> to vector<128x32xf32>
    %165 = arith.mulf %163, %164 : vector<128x32xf32>
    %166 = vector.broadcast %9 : vector<1x32xf32> to vector<128x32xf32>
    %167 = arith.addf %165, %166 : vector<128x32xf32>
    %168 = arith.truncf %167 : vector<128x32xf32> to vector<128x32xbf16>
    %cst_53 = arith.constant dense<0.000000e+00> : vector<128x64xf32>
    %169 = tpu.matmul %168, %10, %cst_53 {dimension_numbers = #tpu.dot_dimension_numbers<[1], [0], [0], [1], [0, 0, 1, 1], [], []>} : vector<128x32xbf16>, vector<32x64xbf16>, vector<128x64xf32> -> vector<128x64xf32>
    %170 = vector.broadcast %11 : vector<1x64xf32> to vector<128x64xf32>
    %171 = arith.addf %169, %170 : vector<128x64xf32>
    %cst_54 = arith.constant 0.000000e+00 : f32
    %172 = vector.broadcast %cst_54 : f32 to vector<128x64xf32>
    %173 = arith.maximumf %171, %172 : vector<128x64xf32>
    %174 = arith.truncf %173 : vector<128x64xf32> to vector<128x64xbf16>
    %cst_55 = arith.constant dense<0.000000e+00> : vector<128x32xf32>
    %175 = tpu.matmul %174, %12, %cst_55 {dimension_numbers = #tpu.dot_dimension_numbers<[1], [0], [0], [1], [0, 0, 1, 1], [], []>} : vector<128x64xbf16>, vector<64x32xbf16>, vector<128x32xf32> -> vector<128x32xf32>
    %176 = vector.broadcast %13 : vector<1x32xf32> to vector<128x32xf32>
    %177 = arith.addf %175, %176 : vector<128x32xf32>
    %178 = arith.addf %105, %177 : vector<128x32xf32>
    %179 = vector.broadcast %147 : vector<128x1xf32> to vector<128x32xf32>
    %180 = arith.mulf %178, %179 : vector<128x32xf32>
    %cst_56 = arith.constant 1.000000e+00 : f32
    %181 = vector.broadcast %cst_56 : f32 to vector<128x1xf32>
    %182 = arith.subf %181, %147 : vector<128x1xf32>
    %183 = vector.broadcast %182 : vector<128x1xf32> to vector<128x32xf32>
    %184 = arith.mulf %100, %183 : vector<128x32xf32>
    %185 = arith.addf %180, %184 : vector<128x32xf32>
    %c2_i32 = arith.constant 2 : i32
    %c0_57 = arith.constant 0 : index
    %c0_58 = arith.constant 0 : index
    %186 = vector.load %arg14[%c0_57, %c0_58] : memref<1x32xf32, #tpu.memory_space<vmem>>, vector<1x32xf32>
    %c0_59 = arith.constant 0 : index
    %c0_60 = arith.constant 0 : index
    %187 = vector.load %arg15[%c0_59, %c0_60] : memref<1x32xf32, #tpu.memory_space<vmem>>, vector<1x32xf32>
    %cst_61 = arith.constant dense<0.000000e+00> : vector<128xf32>
    %188 = vector.multi_reduction <add>, %185, %cst_61 [1] : vector<128x32xf32> to vector<128xf32>
    %189 = vector.shape_cast %188 : vector<128xf32> to vector<128x1xf32>
    %cst_62 = arith.constant 3.200000e+01 : f32
    %190 = vector.broadcast %cst_62 : f32 to vector<128x1xf32>
    %191 = arith.divf %189, %190 : vector<128x1xf32>
    %192 = vector.broadcast %191 : vector<128x1xf32> to vector<128x32xf32>
    %193 = arith.subf %185, %192 : vector<128x32xf32>
    %194 = arith.mulf %193, %193 : vector<128x32xf32>
    %cst_63 = arith.constant dense<0.000000e+00> : vector<128xf32>
    %195 = vector.multi_reduction <add>, %194, %cst_63 [1] : vector<128x32xf32> to vector<128xf32>
    %196 = vector.shape_cast %195 : vector<128xf32> to vector<128x1xf32>
    %cst_64 = arith.constant 3.200000e+01 : f32
    %197 = vector.broadcast %cst_64 : f32 to vector<128x1xf32>
    %198 = arith.divf %196, %197 : vector<128x1xf32>
    %cst_65 = arith.constant 9.99999997E-7 : f32
    %199 = vector.broadcast %cst_65 : f32 to vector<128x1xf32>
    %200 = arith.addf %198, %199 : vector<128x1xf32>
    %201 = math.rsqrt %200 : vector<128x1xf32>
    %202 = vector.broadcast %201 : vector<128x1xf32> to vector<128x32xf32>
    %203 = arith.mulf %193, %202 : vector<128x32xf32>
    %204 = vector.broadcast %186 : vector<1x32xf32> to vector<128x32xf32>
    %205 = arith.mulf %203, %204 : vector<128x32xf32>
    %206 = vector.broadcast %187 : vector<1x32xf32> to vector<128x32xf32>
    %207 = arith.addf %205, %206 : vector<128x32xf32>
    %c0_66 = arith.constant 0 : index
    %c0_67 = arith.constant 0 : index
    %c0_68 = arith.constant 0 : index
    %208 = vector.load %arg16[%c0_66, %c0_67, %c0_68] : memref<1x128x32xf32, #tpu.memory_space<vmem>>, vector<1x128x32xf32>
    %209 = vector.shape_cast %208 : vector<1x128x32xf32> to vector<128x32xf32>
    %210 = vector.shape_cast %207 : vector<128x32xf32> to vector<1x128x32xf32>
    tpu.vector_store %arg16[%c0_66, %c0_67, %c0_68], %210 {strides = array<i32>} : memref<1x128x32xf32, #tpu.memory_space<vmem>>, vector<1x128x32xf32>,
    %c0_69 = arith.constant 0 : index
    %c0_70 = arith.constant 0 : index
    %c0_71 = arith.constant 0 : index
    %211 = vector.load %arg17[%c0_69, %c0_70, %c0_71] : memref<1x128x1xf32, #tpu.memory_space<vmem>>, vector<1x128x1xf32>
    %212 = vector.shape_cast %211 : vector<1x128x1xf32> to vector<128x1xf32>
    %213 = vector.shape_cast %140 : vector<128x1xf32> to vector<1x128x1xf32>
    tpu.vector_store %arg17[%c0_69, %c0_70, %c0_71], %213 {strides = array<i32>} : memref<1x128x1xf32, #tpu.memory_space<vmem>>, vector<1x128x1xf32>,
    %c0_72 = arith.constant 0 : index
    %c0_73 = arith.constant 0 : index
    %c0_74 = arith.constant 0 : index
    %214 = vector.load %arg18[%c0_72, %c0_73, %c0_74] : memref<1x128x1xf32, #tpu.memory_space<vmem>>, vector<1x128x1xf32>
    %215 = vector.shape_cast %214 : vector<1x128x1xf32> to vector<128x1xf32>
    %216 = vector.shape_cast %144 : vector<128x1xf32> to vector<1x128x1xf32>
    tpu.vector_store %arg18[%c0_72, %c0_73, %c0_74], %216 {strides = array<i32>} : memref<1x128x1xf32, #tpu.memory_space<vmem>>, vector<1x128x1xf32>,
    return
  }
  func.func @transform_0(%arg0: i32, %arg1: i32) -> (i32, i32, i32) {
    %c0_i32 = arith.constant 0 : i32
    %c0_i32_0 = arith.constant 0 : i32
    return %arg1, %arg0, %c0_i32 : i32, i32, i32
  }
  func.func @transform_1(%arg0: i32, %arg1: i32) -> (i32, i32) {
    %c0_i32 = arith.constant 0 : i32
    %c0_i32_0 = arith.constant 0 : i32
    %c0_i32_1 = arith.constant 0 : i32
    return %c0_i32, %c0_i32_0 : i32, i32
  }
  func.func @transform_2(%arg0: i32, %arg1: i32) -> (i32, i32, i32) {
    %c0_i32 = arith.constant 0 : i32
    %c0_i32_0 = arith.constant 0 : i32
    %c0_i32_1 = arith.constant 0 : i32
    return %c0_i32, %arg0, %c0_i32_0 : i32, i32, i32
  }
  func.func @transform_3(%arg0: i32, %arg1: i32) -> (i32, i32) {
    %c0_i32 = arith.constant 0 : i32
    %c0_i32_0 = arith.constant 0 : i32
    %c0_i32_1 = arith.constant 0 : i32
    return %c0_i32, %c0_i32_0 : i32, i32
  }
  func.func @transform_4(%arg0: i32, %arg1: i32) -> (i32, i32) {
    %c0_i32 = arith.constant 0 : i32
    %c0_i32_0 = arith.constant 0 : i32
    %c0_i32_1 = arith.constant 0 : i32
    return %c0_i32, %c0_i32_0 : i32, i32
  }
  func.func @transform_5(%arg0: i32, %arg1: i32) -> (i32, i32) {
    %c0_i32 = arith.constant 0 : i32
    %c0_i32_0 = arith.constant 0 : i32
    %c0_i32_1 = arith.constant 0 : i32
    return %c0_i32, %c0_i32_0 : i32, i32
  }
  func.func @transform_6(%arg0: i32, %arg1: i32) -> (i32, i32) {
    %c0_i32 = arith.constant 0 : i32
    %c0_i32_0 = arith.constant 0 : i32
    %c0_i32_1 = arith.constant 0 : i32
    return %c0_i32, %c0_i32_0 : i32, i32
  }
  func.func @transform_7(%arg0: i32, %arg1: i32) -> (i32, i32) {
    %c0_i32 = arith.constant 0 : i32
    %c0_i32_0 = arith.constant 0 : i32
    %c0_i32_1 = arith.constant 0 : i32
    return %c0_i32, %c0_i32_0 : i32, i32
  }
  func.func @transform_8(%arg0: i32, %arg1: i32) -> (i32, i32) {
    %c0_i32 = arith.constant 0 : i32
    %c0_i32_0 = arith.constant 0 : i32
    %c0_i32_1 = arith.constant 0 : i32
    return %c0_i32, %c0_i32_0 : i32, i32
  }
  func.func @transform_9(%arg0: i32, %arg1: i32) -> (i32, i32) {
    %c0_i32 = arith.constant 0 : i32
    %c0_i32_0 = arith.constant 0 : i32
    %c0_i32_1 = arith.constant 0 : i32
    return %c0_i32, %c0_i32_0 : i32, i32
  }
  func.func @transform_10(%arg0: i32, %arg1: i32) -> (i32, i32) {
    %c0_i32 = arith.constant 0 : i32
    %c0_i32_0 = arith.constant 0 : i32
    %c0_i32_1 = arith.constant 0 : i32
    return %c0_i32, %c0_i32_0 : i32, i32
  }
  func.func @transform_11(%arg0: i32, %arg1: i32) -> (i32, i32) {
    %c0_i32 = arith.constant 0 : i32
    %c0_i32_0 = arith.constant 0 : i32
    %c0_i32_1 = arith.constant 0 : i32
    return %c0_i32, %c0_i32_0 : i32, i32
  }
  func.func @transform_12(%arg0: i32, %arg1: i32) -> (i32, i32) {
    %c0_i32 = arith.constant 0 : i32
    %c0_i32_0 = arith.constant 0 : i32
    %c0_i32_1 = arith.constant 0 : i32
    return %c0_i32, %c0_i32_0 : i32, i32
  }
  func.func @transform_13(%arg0: i32, %arg1: i32) -> (i32, i32) {
    %c0_i32 = arith.constant 0 : i32
    %c0_i32_0 = arith.constant 0 : i32
    %c0_i32_1 = arith.constant 0 : i32
    return %c0_i32, %c0_i32_0 : i32, i32
  }
  func.func @transform_14(%arg0: i32, %arg1: i32) -> (i32, i32, i32) {
    %c0_i32 = arith.constant 0 : i32
    %c0_i32_0 = arith.constant 0 : i32
    return %arg1, %arg0, %c0_i32 : i32, i32, i32
  }
  func.func @transform_15(%arg0: i32, %arg1: i32) -> (i32, i32, i32) {
    %c0_i32 = arith.constant 0 : i32
    %c0_i32_0 = arith.constant 0 : i32
    return %arg1, %arg0, %c0_i32 : i32, i32, i32
  }
  func.func @transform_16(%arg0: i32, %arg1: i32) -> (i32, i32, i32) {
    %c0_i32 = arith.constant 0 : i32
    %c0_i32_0 = arith.constant 0 : i32
    return %arg1, %arg0, %c0_i32 : i32, i32, i32
  }
}

</mosaic_0001>

<llo_original>
// kernel: tpu_custom_call.1
$region0: #{tpu_custom_call.1}
  #allocation0 [shape = 'u32[]', space=smem, size = 0x4, offset = 0x4, fixed_abs, tag = 'smem constant byte address 0x4 - core index']
  #allocation1 [shape = 'u32[144,128]{1,0:T(1,128)}', space=vmem, size = 0x12000, scoped, tag = 'internal scratch']
  #allocation2 [shape = 'f32[1,1]{1,0:T(1,128)S(1)}', space=vmem, size = 0x200, scoped, tag = 'scoped memory for tpu_custom_call.1']
  %s0 = inlined_call_operand.hbm [shape: bf16[2,128,32], index: 0, kind: input, shape index: {}]
  %s1 = inlined_call_operand.hbm [shape: bf16[32,32], index: 1, kind: input, shape index: {}]
  %s2 = inlined_call_operand.hbm [shape: f32[1,128,32], index: 2, kind: input, shape index: {}]
  %s3 = inlined_call_operand.hbm [shape: f32[2,32], index: 3, kind: input, shape index: {}]
  %s4 = inlined_call_operand.hbm [shape: f32[1,32], index: 4, kind: input, shape index: {}]
  %s5 = inlined_call_operand.<no memory space> [shape: f32[1,1], index: 5, kind: input, shape index: {}]
  %s6 = inlined_call_operand.hbm [shape: f32[1,32], index: 6, kind: input, shape index: {}]
  %s7 = inlined_call_operand.hbm [shape: f32[1,32], index: 7, kind: input, shape index: {}]
  %s8 = inlined_call_operand.hbm [shape: bf16[32,64], index: 8, kind: input, shape index: {}]
  %s9 = inlined_call_operand.hbm [shape: f32[1,64], index: 9, kind: input, shape index: {}]
  %s10 = inlined_call_operand.hbm [shape: bf16[64,32], index: 10, kind: input, shape index: {}]
  %s11 = inlined_call_operand.hbm [shape: f32[1,32], index: 11, kind: input, shape index: {}]
  %s12 = inlined_call_operand.hbm [shape: f32[1,32], index: 12, kind: input, shape index: {}]
  %s13 = inlined_call_operand.hbm [shape: f32[1,32], index: 13, kind: input, shape index: {}]
  %s14 = inlined_call_operand.hbm [shape: f32[2,128,32], index: 14, kind: output, shape index: {0}]
  %s15 = inlined_call_operand.hbm [shape: f32[2,128,1], index: 15, kind: output, shape index: {1}]
  %s16 = inlined_call_operand.hbm [shape: f32[2,128,1], index: 16, kind: output, shape index: {2}]
  %17 = xla_tuple %s14, %s15, %s16
  %s18 = sld [smem:[#allocation0]]
  $region157: #{tpu_custom_call.1} parent=0
    _
  %s20 = ssub.s32 1, %s18
  %s21 = scalar_select 0, %s20, %s18
  %v22 = vstv %s5
  %23 = vst [vmem:[#allocation2] sm:$0x1] %v22
  $region1: #{tpu_custom_call.1} parent=0
    #allocation3 [shape = 'u8[65536]{0}', space=vmem, size = 0x10000, scoped, tag = 'input window, operand 0']
    #allocation4 [shape = 's32[2]{0}', space=sflag, size = 0x8, scoped, tag = 'scoped memory for tpu_custom_call.1']
    #allocation5 [shape = 's32[2]{0}', space=sflag, size = 0x8, scoped, tag = 'scoped memory for tpu_custom_call.1']
    #allocation6 [shape = 'u8[8192]{0}', space=vmem, size = 0x2000, scoped, tag = 'input window, operand 1, single buffered']
    #allocation7 [shape = 's32[1]{0}', space=sflag, size = 0x4, scoped, tag = 'scoped memory for tpu_custom_call.1']
    #allocation8 [shape = 'u8[65536]{0}', space=vmem, size = 0x10000, scoped, tag = 'input window, operand 2, single buffered']
    #allocation9 [shape = 'u8[1024]{0}', space=vmem, size = 0x400, scoped, tag = 'input window, operand 3, single buffered']
    #allocation10 [shape = 's32[1]{0}', space=sflag, size = 0x4, scoped, tag = 'scoped memory for tpu_custom_call.1']
    #allocation11 [shape = 'u8[512]{0}', space=vmem, size = 0x400, scoped, tag = 'input window, operand 4, single buffered']
    #allocation12 [shape = 'u8[512]{0}', space=vmem, size = 0x400, scoped, tag = 'input window, operand 6, single buffered']
    #allocation13 [shape = 's32[1]{0}', space=sflag, size = 0x4, scoped, tag = 'scoped memory for tpu_custom_call.1']
    #allocation14 [shape = 'u8[512]{0}', space=vmem, size = 0x400, scoped, tag = 'input window, operand 7, single buffered']
    #allocation15 [shape = 'u8[8192]{0}', space=vmem, size = 0x2000, scoped, tag = 'input window, operand 8, single buffered']
    #allocation16 [shape = 's32[1]{0}', space=sflag, size = 0x4, scoped, tag = 'scoped memory for tpu_custom_call.1']
    #allocation17 [shape = 'u8[512]{0}', space=vmem, size = 0x400, scoped, tag = 'input window, operand 9, single buffered']
    #allocation18 [shape = 'u8[16384]{0}', space=vmem, size = 0x4000, scoped, tag = 'input window, operand 10, single buffered']
    #allocation19 [shape = 's32[1]{0}', space=sflag, size = 0x4, scoped, tag = 'scoped memory for tpu_custom_call.1']
    #allocation20 [shape = 'u8[512]{0}', space=vmem, size = 0x400, scoped, tag = 'input window, operand 11, single buffered']
    #allocation21 [shape = 'u8[512]{0}', space=vmem, size = 0x400, scoped, tag = 'input window, operand 12, single buffered']
    #allocation22 [shape = 's32[1]{0}', space=sflag, size = 0x4, scoped, tag = 'scoped memory for tpu_custom_call.1']
    #allocation23 [shape = 'u8[512]{0}', space=vmem, size = 0x400, scoped, tag = 'input window, operand 13, single buffered']
    #allocation24 [shape = 'u8[131072]{0}', space=vmem, size = 0x20000, scoped, tag = 'output window, operand 0']
    #allocation25 [shape = 'u8[131072]{0}', space=vmem, size = 0x20000, scoped, tag = 'output window, operand 1']
    #allocation26 [shape = 's32[2]{0}', space=sflag, size = 0x8, scoped, tag = 'scoped memory for tpu_custom_call.1']
    #allocation27 [shape = 'u8[131072]{0}', space=vmem, size = 0x20000, scoped, tag = 'output window, operand 2']
    %24 = vsyncpa [#allocation4], 0
    %s25 = scalar_lea.sflag [#allocation4], 1
    %26 = vsyncpa %s25, 0
    %27 = vsyncpa [#allocation7], 0
    %28 = vsyncpa [#allocation10], 0
    %29 = vsyncpa [#allocation13], 0
    %30 = vsyncpa [#allocation16], 0
    %31 = vsyncpa [#allocation19], 0
    %32 = vsyncpa [#allocation22], 0
    %33 = vsyncpa [#allocation5], 0
    %s34 = scalar_lea.sflag [#allocation5], 1
    %35 = vsyncpa %s34, 0
    %36 = vsyncpa [#allocation26], 0
    %s37 = scalar_lea.sflag [#allocation26], 1
    %38 = vsyncpa %s37, 0
    loop: start=0, step=1, limit=4
    $region2: #{tpu_custom_call.1} parent=1 // loop_pre_header
      _
    $region3: #{tpu_custom_call.1} parent=1 // loop_header
      %s40 = sphi 0, %s44
      %p41 = scmp.ge.s32.totalorder %s40, 4
      %s47 = sphi 0, %s59
      %s48 = sphi 0, %s55
      %s49 = sphi 0, %s47
      %s50 = sphi 0, %s48
      %s51 = sphi 0, %s49
      %s52 = sphi 0, %s50
      %s64 = sphi 0, %s66
      %s67 = sphi 0, %s64
      %s68 = sphi 0, %s67
      %s84 = sphi 0, %s68
      %s88 = sphi 0, %s88
      %s90 = sphi 0, %s88
      %s91 = sphi 0, %s90
      %s105 = sphi 0, %s91
      %s111 = sphi 0, %s113
      %s114 = sphi 0, %s111
      %s115 = sphi 0, %s114
      %s131 = sphi 0, %s115
      %s135 = sphi 0, %s135
      %s137 = sphi 0, %s135
      %s138 = sphi 0, %s137
      %s152 = sphi 0, %s138
      %s156 = sphi 0, %s156
      %s158 = sphi 0, %s156
      %s159 = sphi 0, %s158
      %s173 = sphi 0, %s159
      %s177 = sphi 0, %s177
      %s179 = sphi 0, %s177
      %s180 = sphi 0, %s179
      %s194 = sphi 0, %s180
      %s198 = sphi 0, %s198
      %s200 = sphi 0, %s198
      %s201 = sphi 0, %s200
      %s215 = sphi 0, %s201
      %s219 = sphi 0, %s219
      %s221 = sphi 0, %s219
      %s222 = sphi 0, %s221
      %s236 = sphi 0, %s222
      %s240 = sphi 0, %s240
      %s242 = sphi 0, %s240
      %s243 = sphi 0, %s242
      %s257 = sphi 0, %s243
      %s261 = sphi 0, %s261
      %s263 = sphi 0, %s261
      %s264 = sphi 0, %s263
      %s278 = sphi 0, %s264
      %s282 = sphi 0, %s282
      %s284 = sphi 0, %s282
      %s285 = sphi 0, %s284
      %s299 = sphi 0, %s285
      %s303 = sphi 0, %s303
      %s305 = sphi 0, %s303
      %s306 = sphi 0, %s305
      %s320 = sphi 0, %s306
      %s324 = sphi 0, %s324
      %s326 = sphi 0, %s324
      %s327 = sphi 0, %s326
      %s341 = sphi 0, %s327
      %s345 = sphi 0, %s345
      %s347 = sphi 0, %s345
      %s348 = sphi 0, %s347
      %s362 = sphi 0, %s348
      %s370 = sphi 0, %s372
      %s373 = sphi 0, %s370
      %s374 = sphi 0, %s373
      %s390 = sphi 0, %s374
      %s398 = sphi 0, %s400
      %s401 = sphi 0, %s398
      %s402 = sphi 0, %s401
      %s418 = sphi 0, %s402
      %s426 = sphi 0, %s428
      %s429 = sphi 0, %s426
      %s430 = sphi 0, %s429
      %s446 = sphi 0, %s430
    $region4: #{tpu_custom_call.1} parent=1 // loop_header_branch
      %43 = sbr.rel (%p41) target = $region8
    $region5: #{tpu_custom_call.1} parent=1 // loop_body
      %s45 = ssub.s32 %s40, 1
      %s46 = ssub.s32 %s40, 2
      %s53 = sadd.s32 1, %s48
      %p54 = scmp.ge.s32.totalorder %s53, 2
      %s55 = scalar_select %p54, 0, %s53
      %s56 = sadd.s32 1, %s47
      %s57 = scalar_select %p54, %s56, %s47
      %p58 = scmp.ge.s32.totalorder %s57, 1
      %s59 = scalar_select %p58, 0, %s57
      %s60 = ssub.s32 %s48, %s55
      %s61 = ssub.s32 %s47, %s59
      %s62 = sor.u32 %s60, %s61
      %p63 = scmp.eq.s32.totalorder %s62, 0
      %s65 = sadd.s32 %s64, 1
      %s66 = scalar_select %p63, %s64, %s65
      %p69 = pneg %p63
      %p70 = scmp.eq.s32.totalorder %s40, 1
      %p71 = por %p69, %p70
      %p72 = scmp.ne.s32.totalorder %s64, %s67
      %p73 = scmp.eq.s32.totalorder %s40, 0
      %p74 = por %p72, %p73
      %p75 = scmp.ne.s32.totalorder %s64, %s67
      %p76 = scmp.eq.s32.totalorder %s45, 1
      %p77 = por %p75, %p76
      %p78 = scmp.ne.s32.totalorder %s67, %s68
      %p79 = scmp.eq.s32.totalorder %s45, 0
      %p80 = por %p78, %p79
      %p81 = scmp.ne.s32.totalorder %s67, %s68
      %p82 = scmp.eq.s32.totalorder %s46, 1
      %p83 = por %p81, %p82
      %p85 = scmp.ne.s32.totalorder %s68, %s84
      %p86 = scmp.eq.s32.totalorder %s46, 0
      %p87 = por %p85, %p86
      %s89 = sadd.s32 %s88, 1
      %p92 = scmp.eq.s32.totalorder %s40, 1
      %p93 = scmp.ne.s32.totalorder %s88, %s90
      %p94 = scmp.eq.s32.totalorder %s40, 0
      %p95 = por %p93, %p94
      %p96 = scmp.ne.s32.totalorder %s88, %s90
      %p97 = scmp.eq.s32.totalorder %s45, 1
      %p98 = por %p96, %p97
      %p99 = scmp.ne.s32.totalorder %s90, %s91
      %p100 = scmp.eq.s32.totalorder %s45, 0
      %p101 = por %p99, %p100
      %p102 = scmp.ne.s32.totalorder %s90, %s91
      %p103 = scmp.eq.s32.totalorder %s46, 1
      %p104 = por %p102, %p103
      %p106 = scmp.ne.s32.totalorder %s91, %s105
      %p107 = scmp.eq.s32.totalorder %s46, 0
      %p108 = por %p106, %p107
      %s109 = ssub.s32 %s47, %s59
      %p110 = scmp.eq.s32.totalorder %s109, 0
      %s112 = sadd.s32 %s111, 1
      %s113 = scalar_select %p110, %s111, %s112
      %p116 = pneg %p110
      %p117 = scmp.eq.s32.totalorder %s40, 1
      %p118 = por %p116, %p117
      %p119 = scmp.ne.s32.totalorder %s111, %s114
      %p120 = scmp.eq.s32.totalorder %s40, 0
      %p121 = por %p119, %p120
      %p122 = scmp.ne.s32.totalorder %s111, %s114
      %p123 = scmp.eq.s32.totalorder %s45, 1
      %p124 = por %p122, %p123
      %p125 = scmp.ne.s32.totalorder %s114, %s115
      %p126 = scmp.eq.s32.totalorder %s45, 0
      %p127 = por %p125, %p126
      %p128 = scmp.ne.s32.totalorder %s114, %s115
      %p129 = scmp.eq.s32.totalorder %s46, 1
      %p130 = por %p128, %p129
      %p132 = scmp.ne.s32.totalorder %s115, %s131
      %p133 = scmp.eq.s32.totalorder %s46, 0
      %p134 = por %p132, %p133
      %s136 = sadd.s32 %s135, 1
      %p139 = scmp.eq.s32.totalorder %s40, 1
      %p140 = scmp.ne.s32.totalorder %s135, %s137
      %p141 = scmp.eq.s32.totalorder %s40, 0
      %p142 = por %p140, %p141
      %p143 = scmp.ne.s32.totalorder %s135, %s137
      %p144 = scmp.eq.s32.totalorder %s45, 1
      %p145 = por %p143, %p144
      %p146 = scmp.ne.s32.totalorder %s137, %s138
      %p147 = scmp.eq.s32.totalorder %s45, 0
      %p148 = por %p146, %p147
      %p149 = scmp.ne.s32.totalorder %s137, %s138
      %p150 = scmp.eq.s32.totalorder %s46, 1
      %p151 = por %p149, %p150
      %p153 = scmp.ne.s32.totalorder %s138, %s152
      %p154 = scmp.eq.s32.totalorder %s46, 0
      %p155 = por %p153, %p154
      %s157 = sadd.s32 %s156, 1
      %p160 = scmp.eq.s32.totalorder %s40, 1
      %p161 = scmp.ne.s32.totalorder %s156, %s158
      %p162 = scmp.eq.s32.totalorder %s40, 0
      %p163 = por %p161, %p162
      %p164 = scmp.ne.s32.totalorder %s156, %s158
      %p165 = scmp.eq.s32.totalorder %s45, 1
      %p166 = por %p164, %p165
      %p167 = scmp.ne.s32.totalorder %s158, %s159
      %p168 = scmp.eq.s32.totalorder %s45, 0
      %p169 = por %p167, %p168
      %p170 = scmp.ne.s32.totalorder %s158, %s159
      %p171 = scmp.eq.s32.totalorder %s46, 1
      %p172 = por %p170, %p171
      %p174 = scmp.ne.s32.totalorder %s159, %s173
      %p175 = scmp.eq.s32.totalorder %s46, 0
      %p176 = por %p174, %p175
      %s178 = sadd.s32 %s177, 1
      %p181 = scmp.eq.s32.totalorder %s40, 1
      %p182 = scmp.ne.s32.totalorder %s177, %s179
      %p183 = scmp.eq.s32.totalorder %s40, 0
      %p184 = por %p182, %p183
      %p185 = scmp.ne.s32.totalorder %s177, %s179
      %p186 = scmp.eq.s32.totalorder %s45, 1
      %p187 = por %p185, %p186
      %p188 = scmp.ne.s32.totalorder %s179, %s180
      %p189 = scmp.eq.s32.totalorder %s45, 0
      %p190 = por %p188, %p189
      %p191 = scmp.ne.s32.totalorder %s179, %s180
      %p192 = scmp.eq.s32.totalorder %s46, 1
      %p193 = por %p191, %p192
      %p195 = scmp.ne.s32.totalorder %s180, %s194
      %p196 = scmp.eq.s32.totalorder %s46, 0
      %p197 = por %p195, %p196
      %s199 = sadd.s32 %s198, 1
      %p202 = scmp.eq.s32.totalorder %s40, 1
      %p203 = scmp.ne.s32.totalorder %s198, %s200
      %p204 = scmp.eq.s32.totalorder %s40, 0
      %p205 = por %p203, %p204
      %p206 = scmp.ne.s32.totalorder %s198, %s200
      %p207 = scmp.eq.s32.totalorder %s45, 1
      %p208 = por %p206, %p207
      %p209 = scmp.ne.s32.totalorder %s200, %s201
      %p210 = scmp.eq.s32.totalorder %s45, 0
      %p211 = por %p209, %p210
      %p212 = scmp.ne.s32.totalorder %s200, %s201
      %p213 = scmp.eq.s32.totalorder %s46, 1
      %p214 = por %p212, %p213
      %p216 = scmp.ne.s32.totalorder %s201, %s215
      %p217 = scmp.eq.s32.totalorder %s46, 0
      %p218 = por %p216, %p217
      %s220 = sadd.s32 %s219, 1
      %p223 = scmp.eq.s32.totalorder %s40, 1
      %p224 = scmp.ne.s32.totalorder %s219, %s221
      %p225 = scmp.eq.s32.totalorder %s40, 0
      %p226 = por %p224, %p225
      %p227 = scmp.ne.s32.totalorder %s219, %s221
      %p228 = scmp.eq.s32.totalorder %s45, 1
      %p229 = por %p227, %p228
      %p230 = scmp.ne.s32.totalorder %s221, %s222
      %p231 = scmp.eq.s32.totalorder %s45, 0
      %p232 = por %p230, %p231
      %p233 = scmp.ne.s32.totalorder %s221, %s222
      %p234 = scmp.eq.s32.totalorder %s46, 1
      %p235 = por %p233, %p234
      %p237 = scmp.ne.s32.totalorder %s222, %s236
      %p238 = scmp.eq.s32.totalorder %s46, 0
      %p239 = por %p237, %p238
      %s241 = sadd.s32 %s240, 1
      %p244 = scmp.eq.s32.totalorder %s40, 1
      %p245 = scmp.ne.s32.totalorder %s240, %s242
      %p246 = scmp.eq.s32.totalorder %s40, 0
      %p247 = por %p245, %p246
      %p248 = scmp.ne.s32.totalorder %s240, %s242
      %p249 = scmp.eq.s32.totalorder %s45, 1
      %p250 = por %p248, %p249
      %p251 = scmp.ne.s32.totalorder %s242, %s243
      %p252 = scmp.eq.s32.totalorder %s45, 0
      %p253 = por %p251, %p252
      %p254 = scmp.ne.s32.totalorder %s242, %s243
      %p255 = scmp.eq.s32.totalorder %s46, 1
      %p256 = por %p254, %p255
      %p258 = scmp.ne.s32.totalorder %s243, %s257
      %p259 = scmp.eq.s32.totalorder %s46, 0
      %p260 = por %p258, %p259
      %s262 = sadd.s32 %s261, 1
      %p265 = scmp.eq.s32.totalorder %s40, 1
      %p266 = scmp.ne.s32.totalorder %s261, %s263
      %p267 = scmp.eq.s32.totalorder %s40, 0
      %p268 = por %p266, %p267
      %p269 = scmp.ne.s32.totalorder %s261, %s263
      %p270 = scmp.eq.s32.totalorder %s45, 1
      %p271 = por %p269, %p270
      %p272 = scmp.ne.s32.totalorder %s263, %s264
      %p273 = scmp.eq.s32.totalorder %s45, 0
      %p274 = por %p272, %p273
      %p275 = scmp.ne.s32.totalorder %s263, %s264
      %p276 = scmp.eq.s32.totalorder %s46, 1
      %p277 = por %p275, %p276
      %p279 = scmp.ne.s32.totalorder %s264, %s278
      %p280 = scmp.eq.s32.totalorder %s46, 0
      %p281 = por %p279, %p280
      %s283 = sadd.s32 %s282, 1
      %p286 = scmp.eq.s32.totalorder %s40, 1
      %p287 = scmp.ne.s32.totalorder %s282, %s284
      %p288 = scmp.eq.s32.totalorder %s40, 0
      %p289 = por %p287, %p288
      %p290 = scmp.ne.s32.totalorder %s282, %s284
      %p291 = scmp.eq.s32.totalorder %s45, 1
      %p292 = por %p290, %p291
      %p293 = scmp.ne.s32.totalorder %s284, %s285
      %p294 = scmp.eq.s32.totalorder %s45, 0
      %p295 = por %p293, %p294
      %p296 = scmp.ne.s32.totalorder %s284, %s285
      %p297 = scmp.eq.s32.totalorder %s46, 1
      %p298 = por %p296, %p297
      %p300 = scmp.ne.s32.totalorder %s285, %s299
      %p301 = scmp.eq.s32.totalorder %s46, 0
      %p302 = por %p300, %p301
      %s304 = sadd.s32 %s303, 1
      %p307 = scmp.eq.s32.totalorder %s40, 1
      %p308 = scmp.ne.s32.totalorder %s303, %s305
      %p309 = scmp.eq.s32.totalorder %s40, 0
      %p310 = por %p308, %p309
      %p311 = scmp.ne.s32.totalorder %s303, %s305
      %p312 = scmp.eq.s32.totalorder %s45, 1
      %p313 = por %p311, %p312
      %p314 = scmp.ne.s32.totalorder %s305, %s306
      %p315 = scmp.eq.s32.totalorder %s45, 0
      %p316 = por %p314, %p315
      %p317 = scmp.ne.s32.totalorder %s305, %s306
      %p318 = scmp.eq.s32.totalorder %s46, 1
      %p319 = por %p317, %p318
      %p321 = scmp.ne.s32.totalorder %s306, %s320
      %p322 = scmp.eq.s32.totalorder %s46, 0
      %p323 = por %p321, %p322
      %s325 = sadd.s32 %s324, 1
      %p328 = scmp.eq.s32.totalorder %s40, 1
      %p329 = scmp.ne.s32.totalorder %s324, %s326
      %p330 = scmp.eq.s32.totalorder %s40, 0
      %p331 = por %p329, %p330
      %p332 = scmp.ne.s32.totalorder %s324, %s326
      %p333 = scmp.eq.s32.totalorder %s45, 1
      %p334 = por %p332, %p333
      %p335 = scmp.ne.s32.totalorder %s326, %s327
      %p336 = scmp.eq.s32.totalorder %s45, 0
      %p337 = por %p335, %p336
      %p338 = scmp.ne.s32.totalorder %s326, %s327
      %p339 = scmp.eq.s32.totalorder %s46, 1
      %p340 = por %p338, %p339
      %p342 = scmp.ne.s32.totalorder %s327, %s341
      %p343 = scmp.eq.s32.totalorder %s46, 0
      %p344 = por %p342, %p343
      %s346 = sadd.s32 %s345, 1
      %p349 = scmp.eq.s32.totalorder %s40, 1
      %p350 = scmp.ne.s32.totalorder %s345, %s347
      %p351 = scmp.eq.s32.totalorder %s40, 0
      %p352 = por %p350, %p351
      %p353 = scmp.ne.s32.totalorder %s345, %s347
      %p354 = scmp.eq.s32.totalorder %s45, 1
      %p355 = por %p353, %p354
      %p356 = scmp.ne.s32.totalorder %s347, %s348
      %p357 = scmp.eq.s32.totalorder %s45, 0
      %p358 = por %p356, %p357
      %p359 = scmp.ne.s32.totalorder %s347, %s348
      %p360 = scmp.eq.s32.totalorder %s46, 1
      %p361 = por %p359, %p360
      %p363 = scmp.ne.s32.totalorder %s348, %s362
      %p364 = scmp.eq.s32.totalorder %s46, 0
      %p365 = por %p363, %p364
      %s366 = ssub.s32 %s48, %s55
      %s367 = ssub.s32 %s47, %s59
      %s368 = sor.u32 %s366, %s367
      %p369 = scmp.eq.s32.totalorder %s368, 0
      %s371 = sadd.s32 %s370, 1
      %s372 = scalar_select %p369, %s370, %s371
      %p375 = pneg %p369
      %p376 = scmp.eq.s32.totalorder %s40, 1
      %p377 = por %p375, %p376
      %p378 = scmp.ne.s32.totalorder %s370, %s373
      %p379 = scmp.eq.s32.totalorder %s40, 0
      %p380 = por %p378, %p379
      %p381 = scmp.ne.s32.totalorder %s370, %s373
      %p382 = scmp.eq.s32.totalorder %s45, 1
      %p383 = por %p381, %p382
      %p384 = scmp.ne.s32.totalorder %s373, %s374
      %p385 = scmp.eq.s32.totalorder %s45, 0
      %p386 = por %p384, %p385
      %p387 = scmp.ne.s32.totalorder %s373, %s374
      %p388 = scmp.eq.s32.totalorder %s46, 1
      %p389 = por %p387, %p388
      %p391 = scmp.ne.s32.totalorder %s374, %s390
      %p392 = scmp.eq.s32.totalorder %s46, 0
      %p393 = por %p391, %p392
      %s394 = ssub.s32 %s48, %s55
      %s395 = ssub.s32 %s47, %s59
      %s396 = sor.u32 %s394, %s395
      %p397 = scmp.eq.s32.totalorder %s396, 0
      %s399 = sadd.s32 %s398, 1
      %s400 = scalar_select %p397, %s398, %s399
      %p403 = pneg %p397
      %p404 = scmp.eq.s32.totalorder %s40, 1
      %p405 = por %p403, %p404
      %p406 = scmp.ne.s32.totalorder %s398, %s401
      %p407 = scmp.eq.s32.totalorder %s40, 0
      %p408 = por %p406, %p407
      %p409 = scmp.ne.s32.totalorder %s398, %s401
      %p410 = scmp.eq.s32.totalorder %s45, 1
      %p411 = por %p409, %p410
      %p412 = scmp.ne.s32.totalorder %s401, %s402
      %p413 = scmp.eq.s32.totalorder %s45, 0
      %p414 = por %p412, %p413
      %p415 = scmp.ne.s32.totalorder %s401, %s402
      %p416 = scmp.eq.s32.totalorder %s46, 1
      %p417 = por %p415, %p416
      %p419 = scmp.ne.s32.totalorder %s402, %s418
      %p420 = scmp.eq.s32.totalorder %s46, 0
      %p421 = por %p419, %p420
      %s422 = ssub.s32 %s48, %s55
      %s423 = ssub.s32 %s47, %s59
      %s424 = sor.u32 %s422, %s423
      %p425 = scmp.eq.s32.totalorder %s424, 0
      %s427 = sadd.s32 %s426, 1
      %s428 = scalar_select %p425, %s426, %s427
      %p431 = pneg %p425
      %p432 = scmp.eq.s32.totalorder %s40, 1
      %p433 = por %p431, %p432
      %p434 = scmp.ne.s32.totalorder %s426, %s429
      %p435 = scmp.eq.s32.totalorder %s40, 0
      %p436 = por %p434, %p435
      %p437 = scmp.ne.s32.totalorder %s426, %s429
      %p438 = scmp.eq.s32.totalorder %s45, 1
      %p439 = por %p437, %p438
      %p440 = scmp.ne.s32.totalorder %s429, %s430
      %p441 = scmp.eq.s32.totalorder %s45, 0
      %p442 = por %p440, %p441
      %p443 = scmp.ne.s32.totalorder %s429, %s430
      %p444 = scmp.eq.s32.totalorder %s46, 1
      %p445 = por %p443, %p444
      %p447 = scmp.ne.s32.totalorder %s430, %s446
      %p448 = scmp.eq.s32.totalorder %s46, 0
      %p449 = por %p447, %p448
      %p450 = scmp.le.s32.totalorder 1, %s40
      %p451 = scmp.lt.s32.totalorder %s40, 3
      %p452 = pnand %p450, %p451
      %p453 = pneg %p452
      // Predicated region
      $region9: #{tpu_custom_call.1} parent=5 // pred_check
        _
      $region10: #{tpu_custom_call.1} parent=5 // pred_check_branch
        %455 = sbr.rel (%p452) target = $region12
      $region11: #{tpu_custom_call.1} parent=5 // pred_region
        %s456 = ssub.s32 %s40, 1
        // Predicated region
        $region13: #{tpu_custom_call.1} parent=11 // pred_check
          %p457 = pneg %p101
        $region14: #{tpu_custom_call.1} parent=11 // pred_check_branch
          %459 = sbr.rel (%p457) target = $region16
        $region15: #{tpu_custom_call.1} parent=11 // pred_region
          %s461 = ssub.s32 256, 256
          %462 = vsyncadd [#allocation7], %s461
          %s463 = sshll.u32 [#allocation6], 4
          %s464 = int_to_ptr.vmem [resolvable:$true] %s463
          %469 = dma.hbm_to_vmem [thread:$0]  %s1, 256, %s464, [#allocation7], 64, 64, 4
        $region16: #{tpu_custom_call.1} parent=11 // pred_fallthru
          _
        // Predicated region
        $region17: #{tpu_custom_call.1} parent=11 // pred_check
          %p470 = pneg %p127
        $region18: #{tpu_custom_call.1} parent=11 // pred_check_branch
          %472 = sbr.rel (%p470) target = $region20
        $region19: #{tpu_custom_call.1} parent=11 // pred_region
          %s473 = smul.u32 16, %s49
          %s475 = ssub.s32 2048, 2048
          %476 = vsyncadd [#allocation7], %s475
          %s477 = smul.addr %s473, 128
          %s478 = scalar_lea.hbm %s2, %s477
          %s479 = sshll.u32 [#allocation8], 4
          %s480 = int_to_ptr.vmem [resolvable:$true] %s479
          %485 = dma.hbm_to_vmem [thread:$0]  %s478, 2048, %s480, [#allocation7], 128, 128, 8
        $region20: #{tpu_custom_call.1} parent=11 // pred_fallthru
          _
        // Predicated region
        $region21: #{tpu_custom_call.1} parent=11 // pred_check
          %p486 = pneg %p148
        $region22: #{tpu_custom_call.1} parent=11 // pred_check_branch
          %488 = sbr.rel (%p486) target = $region24
        $region23: #{tpu_custom_call.1} parent=11 // pred_region
          %s490 = ssub.s32 32, 32
          %491 = vsyncadd [#allocation10], %s490
          %s493 = sshll.u32 [#allocation9], 4
          %s494 = int_to_ptr.vmem [resolvable:$true] %s493
          %496 = dma.hbm_to_vmem [thread:$0]  %s3, 32, %s494, [#allocation10]
        $region24: #{tpu_custom_call.1} parent=11 // pred_fallthru
          _
        // Predicated region
        $region25: #{tpu_custom_call.1} parent=11 // pred_check
          %p497 = pneg %p169
        $region26: #{tpu_custom_call.1} parent=11 // pred_check_branch
          %499 = sbr.rel (%p497) target = $region28
        $region27: #{tpu_custom_call.1} parent=11 // pred_region
          %s501 = ssub.s32 16, 16
          %502 = vsyncadd [#allocation10], %s501
          %s504 = sshll.u32 [#allocation11], 4
          %s505 = int_to_ptr.vmem [resolvable:$true] %s504
          %507 = dma.hbm_to_vmem [thread:$0]  %s4, 16, %s505, [#allocation10]
        $region28: #{tpu_custom_call.1} parent=11 // pred_fallthru
          _
        // Predicated region
        $region29: #{tpu_custom_call.1} parent=11 // pred_check
          %p508 = pneg %p190
        $region30: #{tpu_custom_call.1} parent=11 // pred_check_branch
          %510 = sbr.rel (%p508) target = $region32
        $region31: #{tpu_custom_call.1} parent=11 // pred_region
          _
        $region32: #{tpu_custom_call.1} parent=11 // pred_fallthru
          _
        // Predicated region
        $region33: #{tpu_custom_call.1} parent=11 // pred_check
          %p511 = pneg %p211
        $region34: #{tpu_custom_call.1} parent=11 // pred_check_branch
          %513 = sbr.rel (%p511) target = $region36
        $region35: #{tpu_custom_call.1} parent=11 // pred_region
          %s515 = ssub.s32 16, 16
          %516 = vsyncadd [#allocation13], %s515
          %s518 = sshll.u32 [#allocation12], 4
          %s519 = int_to_ptr.vmem [resolvable:$true] %s518
          %521 = dma.hbm_to_vmem [thread:$0]  %s6, 16, %s519, [#allocation13]
        $region36: #{tpu_custom_call.1} parent=11 // pred_fallthru
          _
        // Predicated region
        $region37: #{tpu_custom_call.1} parent=11 // pred_check
          %p522 = pneg %p232
        $region38: #{tpu_custom_call.1} parent=11 // pred_check_branch
          %524 = sbr.rel (%p522) target = $region40
        $region39: #{tpu_custom_call.1} parent=11 // pred_region
          %s526 = ssub.s32 16, 16
          %527 = vsyncadd [#allocation13], %s526
          %s529 = sshll.u32 [#allocation14], 4
          %s530 = int_to_ptr.vmem [resolvable:$true] %s529
          %532 = dma.hbm_to_vmem [thread:$0]  %s7, 16, %s530, [#allocation13]
        $region40: #{tpu_custom_call.1} parent=11 // pred_fallthru
          _
        // Predicated region
        $region41: #{tpu_custom_call.1} parent=11 // pred_check
          %p533 = pneg %p253
        $region42: #{tpu_custom_call.1} parent=11 // pred_check_branch
          %535 = sbr.rel (%p533) target = $region44
        $region43: #{tpu_custom_call.1} parent=11 // pred_region
          %s537 = ssub.s32 256, 256
          %538 = vsyncadd [#allocation16], %s537
          %s539 = sshll.u32 [#allocation15], 4
          %s540 = int_to_ptr.vmem [resolvable:$true] %s539
          %545 = dma.hbm_to_vmem [thread:$0]  %s8, 256, %s540, [#allocation16], 64, 64, 4
        $region44: #{tpu_custom_call.1} parent=11 // pred_fallthru
          _
        // Predicated region
        $region45: #{tpu_custom_call.1} parent=11 // pred_check
          %p546 = pneg %p274
        $region46: #{tpu_custom_call.1} parent=11 // pred_check_branch
          %548 = sbr.rel (%p546) target = $region48
        $region47: #{tpu_custom_call.1} parent=11 // pred_region
          %s550 = ssub.s32 16, 16
          %551 = vsyncadd [#allocation16], %s550
          %s553 = sshll.u32 [#allocation17], 4
          %s554 = int_to_ptr.vmem [resolvable:$true] %s553
          %556 = dma.hbm_to_vmem [thread:$0]  %s9, 16, %s554, [#allocation16]
        $region48: #{tpu_custom_call.1} parent=11 // pred_fallthru
          _
        // Predicated region
        $region49: #{tpu_custom_call.1} parent=11 // pred_check
          %p557 = pneg %p295
        $region50: #{tpu_custom_call.1} parent=11 // pred_check_branch
          %559 = sbr.rel (%p557) target = $region52
        $region51: #{tpu_custom_call.1} parent=11 // pred_region
          %s561 = ssub.s32 512, 512
          %562 = vsyncadd [#allocation19], %s561
          %s563 = sshll.u32 [#allocation18], 4
          %s564 = int_to_ptr.vmem [resolvable:$true] %s563
          %569 = dma.hbm_to_vmem [thread:$0]  %s10, 512, %s564, [#allocation19], 64, 64, 4
        $region52: #{tpu_custom_call.1} parent=11 // pred_fallthru
          _
        // Predicated region
        $region53: #{tpu_custom_call.1} parent=11 // pred_check
          %p570 = pneg %p316
        $region54: #{tpu_custom_call.1} parent=11 // pred_check_branch
          %572 = sbr.rel (%p570) target = $region56
        $region55: #{tpu_custom_call.1} parent=11 // pred_region
          %s574 = ssub.s32 16, 16
          %575 = vsyncadd [#allocation19], %s574
          %s577 = sshll.u32 [#allocation20], 4
          %s578 = int_to_ptr.vmem [resolvable:$true] %s577
          %580 = dma.hbm_to_vmem [thread:$0]  %s11, 16, %s578, [#allocation19]
        $region56: #{tpu_custom_call.1} parent=11 // pred_fallthru
          _
        // Predicated region
        $region57: #{tpu_custom_call.1} parent=11 // pred_check
          %p581 = pneg %p337
        $region58: #{tpu_custom_call.1} parent=11 // pred_check_branch
          %583 = sbr.rel (%p581) target = $region60
        $region59: #{tpu_custom_call.1} parent=11 // pred_region
          %s585 = ssub.s32 16, 16
          %586 = vsyncadd [#allocation22], %s585
          %s588 = sshll.u32 [#allocation21], 4
          %s589 = int_to_ptr.vmem [resolvable:$true] %s588
          %591 = dma.hbm_to_vmem [thread:$0]  %s12, 16, %s589, [#allocation22]
        $region60: #{tpu_custom_call.1} parent=11 // pred_fallthru
          _
        // Predicated region
        $region61: #{tpu_custom_call.1} parent=11 // pred_check
          %p592 = pneg %p358
        $region62: #{tpu_custom_call.1} parent=11 // pred_check_branch
          %594 = sbr.rel (%p592) target = $region64
        $region63: #{tpu_custom_call.1} parent=11 // pred_region
          %s596 = ssub.s32 16, 16
          %597 = vsyncadd [#allocation22], %s596
          %s599 = sshll.u32 [#allocation23], 4
          %s600 = int_to_ptr.vmem [resolvable:$true] %s599
          %602 = dma.hbm_to_vmem [thread:$0]  %s13, 16, %s600, [#allocation22]
        $region64: #{tpu_custom_call.1} parent=11 // pred_fallthru
          _
      $region12: #{tpu_custom_call.1} parent=5 // pred_fallthru
        _
      %p603 = scmp.lt.s32.totalorder %s40, 2
      // Predicated region
      $region65: #{tpu_custom_call.1} parent=5 // pred_check
        %p604 = pneg %p603
      $region66: #{tpu_custom_call.1} parent=5 // pred_check_branch
        %606 = sbr.rel (%p604) target = $region68
      $region67: #{tpu_custom_call.1} parent=5 // pred_region
        // Predicated region
        $region69: #{tpu_custom_call.1} parent=67 // pred_check
          %p607 = pneg %p74
        $region70: #{tpu_custom_call.1} parent=67 // pred_check_branch
          %609 = sbr.rel (%p607) target = $region72
        $region71: #{tpu_custom_call.1} parent=67 // pred_region
          %s610 = sand.u32 %s64, 1
          %s611 = scalar_lea.sflag [#allocation4], %s610
          %s612 = sand.u32 %s64, 1
          %s613 = smul.addr %s612, 64
          %s614 = scalar_lea.vmem [#allocation3], %s613
          %s615 = smul.u32 16, %s47
          %s617 = ssub.s32 1024, 1024
          %618 = vsyncadd %s611, %s617
          %s619 = smul.addr %s48, 16
          %s620 = sadd.s32 %s615, %s619
          %s621 = smul.addr %s620, 64
          %s622 = scalar_lea.hbm %s0, %s621
          %s623 = sshll.u32 %s614, 4
          %s624 = int_to_ptr.vmem [resolvable:$true] %s623
          %629 = dma.hbm_to_vmem [thread:$0]  %s622, 1024, %s624, %s611, 64, 64, 4
        $region72: #{tpu_custom_call.1} parent=67 // pred_fallthru
          _
      $region68: #{tpu_custom_call.1} parent=5 // pred_fallthru
        _
      %p630 = scmp.le.s32.totalorder 1, %s40
      %p631 = scmp.lt.s32.totalorder %s40, 3
      %p632 = pnand %p630, %p631
      %p633 = pneg %p632
      // Predicated region
      $region73: #{tpu_custom_call.1} parent=5 // pred_check
        _
      $region74: #{tpu_custom_call.1} parent=5 // pred_check_branch
        %635 = sbr.rel (%p632) target = $region76
      $region75: #{tpu_custom_call.1} parent=5 // pred_region
        %s636 = ssub.s32 %s40, 1
        %s637 = sand.u32 %s67, 1
        %s638 = scalar_lea.sflag [#allocation4], %s637
        %s639 = sand.u32 %s67, 1
        %s640 = smul.addr %s639, 64
        %s641 = scalar_lea.vmem [#allocation3], %s640
        // Predicated region
        $region77: #{tpu_custom_call.1} parent=75 // pred_check
          %p642 = pneg %p80
        $region78: #{tpu_custom_call.1} parent=75 // pred_check_branch
          %644 = sbr.rel (%p642) target = $region80
        $region79: #{tpu_custom_call.1} parent=75 // pred_region
          %645 = dma.done %s638, 1024
        $region80: #{tpu_custom_call.1} parent=75 // pred_fallthru
          _
        // Predicated region
        $region81: #{tpu_custom_call.1} parent=75 // pred_check
          %p646 = pneg %p101
        $region82: #{tpu_custom_call.1} parent=75 // pred_check_branch
          %648 = sbr.rel (%p646) target = $region84
        $region83: #{tpu_custom_call.1} parent=75 // pred_region
          %649 = dma.done [#allocation7], 256
        $region84: #{tpu_custom_call.1} parent=75 // pred_fallthru
          _
        // Predicated region
        $region85: #{tpu_custom_call.1} parent=75 // pred_check
          %p650 = pneg %p127
        $region86: #{tpu_custom_call.1} parent=75 // pred_check_branch
          %652 = sbr.rel (%p650) target = $region88
        $region87: #{tpu_custom_call.1} parent=75 // pred_region
          %653 = dma.done [#allocation7], 2048
        $region88: #{tpu_custom_call.1} parent=75 // pred_fallthru
          _
        // Predicated region
        $region89: #{tpu_custom_call.1} parent=75 // pred_check
          %p654 = pneg %p148
        $region90: #{tpu_custom_call.1} parent=75 // pred_check_branch
          %656 = sbr.rel (%p654) target = $region92
        $region91: #{tpu_custom_call.1} parent=75 // pred_region
          %657 = dma.done [#allocation10], 32
        $region92: #{tpu_custom_call.1} parent=75 // pred_fallthru
          _
        // Predicated region
        $region93: #{tpu_custom_call.1} parent=75 // pred_check
          %p658 = pneg %p169
        $region94: #{tpu_custom_call.1} parent=75 // pred_check_branch
          %660 = sbr.rel (%p658) target = $region96
        $region95: #{tpu_custom_call.1} parent=75 // pred_region
          %661 = dma.done [#allocation10], 16
        $region96: #{tpu_custom_call.1} parent=75 // pred_fallthru
          _
        // Predicated region
        $region97: #{tpu_custom_call.1} parent=75 // pred_check
          %p662 = pneg %p211
        $region98: #{tpu_custom_call.1} parent=75 // pred_check_branch
          %664 = sbr.rel (%p662) target = $region100
        $region99: #{tpu_custom_call.1} parent=75 // pred_region
          %665 = dma.done [#allocation13], 16
        $region100: #{tpu_custom_call.1} parent=75 // pred_fallthru
          _
        // Predicated region
        $region101: #{tpu_custom_call.1} parent=75 // pred_check
          %p666 = pneg %p232
        $region102: #{tpu_custom_call.1} parent=75 // pred_check_branch
          %668 = sbr.rel (%p666) target = $region104
        $region103: #{tpu_custom_call.1} parent=75 // pred_region
          %669 = dma.done [#allocation13], 16
        $region104: #{tpu_custom_call.1} parent=75 // pred_fallthru
          _
        // Predicated region
        $region105: #{tpu_custom_call.1} parent=75 // pred_check
          %p670 = pneg %p253
        $region106: #{tpu_custom_call.1} parent=75 // pred_check_branch
          %672 = sbr.rel (%p670) target = $region108
        $region107: #{tpu_custom_call.1} parent=75 // pred_region
          %673 = dma.done [#allocation16], 256
        $region108: #{tpu_custom_call.1} parent=75 // pred_fallthru
          _
        // Predicated region
        $region109: #{tpu_custom_call.1} parent=75 // pred_check
          %p674 = pneg %p274
        $region110: #{tpu_custom_call.1} parent=75 // pred_check_branch
          %676 = sbr.rel (%p674) target = $region112
        $region111: #{tpu_custom_call.1} parent=75 // pred_region
          %677 = dma.done [#allocation16], 16
        $region112: #{tpu_custom_call.1} parent=75 // pred_fallthru
          _
        // Predicated region
        $region113: #{tpu_custom_call.1} parent=75 // pred_check
          %p678 = pneg %p295
        $region114: #{tpu_custom_call.1} parent=75 // pred_check_branch
          %680 = sbr.rel (%p678) target = $region116
        $region115: #{tpu_custom_call.1} parent=75 // pred_region
          %681 = dma.done [#allocation19], 512
        $region116: #{tpu_custom_call.1} parent=75 // pred_fallthru
          _
        // Predicated region
        $region117: #{tpu_custom_call.1} parent=75 // pred_check
          %p682 = pneg %p316
        $region118: #{tpu_custom_call.1} parent=75 // pred_check_branch
          %684 = sbr.rel (%p682) target = $region120
        $region119: #{tpu_custom_call.1} parent=75 // pred_region
          %685 = dma.done [#allocation19], 16
        $region120: #{tpu_custom_call.1} parent=75 // pred_fallthru
          _
        // Predicated region
        $region121: #{tpu_custom_call.1} parent=75 // pred_check
          %p686 = pneg %p337
        $region122: #{tpu_custom_call.1} parent=75 // pred_check_branch
          %688 = sbr.rel (%p686) target = $region124
        $region123: #{tpu_custom_call.1} parent=75 // pred_region
          %689 = dma.done [#allocation22], 16
        $region124: #{tpu_custom_call.1} parent=75 // pred_fallthru
          _
        // Predicated region
        $region125: #{tpu_custom_call.1} parent=75 // pred_check
          %p690 = pneg %p358
        $region126: #{tpu_custom_call.1} parent=75 // pred_check_branch
          %692 = sbr.rel (%p690) target = $region128
        $region127: #{tpu_custom_call.1} parent=75 // pred_region
          %693 = dma.done [#allocation22], 16
        $region128: #{tpu_custom_call.1} parent=75 // pred_fallthru
          _
        %s694 = sand.u32 %s67, 1
        %s695 = scalar_lea.sflag [#allocation4], %s694
        %s696 = sand.u32 %s67, 1
        %s697 = smul.addr %s696, 64
        %s698 = scalar_lea.vmem [#allocation3], %s697
        %p699 = pneg %p80
        %p700 = pneg %p77
        %p701 = pneg %p101
        %p702 = pneg %p98
        %p703 = pneg %p127
        %p704 = pneg %p124
        %p705 = pneg %p148
        %p706 = pneg %p145
        %p707 = pneg %p169
        %p708 = pneg %p166
        %p709 = pneg %p190
        %p710 = pneg %p187
        %p711 = pneg %p211
        %p712 = pneg %p208
        %p713 = pneg %p232
        %p714 = pneg %p229
        %p715 = pneg %p253
        %p716 = pneg %p250
        %p717 = pneg %p274
        %p718 = pneg %p271
        %p719 = pneg %p295
        %p720 = pneg %p292
        %p721 = pneg %p316
        %p722 = pneg %p313
        %p723 = pneg %p337
        %p724 = pneg %p334
        %p725 = pneg %p358
        %p726 = pneg %p355
        %p727 = pneg %p386
        %p728 = pneg %p383
        %s729 = sand.u32 %s373, 1
        %s730 = scalar_lea.sflag [#allocation5], %s729
        %s731 = sand.u32 %s373, 1
        %s732 = smul.addr %s731, 128
        %s733 = scalar_lea.vmem [#allocation24], %s732
        %p734 = pneg %p414
        %p735 = pneg %p411
        %s736 = sand.u32 %s45, 1
        %s737 = scalar_lea.sflag [#allocation26], %s736
        %s738 = sand.u32 %s401, 1
        %s739 = smul.addr %s738, 128
        %s740 = scalar_lea.vmem [#allocation25], %s739
        %p741 = pneg %p442
        %p742 = pneg %p439
        %s743 = sand.u32 %s45, 1
        %s744 = scalar_lea.sflag [#allocation26], %s743
        %s745 = sand.u32 %s429, 1
        %s746 = smul.addr %s745, 128
        %s747 = scalar_lea.vmem [#allocation27], %s746
        %s748 = smul.u32 16, %s49
        %s749 = smul.u32 16, %s49
        %s750 = smul.u32 16, %s49
        %s751 = smul.u32 16, %s49
        %s752 = smul.u32 16, %s49
        %v754 = vld [vmem:[%s641] sm:$0xf]
        %v755 = vld [vmem:[%s641 + $0x4] sm:$0xf]
        %v756 = vld [vmem:[%s641 + $0x8] sm:$0xf]
        %v757 = vld [vmem:[%s641 + $0xc] sm:$0xf]
        %v758 = vld [vmem:[%s641 + $0x10] sm:$0xf]
        %v759 = vld [vmem:[%s641 + $0x14] sm:$0xf]
        %v760 = vld [vmem:[%s641 + $0x18] sm:$0xf]
        %v761 = vld [vmem:[%s641 + $0x1c] sm:$0xf]
        %v762 = vld [vmem:[%s641 + $0x20] sm:$0xf]
        %v763 = vld [vmem:[%s641 + $0x24] sm:$0xf]
        %v764 = vld [vmem:[%s641 + $0x28] sm:$0xf]
        %v765 = vld [vmem:[%s641 + $0x2c] sm:$0xf]
        %v766 = vld [vmem:[%s641 + $0x30] sm:$0xf]
        %v767 = vld [vmem:[%s641 + $0x34] sm:$0xf]
        %v768 = vld [vmem:[%s641 + $0x38] sm:$0xf]
        %v769 = vld [vmem:[%s641 + $0x3c] sm:$0xf]
        %v770 = vld [vmem:[#allocation6] sm:$0xf]
        %v771 = vld [vmem:[#allocation6 + $0x4] sm:$0xf]
        %v772 = vld [vmem:[#allocation6 + $0x8] sm:$0xf]
        %v773 = vld [vmem:[#allocation6 + $0xc] sm:$0xf]
        %v774 = vld [vmem:[#allocation8] sm:$0xff]
        %v775 = vld [vmem:[#allocation8 + $0x8] sm:$0xff]
        %v776 = vld [vmem:[#allocation8 + $0x10] sm:$0xff]
        %v777 = vld [vmem:[#allocation8 + $0x18] sm:$0xff]
        %v778 = vld [vmem:[#allocation8 + $0x20] sm:$0xff]
        %v779 = vld [vmem:[#allocation8 + $0x28] sm:$0xff]
        %v780 = vld [vmem:[#allocation8 + $0x30] sm:$0xff]
        %v781 = vld [vmem:[#allocation8 + $0x38] sm:$0xff]
        %v782 = vld [vmem:[#allocation8 + $0x40] sm:$0xff]
        %v783 = vld [vmem:[#allocation8 + $0x48] sm:$0xff]
        %v784 = vld [vmem:[#allocation8 + $0x50] sm:$0xff]
        %v785 = vld [vmem:[#allocation8 + $0x58] sm:$0xff]
        %v786 = vld [vmem:[#allocation8 + $0x60] sm:$0xff]
        %v787 = vld [vmem:[#allocation8 + $0x68] sm:$0xff]
        %v788 = vld [vmem:[#allocation8 + $0x70] sm:$0xff]
        %v789 = vld [vmem:[#allocation8 + $0x78] sm:$0xff]
        %v790 = vld [vmem:[#allocation11] sm:$0x1]
        %v791 = vld [vmem:[#allocation2] sm:$0x1]
        %v792 = vld [vmem:[#allocation12] sm:$0x1]
        %v793 = vld [vmem:[#allocation14] sm:$0x1]
        %v794 = vld [vmem:[#allocation15] sm:$0xf]
        %v795 = vld [vmem:[#allocation15 + $0x4] sm:$0xf]
        %v796 = vld [vmem:[#allocation15 + $0x8] sm:$0xf]
        %v797 = vld [vmem:[#allocation15 + $0xc] sm:$0xf]
        %v798 = vld [vmem:[#allocation17] sm:$0x1]
        %v799 = vld [vmem:[#allocation18] sm:$0xf]
        %v800 = vld [vmem:[#allocation18 + $0x4] sm:$0xf]
        %v801 = vld [vmem:[#allocation18 + $0x8] sm:$0xf]
        %v802 = vld [vmem:[#allocation18 + $0xc] sm:$0xf]
        %v803 = vld [vmem:[#allocation18 + $0x10] sm:$0xf]
        %v804 = vld [vmem:[#allocation18 + $0x14] sm:$0xf]
        %v805 = vld [vmem:[#allocation18 + $0x18] sm:$0xf]
        %v806 = vld [vmem:[#allocation18 + $0x1c] sm:$0xf]
        %v807 = vld [vmem:[#allocation20] sm:$0x1]
        %v824 = vunpack.c.l.b16 %v754
        %v825 = vunpack.c.l.b16 %v755
        %v826 = vunpack.c.l.b16 %v756
        %v827 = vunpack.c.l.b16 %v757
        %v828 = vunpack.c.l.b16 %v758
        %v829 = vunpack.c.l.b16 %v759
        %v830 = vunpack.c.l.b16 %v760
        %v831 = vunpack.c.l.b16 %v761
        %v832 = vunpack.c.l.b16 %v762
        %v833 = vunpack.c.l.b16 %v763
        %v834 = vunpack.c.l.b16 %v764
        %v835 = vunpack.c.l.b16 %v765
        %v836 = vunpack.c.l.b16 %v766
        %v837 = vunpack.c.l.b16 %v767
        %v838 = vunpack.c.l.b16 %v768
        %v839 = vunpack.c.l.b16 %v769
        %v840 = vpack.c.b16 %v825, %v824
        %v841 = vpack.c.b16 %v827, %v826
        %v842 = vpack.c.b16 %v829, %v828
        %v843 = vpack.c.b16 %v831, %v830
        %v844 = vpack.c.b16 %v833, %v832
        %v845 = vpack.c.b16 %v835, %v834
        %v846 = vpack.c.b16 %v837, %v836
        %v847 = vpack.c.b16 %v839, %v838
        %v852 = vunpack.c.l.b16 %v770
        %v853 = vunpack.c.l.b16 %v771
        %v854 = vunpack.c.l.b16 %v772
        %v855 = vunpack.c.l.b16 %v773
        %v856 = vpack.c.b16 %v853, %v852
        %v857 = vpack.c.b16 %v855, %v854
        %vm860 = vcmask 261120
        %v862 = vsel %vm860, %v840, 0
        %v865 = vsel %vm860, %v841, 0
        %v868 = vsel %vm860, %v842, 0
        %v871 = vsel %vm860, %v843, 0
        %v874 = vsel %vm860, %v844, 0
        %v877 = vsel %vm860, %v845, 0
        %v880 = vsel %vm860, %v846, 0
        %v883 = vsel %vm860, %v847, 0
        %885 = vmatprep.subr.bf16.mxu0 0
        %886 = vmatpush1.bf16.msra.mxu0 %v856
        %887 = vmatprep.subr.bf16.mxu0 0
        %888 = vmatpush1.bf16.msra.mxu0 %v857
        %889 = vmatprep.subr.bf16.mxu0 0
        %890 = vmatpush1.bf16.msra.mxu0 0
        %891 = vmatprep.subr.bf16.mxu0 0
        %892 = vmatpush1.bf16.msra.mxu0 0
        %893 = vmatprep.subr.bf16.mxu0 0
        %894 = vmatpush1.bf16.msra.mxu0 0
        %895 = vmatprep.subr.bf16.mxu0 0
        %896 = vmatpush1.bf16.msra.mxu0 0
        %897 = vmatprep.subr.bf16.mxu0 0
        %898 = vmatpush1.bf16.msra.mxu0 0
        %899 = vmatprep.subr.bf16.mxu0 0
        %900 = vmatpush1.bf16.msra.mxu0 0
        %901 = vmatprep.subr.bf16.mxu0 0
        %902 = vmatpush1.bf16.msra.mxu0 0
        %903 = vmatprep.subr.bf16.mxu0 0
        %904 = vmatpush1.bf16.msra.mxu0 0
        %905 = vmatprep.subr.bf16.mxu0 0
        %906 = vmatpush1.bf16.msra.mxu0 0
        %907 = vmatprep.subr.bf16.mxu0 0
        %908 = vmatpush1.bf16.msra.mxu0 0
        %909 = vmatprep.subr.bf16.mxu0 0
        %910 = vmatpush1.bf16.msra.mxu0 0
        %911 = vmatprep.subr.bf16.mxu0 0
        %912 = vmatpush1.bf16.msra.mxu0 0
        %913 = vmatprep.subr.bf16.mxu0 0
        %914 = vmatpush1.bf16.msra.mxu0 0
        %915 = vmatprep.subr.bf16.mxu0 0
        %916 = vmatpush1.bf16.msra.mxu0 0
        %917 = vmatprep.mubr.bf16.mxu0 0
        %918 = vmatmul.mubr.bf16.gmra.mrb[0].mxu0 %v862
        %v919 = vpop.f32.mrb[0].mxu0
        %v920 = vadd.f32 %v774, %v919
        %v921 = vpop.f32.mrb[0].mxu0
        %v922 = vpop.f32.mrb[0].mxu0
        %v923 = vadd.f32 %v775, %v922
        %v924 = vpop.f32.mrb[0].mxu0
        %925 = vmatprep.mubr.bf16.mxu0 0
        %926 = vmatmul.mubr.bf16.gmra.mrb[0].mxu0 %v865
        %v927 = vpop.f32.mrb[0].mxu0
        %v928 = vadd.f32 %v776, %v927
        %v929 = vpop.f32.mrb[0].mxu0
        %v930 = vpop.f32.mrb[0].mxu0
        %v931 = vadd.f32 %v777, %v930
        %v932 = vpop.f32.mrb[0].mxu0
        %933 = vmatprep.mubr.bf16.mxu0 0
        %934 = vmatmul.mubr.bf16.gmra.mrb[0].mxu0 %v868
        %v935 = vpop.f32.mrb[0].mxu0
        %v936 = vadd.f32 %v778, %v935
        %v937 = vpop.f32.mrb[0].mxu0
        %v938 = vpop.f32.mrb[0].mxu0
        %v939 = vadd.f32 %v779, %v938
        %v940 = vpop.f32.mrb[0].mxu0
        %941 = vmatprep.mubr.bf16.mxu0 0
        %942 = vmatmul.mubr.bf16.gmra.mrb[0].mxu0 %v871
        %v943 = vpop.f32.mrb[0].mxu0
        %v944 = vadd.f32 %v780, %v943
        %v945 = vpop.f32.mrb[0].mxu0
        %v946 = vpop.f32.mrb[0].mxu0
        %v947 = vadd.f32 %v781, %v946
        %v948 = vpop.f32.mrb[0].mxu0
        %949 = vmatprep.mubr.bf16.mxu0 0
        %950 = vmatmul.mubr.bf16.gmra.mrb[0].mxu0 %v874
        %v951 = vpop.f32.mrb[0].mxu0
        %v952 = vadd.f32 %v782, %v951
        %v953 = vpop.f32.mrb[0].mxu0
        %v954 = vpop.f32.mrb[0].mxu0
        %v955 = vadd.f32 %v783, %v954
        %v956 = vpop.f32.mrb[0].mxu0
        %957 = vmatprep.mubr.bf16.mxu0 0
        %958 = vmatmul.mubr.bf16.gmra.mrb[0].mxu0 %v877
        %v959 = vpop.f32.mrb[0].mxu0
        %v960 = vadd.f32 %v784, %v959
        %v961 = vpop.f32.mrb[0].mxu0
        %v962 = vpop.f32.mrb[0].mxu0
        %v963 = vadd.f32 %v785, %v962
        %v964 = vpop.f32.mrb[0].mxu0
        %965 = vmatprep.mubr.bf16.mxu0 0
        %966 = vmatmul.mubr.bf16.gmra.mrb[0].mxu0 %v880
        %v967 = vpop.f32.mrb[0].mxu0
        %v968 = vadd.f32 %v786, %v967
        %v969 = vpop.f32.mrb[0].mxu0
        %v970 = vpop.f32.mrb[0].mxu0
        %v971 = vadd.f32 %v787, %v970
        %v972 = vpop.f32.mrb[0].mxu0
        %973 = vmatprep.mubr.bf16.mxu0 0
        %974 = vmatmul.mubr.bf16.gmra.mrb[0].mxu0 %v883
        %v975 = vpop.f32.mrb[0].mxu0
        %v976 = vadd.f32 %v788, %v975
        %v977 = vpop.f32.mrb[0].mxu0
        %v978 = vpop.f32.mrb[0].mxu0
        %v979 = vadd.f32 %v789, %v978
        %v980 = vpop.f32.mrb[0].mxu0
        %981 = vdwg.mxu0
        %v982 = vld [vmem:[#allocation9] sm:$0x1]
        %v983 = vlaneseq
        %v984 = vshrl.u32 %v983, 7
        %v985 = vsub.s32 0, %v984
        %v986 = vrot.slane %v982, %v985
        %v987 = vadd.f32 %v920, %v986
        %v988 = vadd.f32 %v923, %v986
        %v989 = vadd.f32 %v928, %v986
        %v990 = vadd.f32 %v931, %v986
        %v991 = vadd.f32 %v936, %v986
        %v992 = vadd.f32 %v939, %v986
        %v993 = vadd.f32 %v944, %v986
        %v994 = vadd.f32 %v947, %v986
        %v995 = vadd.f32 %v952, %v986
        %v996 = vadd.f32 %v955, %v986
        %v997 = vadd.f32 %v960, %v986
        %v998 = vadd.f32 %v963, %v986
        %v999 = vadd.f32 %v968, %v986
        %v1000 = vadd.f32 %v971, %v986
        %v1001 = vadd.f32 %v976, %v986
        %v1002 = vadd.f32 %v979, %v986
        %v1004 = vlaneseq
        %v1005 = vshrl.u32 %v1004, 7
        %v1006 = vsub.s32 0, %v1005
        %v1007 = vrot.slane %v790, %v1006
        %v1009 = vmul.f32 %v987, %v1007
        %v1010 = vmul.f32 %v988, %v1007
        %v1011 = vmul.f32 %v989, %v1007
        %v1012 = vmul.f32 %v990, %v1007
        %v1013 = vmul.f32 %v991, %v1007
        %v1014 = vmul.f32 %v992, %v1007
        %v1015 = vmul.f32 %v993, %v1007
        %v1016 = vmul.f32 %v994, %v1007
        %v1017 = vmul.f32 %v995, %v1007
        %v1018 = vmul.f32 %v996, %v1007
        %v1019 = vmul.f32 %v997, %v1007
        %v1020 = vmul.f32 %v998, %v1007
        %v1021 = vmul.f32 %v999, %v1007
        %v1022 = vmul.f32 %v1000, %v1007
        %v1023 = vmul.f32 %v1001, %v1007
        %v1024 = vmul.f32 %v1002, %v1007
        %v1025 = vsel %vm860, %v1009, 0.0
        %1026 = vadd.xlane.f32.xlu0 %v1025
        %v1027 = vpop.xlane.xlu0 %1026
        %v1028 = vsel %vm860, %v1010, 0.0
        %1029 = vadd.xlane.f32.xlu0 %v1028
        %v1030 = vpop.xlane.xlu0 %1029
        %v1031 = vsel %vm860, %v1011, 0.0
        %1032 = vadd.xlane.f32.xlu0 %v1031
        %v1033 = vpop.xlane.xlu0 %1032
        %v1034 = vsel %vm860, %v1012, 0.0
        %1035 = vadd.xlane.f32.xlu0 %v1034
        %v1036 = vpop.xlane.xlu0 %1035
        %v1037 = vsel %vm860, %v1013, 0.0
        %1038 = vadd.xlane.f32.xlu0 %v1037
        %v1039 = vpop.xlane.xlu0 %1038
        %v1040 = vsel %vm860, %v1014, 0.0
        %1041 = vadd.xlane.f32.xlu0 %v1040
        %v1042 = vpop.xlane.xlu0 %1041
        %v1043 = vsel %vm860, %v1015, 0.0
        %1044 = vadd.xlane.f32.xlu0 %v1043
        %v1045 = vpop.xlane.xlu0 %1044
        %v1046 = vsel %vm860, %v1016, 0.0
        %1047 = vadd.xlane.f32.xlu0 %v1046
        %v1048 = vpop.xlane.xlu0 %1047
        %v1049 = vsel %vm860, %v1017, 0.0
        %1050 = vadd.xlane.f32.xlu0 %v1049
        %v1051 = vpop.xlane.xlu0 %1050
        %v1052 = vsel %vm860, %v1018, 0.0
        %1053 = vadd.xlane.f32.xlu0 %v1052
        %v1054 = vpop.xlane.xlu0 %1053
        %v1055 = vsel %vm860, %v1019, 0.0
        %1056 = vadd.xlane.f32.xlu0 %v1055
        %v1057 = vpop.xlane.xlu0 %1056
        %v1058 = vsel %vm860, %v1020, 0.0
        %1059 = vadd.xlane.f32.xlu0 %v1058
        %v1060 = vpop.xlane.xlu0 %1059
        %v1061 = vsel %vm860, %v1021, 0.0
        %1062 = vadd.xlane.f32.xlu0 %v1061
        %v1063 = vpop.xlane.xlu0 %1062
        %v1064 = vsel %vm860, %v1022, 0.0
        %1065 = vadd.xlane.f32.xlu0 %v1064
        %v1066 = vpop.xlane.xlu0 %1065
        %v1067 = vsel %vm860, %v1023, 0.0
        %1068 = vadd.xlane.f32.xlu0 %v1067
        %v1069 = vpop.xlane.xlu0 %1068
        %v1070 = vsel %vm860, %v1024, 0.0
        %1071 = vadd.xlane.f32.xlu0 %v1070
        %v1072 = vpop.xlane.xlu0 %1071
        %v1074 = vlaneseq
        %v1075 = vshrl.u32 %v1074, 7
        %v1076 = vsub.s32 0, %v1075
        %v1077 = vrot.slane %v791, %v1076
        %v1079 = vadd.f32 %v1027, %v1077
        %v1080 = vadd.f32 %v1030, %v1077
        %v1081 = vadd.f32 %v1033, %v1077
        %v1082 = vadd.f32 %v1036, %v1077
        %v1083 = vadd.f32 %v1039, %v1077
        %v1084 = vadd.f32 %v1042, %v1077
        %v1085 = vadd.f32 %v1045, %v1077
        %v1086 = vadd.f32 %v1048, %v1077
        %v1087 = vadd.f32 %v1051, %v1077
        %v1088 = vadd.f32 %v1054, %v1077
        %v1089 = vadd.f32 %v1057, %v1077
        %v1090 = vadd.f32 %v1060, %v1077
        %v1091 = vadd.f32 %v1063, %v1077
        %v1092 = vadd.f32 %v1066, %v1077
        %v1093 = vadd.f32 %v1069, %v1077
        %v1094 = vadd.f32 %v1072, %v1077
        %v1095 = vxor.u32 %v1079, 2147483648
        %v1096 = vxor.u32 %v1080, 2147483648
        %v1097 = vxor.u32 %v1081, 2147483648
        %v1098 = vxor.u32 %v1082, 2147483648
        %v1099 = vxor.u32 %v1083, 2147483648
        %v1100 = vxor.u32 %v1084, 2147483648
        %v1101 = vxor.u32 %v1085, 2147483648
        %v1102 = vxor.u32 %v1086, 2147483648
        %v1103 = vxor.u32 %v1087, 2147483648
        %v1104 = vxor.u32 %v1088, 2147483648
        %v1105 = vxor.u32 %v1089, 2147483648
        %v1106 = vxor.u32 %v1090, 2147483648
        %v1107 = vxor.u32 %v1091, 2147483648
        %v1108 = vxor.u32 %v1092, 2147483648
        %v1109 = vxor.u32 %v1093, 2147483648
        %v1110 = vxor.u32 %v1094, 2147483648
        %v1111 = vmul.f32 %v1095, 1.442695
        %v1112 = vpow.pop %v1111
        %v1113 = vmul.f32 %v1096, 1.442695
        %v1114 = vpow.pop %v1113
        %v1115 = vmul.f32 %v1097, 1.442695
        %v1116 = vpow.pop %v1115
        %v1117 = vmul.f32 %v1098, 1.442695
        %v1118 = vpow.pop %v1117
        %v1119 = vmul.f32 %v1099, 1.442695
        %v1120 = vpow.pop %v1119
        %v1121 = vmul.f32 %v1100, 1.442695
        %v1122 = vpow.pop %v1121
        %v1123 = vmul.f32 %v1101, 1.442695
        %v1124 = vpow.pop %v1123
        %v1125 = vmul.f32 %v1102, 1.442695
        %v1126 = vpow.pop %v1125
        %v1127 = vmul.f32 %v1103, 1.442695
        %v1128 = vpow.pop %v1127
        %v1129 = vmul.f32 %v1104, 1.442695
        %v1130 = vpow.pop %v1129
        %v1131 = vmul.f32 %v1105, 1.442695
        %v1132 = vpow.pop %v1131
        %v1133 = vmul.f32 %v1106, 1.442695
        %v1134 = vpow.pop %v1133
        %v1135 = vmul.f32 %v1107, 1.442695
        %v1136 = vpow.pop %v1135
        %v1137 = vmul.f32 %v1108, 1.442695
        %v1138 = vpow.pop %v1137
        %v1139 = vmul.f32 %v1109, 1.442695
        %v1140 = vpow.pop %v1139
        %v1141 = vmul.f32 %v1110, 1.442695
        %v1142 = vpow.pop %v1141
        %v1143 = vadd.f32 %v1112, 1.0
        %v1144 = vadd.f32 %v1114, 1.0
        %v1145 = vadd.f32 %v1116, 1.0
        %v1146 = vadd.f32 %v1118, 1.0
        %v1147 = vadd.f32 %v1120, 1.0
        %v1148 = vadd.f32 %v1122, 1.0
        %v1149 = vadd.f32 %v1124, 1.0
        %v1150 = vadd.f32 %v1126, 1.0
        %v1151 = vadd.f32 %v1128, 1.0
        %v1152 = vadd.f32 %v1130, 1.0
        %v1153 = vadd.f32 %v1132, 1.0
        %v1154 = vadd.f32 %v1134, 1.0
        %v1155 = vadd.f32 %v1136, 1.0
        %v1156 = vadd.f32 %v1138, 1.0
        %v1157 = vadd.f32 %v1140, 1.0
        %v1158 = vadd.f32 %v1142, 1.0
        %v1159 = vrcp.pop %v1143
        %v1160 = vmul.f32 1.0, %v1159
        %v1161 = vrcp.pop %v1144
        %v1162 = vmul.f32 1.0, %v1161
        %v1163 = vrcp.pop %v1145
        %v1164 = vmul.f32 1.0, %v1163
        %v1165 = vrcp.pop %v1146
        %v1166 = vmul.f32 1.0, %v1165
        %v1167 = vrcp.pop %v1147
        %v1168 = vmul.f32 1.0, %v1167
        %v1169 = vrcp.pop %v1148
        %v1170 = vmul.f32 1.0, %v1169
        %v1171 = vrcp.pop %v1149
        %v1172 = vmul.f32 1.0, %v1171
        %v1173 = vrcp.pop %v1150
        %v1174 = vmul.f32 1.0, %v1173
        %v1175 = vrcp.pop %v1151
        %v1176 = vmul.f32 1.0, %v1175
        %v1177 = vrcp.pop %v1152
        %v1178 = vmul.f32 1.0, %v1177
        %v1179 = vrcp.pop %v1153
        %v1180 = vmul.f32 1.0, %v1179
        %v1181 = vrcp.pop %v1154
        %v1182 = vmul.f32 1.0, %v1181
        %v1183 = vrcp.pop %v1155
        %v1184 = vmul.f32 1.0, %v1183
        %v1185 = vrcp.pop %v1156
        %v1186 = vmul.f32 1.0, %v1185
        %v1187 = vrcp.pop %v1157
        %v1188 = vmul.f32 1.0, %v1187
        %v1189 = vrcp.pop %v1158
        %v1190 = vmul.f32 1.0, %v1189
        %vm1191 = vcmp.lt.f32.partialorder 0.0, 1.0
        %v1192 = vsel %vm1191, 1, 0
        %v1193 = vcvt.s32.f32 %v1192
        %v1194 = vmul.f32 %v1160, %v1193
        %v1195 = vmul.f32 %v1162, %v1193
        %v1196 = vmul.f32 %v1164, %v1193
        %v1197 = vmul.f32 %v1166, %v1193
        %v1198 = vmul.f32 %v1168, %v1193
        %v1199 = vmul.f32 %v1170, %v1193
        %v1200 = vmul.f32 %v1172, %v1193
        %v1201 = vmul.f32 %v1174, %v1193
        %v1202 = vmul.f32 %v1176, %v1193
        %v1203 = vmul.f32 %v1178, %v1193
        %v1204 = vmul.f32 %v1180, %v1193
        %v1205 = vmul.f32 %v1182, %v1193
        %v1206 = vmul.f32 %v1184, %v1193
        %v1207 = vmul.f32 %v1186, %v1193
        %v1208 = vmul.f32 %v1188, %v1193
        %v1209 = vmul.f32 %v1190, %v1193
        %v1210 = vadd.f32 %v1194, 0.0
        %v1211 = vadd.f32 %v1195, 0.0
        %v1212 = vadd.f32 %v1196, 0.0
        %v1213 = vadd.f32 %v1197, 0.0
        %v1214 = vadd.f32 %v1198, 0.0
        %v1215 = vadd.f32 %v1199, 0.0
        %v1216 = vadd.f32 %v1200, 0.0
        %v1217 = vadd.f32 %v1201, 0.0
        %v1218 = vadd.f32 %v1202, 0.0
        %v1219 = vadd.f32 %v1203, 0.0
        %v1220 = vadd.f32 %v1204, 0.0
        %v1221 = vadd.f32 %v1205, 0.0
        %v1222 = vadd.f32 %v1206, 0.0
        %v1223 = vadd.f32 %v1207, 0.0
        %v1224 = vadd.f32 %v1208, 0.0
        %v1225 = vadd.f32 %v1209, 0.0
        %vm1226 = vcmp.gt.f32.partialorder %v1210, 0.9
        %vm1227 = vcmp.gt.f32.partialorder %v1211, 0.9
        %vm1228 = vcmp.gt.f32.partialorder %v1212, 0.9
        %vm1229 = vcmp.gt.f32.partialorder %v1213, 0.9
        %vm1230 = vcmp.gt.f32.partialorder %v1214, 0.9
        %vm1231 = vcmp.gt.f32.partialorder %v1215, 0.9
        %vm1232 = vcmp.gt.f32.partialorder %v1216, 0.9
        %vm1233 = vcmp.gt.f32.partialorder %v1217, 0.9
        %vm1234 = vcmp.gt.f32.partialorder %v1218, 0.9
        %vm1235 = vcmp.gt.f32.partialorder %v1219, 0.9
        %vm1236 = vcmp.gt.f32.partialorder %v1220, 0.9
        %vm1237 = vcmp.gt.f32.partialorder %v1221, 0.9
        %vm1238 = vcmp.gt.f32.partialorder %v1222, 0.9
        %vm1239 = vcmp.gt.f32.partialorder %v1223, 0.9
        %vm1240 = vcmp.gt.f32.partialorder %v1224, 0.9
        %vm1241 = vcmp.gt.f32.partialorder %v1225, 0.9
        %v1242 = vsel %vm1226, 1, 0
        %v1243 = vsel %vm1227, 1, 0
        %v1244 = vsel %vm1228, 1, 0
        %v1245 = vsel %vm1229, 1, 0
        %v1246 = vsel %vm1230, 1, 0
        %v1247 = vsel %vm1231, 1, 0
        %v1248 = vsel %vm1232, 1, 0
        %v1249 = vsel %vm1233, 1, 0
        %v1250 = vsel %vm1234, 1, 0
        %v1251 = vsel %vm1235, 1, 0
        %v1252 = vsel %vm1236, 1, 0
        %v1253 = vsel %vm1237, 1, 0
        %v1254 = vsel %vm1238, 1, 0
        %v1255 = vsel %vm1239, 1, 0
        %v1256 = vsel %vm1240, 1, 0
        %v1257 = vsel %vm1241, 1, 0
        %v1258 = vcvt.s32.f32 %v1242
        %v1259 = vcvt.s32.f32 %v1243
        %v1260 = vcvt.s32.f32 %v1244
        %v1261 = vcvt.s32.f32 %v1245
        %v1262 = vcvt.s32.f32 %v1246
        %v1263 = vcvt.s32.f32 %v1247
        %v1264 = vcvt.s32.f32 %v1248
        %v1265 = vcvt.s32.f32 %v1249
        %v1266 = vcvt.s32.f32 %v1250
        %v1267 = vcvt.s32.f32 %v1251
        %v1268 = vcvt.s32.f32 %v1252
        %v1269 = vcvt.s32.f32 %v1253
        %v1270 = vcvt.s32.f32 %v1254
        %v1271 = vcvt.s32.f32 %v1255
        %v1272 = vcvt.s32.f32 %v1256
        %v1273 = vcvt.s32.f32 %v1257
        %v1274 = vmul.f32 %v1258, %v1193
        %v1275 = vmul.f32 %v1259, %v1193
        %v1276 = vmul.f32 %v1260, %v1193
        %v1277 = vmul.f32 %v1261, %v1193
        %v1278 = vmul.f32 %v1262, %v1193
        %v1279 = vmul.f32 %v1263, %v1193
        %v1280 = vmul.f32 %v1264, %v1193
        %v1281 = vmul.f32 %v1265, %v1193
        %v1282 = vmul.f32 %v1266, %v1193
        %v1283 = vmul.f32 %v1267, %v1193
        %v1284 = vmul.f32 %v1268, %v1193
        %v1285 = vmul.f32 %v1269, %v1193
        %v1286 = vmul.f32 %v1270, %v1193
        %v1287 = vmul.f32 %v1271, %v1193
        %v1288 = vmul.f32 %v1272, %v1193
        %v1289 = vmul.f32 %v1273, %v1193
        %vm1290 = vcmp.le.f32.partialorder %v1210, 0.9
        %vm1291 = vcmp.le.f32.partialorder %v1211, 0.9
        %vm1292 = vcmp.le.f32.partialorder %v1212, 0.9
        %vm1293 = vcmp.le.f32.partialorder %v1213, 0.9
        %vm1294 = vcmp.le.f32.partialorder %v1214, 0.9
        %vm1295 = vcmp.le.f32.partialorder %v1215, 0.9
        %vm1296 = vcmp.le.f32.partialorder %v1216, 0.9
        %vm1297 = vcmp.le.f32.partialorder %v1217, 0.9
        %vm1298 = vcmp.le.f32.partialorder %v1218, 0.9
        %vm1299 = vcmp.le.f32.partialorder %v1219, 0.9
        %vm1300 = vcmp.le.f32.partialorder %v1220, 0.9
        %vm1301 = vcmp.le.f32.partialorder %v1221, 0.9
        %vm1302 = vcmp.le.f32.partialorder %v1222, 0.9
        %vm1303 = vcmp.le.f32.partialorder %v1223, 0.9
        %vm1304 = vcmp.le.f32.partialorder %v1224, 0.9
        %vm1305 = vcmp.le.f32.partialorder %v1225, 0.9
        %v1306 = vsel %vm1290, 1, 0
        %v1307 = vsel %vm1291, 1, 0
        %v1308 = vsel %vm1292, 1, 0
        %v1309 = vsel %vm1293, 1, 0
        %v1310 = vsel %vm1294, 1, 0
        %v1311 = vsel %vm1295, 1, 0
        %v1312 = vsel %vm1296, 1, 0
        %v1313 = vsel %vm1297, 1, 0
        %v1314 = vsel %vm1298, 1, 0
        %v1315 = vsel %vm1299, 1, 0
        %v1316 = vsel %vm1300, 1, 0
        %v1317 = vsel %vm1301, 1, 0
        %v1318 = vsel %vm1302, 1, 0
        %v1319 = vsel %vm1303, 1, 0
        %v1320 = vsel %vm1304, 1, 0
        %v1321 = vsel %vm1305, 1, 0
        %v1322 = vcvt.s32.f32 %v1306
        %v1323 = vcvt.s32.f32 %v1307
        %v1324 = vcvt.s32.f32 %v1308
        %v1325 = vcvt.s32.f32 %v1309
        %v1326 = vcvt.s32.f32 %v1310
        %v1327 = vcvt.s32.f32 %v1311
        %v1328 = vcvt.s32.f32 %v1312
        %v1329 = vcvt.s32.f32 %v1313
        %v1330 = vcvt.s32.f32 %v1314
        %v1331 = vcvt.s32.f32 %v1315
        %v1332 = vcvt.s32.f32 %v1316
        %v1333 = vcvt.s32.f32 %v1317
        %v1334 = vcvt.s32.f32 %v1318
        %v1335 = vcvt.s32.f32 %v1319
        %v1336 = vcvt.s32.f32 %v1320
        %v1337 = vcvt.s32.f32 %v1321
        %v1338 = vmul.f32 %v1322, %v1193
        %v1339 = vmul.f32 %v1323, %v1193
        %v1340 = vmul.f32 %v1324, %v1193
        %v1341 = vmul.f32 %v1325, %v1193
        %v1342 = vmul.f32 %v1326, %v1193
        %v1343 = vmul.f32 %v1327, %v1193
        %v1344 = vmul.f32 %v1328, %v1193
        %v1345 = vmul.f32 %v1329, %v1193
        %v1346 = vmul.f32 %v1330, %v1193
        %v1347 = vmul.f32 %v1331, %v1193
        %v1348 = vmul.f32 %v1332, %v1193
        %v1349 = vmul.f32 %v1333, %v1193
        %v1350 = vmul.f32 %v1334, %v1193
        %v1351 = vmul.f32 %v1335, %v1193
        %v1352 = vmul.f32 %v1336, %v1193
        %v1353 = vmul.f32 %v1337, %v1193
        %v1354 = vmul.f32 %v1160, %v1338
        %v1355 = vmul.f32 %v1162, %v1339
        %v1356 = vmul.f32 %v1164, %v1340
        %v1357 = vmul.f32 %v1166, %v1341
        %v1358 = vmul.f32 %v1168, %v1342
        %v1359 = vmul.f32 %v1170, %v1343
        %v1360 = vmul.f32 %v1172, %v1344
        %v1361 = vmul.f32 %v1174, %v1345
        %v1362 = vmul.f32 %v1176, %v1346
        %v1363 = vmul.f32 %v1178, %v1347
        %v1364 = vmul.f32 %v1180, %v1348
        %v1365 = vmul.f32 %v1182, %v1349
        %v1366 = vmul.f32 %v1184, %v1350
        %v1367 = vmul.f32 %v1186, %v1351
        %v1368 = vmul.f32 %v1188, %v1352
        %v1369 = vmul.f32 %v1190, %v1353
        %v1370 = vadd.f32 %v1354, 0.0
        %v1371 = vadd.f32 %v1355, 0.0
        %v1372 = vadd.f32 %v1356, 0.0
        %v1373 = vadd.f32 %v1357, 0.0
        %v1374 = vadd.f32 %v1358, 0.0
        %v1375 = vadd.f32 %v1359, 0.0
        %v1376 = vadd.f32 %v1360, 0.0
        %v1377 = vadd.f32 %v1361, 0.0
        %v1378 = vadd.f32 %v1362, 0.0
        %v1379 = vadd.f32 %v1363, 0.0
        %v1380 = vadd.f32 %v1364, 0.0
        %v1381 = vadd.f32 %v1365, 0.0
        %v1382 = vadd.f32 %v1366, 0.0
        %v1383 = vadd.f32 %v1367, 0.0
        %v1384 = vadd.f32 %v1368, 0.0
        %v1385 = vadd.f32 %v1369, 0.0
        %v1386 = vsub.f32 1.0, %v1370
        %v1387 = vsub.f32 1.0, %v1371
        %v1388 = vsub.f32 1.0, %v1372
        %v1389 = vsub.f32 1.0, %v1373
        %v1390 = vsub.f32 1.0, %v1374
        %v1391 = vsub.f32 1.0, %v1375
        %v1392 = vsub.f32 1.0, %v1376
        %v1393 = vsub.f32 1.0, %v1377
        %v1394 = vsub.f32 1.0, %v1378
        %v1395 = vsub.f32 1.0, %v1379
        %v1396 = vsub.f32 1.0, %v1380
        %v1397 = vsub.f32 1.0, %v1381
        %v1398 = vsub.f32 1.0, %v1382
        %v1399 = vsub.f32 1.0, %v1383
        %v1400 = vsub.f32 1.0, %v1384
        %v1401 = vsub.f32 1.0, %v1385
        %v1402 = vmul.f32 %v1274, %v1386
        %v1403 = vmul.f32 %v1275, %v1387
        %v1404 = vmul.f32 %v1276, %v1388
        %v1405 = vmul.f32 %v1277, %v1389
        %v1406 = vmul.f32 %v1278, %v1390
        %v1407 = vmul.f32 %v1279, %v1391
        %v1408 = vmul.f32 %v1280, %v1392
        %v1409 = vmul.f32 %v1281, %v1393
        %v1410 = vmul.f32 %v1282, %v1394
        %v1411 = vmul.f32 %v1283, %v1395
        %v1412 = vmul.f32 %v1284, %v1396
        %v1413 = vmul.f32 %v1285, %v1397
        %v1414 = vmul.f32 %v1286, %v1398
        %v1415 = vmul.f32 %v1287, %v1399
        %v1416 = vmul.f32 %v1288, %v1400
        %v1417 = vmul.f32 %v1289, %v1401
        %v1418 = vadd.f32 %v1402, 0.0
        %v1419 = vadd.f32 %v1403, 0.0
        %v1420 = vadd.f32 %v1404, 0.0
        %v1421 = vadd.f32 %v1405, 0.0
        %v1422 = vadd.f32 %v1406, 0.0
        %v1423 = vadd.f32 %v1407, 0.0
        %v1424 = vadd.f32 %v1408, 0.0
        %v1425 = vadd.f32 %v1409, 0.0
        %v1426 = vadd.f32 %v1410, 0.0
        %v1427 = vadd.f32 %v1411, 0.0
        %v1428 = vadd.f32 %v1412, 0.0
        %v1429 = vadd.f32 %v1413, 0.0
        %v1430 = vadd.f32 %v1414, 0.0
        %v1431 = vadd.f32 %v1415, 0.0
        %v1432 = vadd.f32 %v1416, 0.0
        %v1433 = vadd.f32 %v1417, 0.0
        %v1434 = vmul.f32 %v1274, %v1418
        %v1435 = vmul.f32 %v1275, %v1419
        %v1436 = vmul.f32 %v1276, %v1420
        %v1437 = vmul.f32 %v1277, %v1421
        %v1438 = vmul.f32 %v1278, %v1422
        %v1439 = vmul.f32 %v1279, %v1423
        %v1440 = vmul.f32 %v1280, %v1424
        %v1441 = vmul.f32 %v1281, %v1425
        %v1442 = vmul.f32 %v1282, %v1426
        %v1443 = vmul.f32 %v1283, %v1427
        %v1444 = vmul.f32 %v1284, %v1428
        %v1445 = vmul.f32 %v1285, %v1429
        %v1446 = vmul.f32 %v1286, %v1430
        %v1447 = vmul.f32 %v1287, %v1431
        %v1448 = vmul.f32 %v1288, %v1432
        %v1449 = vmul.f32 %v1289, %v1433
        %v1450 = vadd.f32 %v1370, %v1434
        %v1451 = vadd.f32 %v1371, %v1435
        %v1452 = vadd.f32 %v1372, %v1436
        %v1453 = vadd.f32 %v1373, %v1437
        %v1454 = vadd.f32 %v1374, %v1438
        %v1455 = vadd.f32 %v1375, %v1439
        %v1456 = vadd.f32 %v1376, %v1440
        %v1457 = vadd.f32 %v1377, %v1441
        %v1458 = vadd.f32 %v1378, %v1442
        %v1459 = vadd.f32 %v1379, %v1443
        %v1460 = vadd.f32 %v1380, %v1444
        %v1461 = vadd.f32 %v1381, %v1445
        %v1462 = vadd.f32 %v1382, %v1446
        %v1463 = vadd.f32 %v1383, %v1447
        %v1464 = vadd.f32 %v1384, %v1448
        %v1465 = vadd.f32 %v1385, %v1449
        %v1466 = vadd.f32 %v1338, 0.0
        %v1467 = vadd.f32 %v1339, 0.0
        %v1468 = vadd.f32 %v1340, 0.0
        %v1469 = vadd.f32 %v1341, 0.0
        %v1470 = vadd.f32 %v1342, 0.0
        %v1471 = vadd.f32 %v1343, 0.0
        %v1472 = vadd.f32 %v1344, 0.0
        %v1473 = vadd.f32 %v1345, 0.0
        %v1474 = vadd.f32 %v1346, 0.0
        %v1475 = vadd.f32 %v1347, 0.0
        %v1476 = vadd.f32 %v1348, 0.0
        %v1477 = vadd.f32 %v1349, 0.0
        %v1478 = vadd.f32 %v1350, 0.0
        %v1479 = vadd.f32 %v1351, 0.0
        %v1480 = vadd.f32 %v1352, 0.0
        %v1481 = vadd.f32 %v1353, 0.0
        %v1482 = vadd.f32 %v1466, %v1274
        %v1483 = vadd.f32 %v1467, %v1275
        %v1484 = vadd.f32 %v1468, %v1276
        %v1485 = vadd.f32 %v1469, %v1277
        %v1486 = vadd.f32 %v1470, %v1278
        %v1487 = vadd.f32 %v1471, %v1279
        %v1488 = vadd.f32 %v1472, %v1280
        %v1489 = vadd.f32 %v1473, %v1281
        %v1490 = vadd.f32 %v1474, %v1282
        %v1491 = vadd.f32 %v1475, %v1283
        %v1492 = vadd.f32 %v1476, %v1284
        %v1493 = vadd.f32 %v1477, %v1285
        %v1494 = vadd.f32 %v1478, %v1286
        %v1495 = vadd.f32 %v1479, %v1287
        %v1496 = vadd.f32 %v1480, %v1288
        %v1497 = vadd.f32 %v1481, %v1289
        %v1498 = vadd.f32 %v1354, %v1434
        %v1499 = vadd.f32 %v1355, %v1435
        %v1500 = vadd.f32 %v1356, %v1436
        %v1501 = vadd.f32 %v1357, %v1437
        %v1502 = vadd.f32 %v1358, %v1438
        %v1503 = vadd.f32 %v1359, %v1439
        %v1504 = vadd.f32 %v1360, %v1440
        %v1505 = vadd.f32 %v1361, %v1441
        %v1506 = vadd.f32 %v1362, %v1442
        %v1507 = vadd.f32 %v1363, %v1443
        %v1508 = vadd.f32 %v1364, %v1444
        %v1509 = vadd.f32 %v1365, %v1445
        %v1510 = vadd.f32 %v1366, %v1446
        %v1511 = vadd.f32 %v1367, %v1447
        %v1512 = vadd.f32 %v1368, %v1448
        %v1513 = vadd.f32 %v1369, %v1449
        %v1514 = vsel %vm860, %v987, 0.0
        %1515 = vadd.xlane.f32.xlu0 %v1514
        %v1516 = vpop.xlane.xlu0 %1515
        %v1517 = vsel %vm860, %v988, 0.0
        %1518 = vadd.xlane.f32.xlu0 %v1517
        %v1519 = vpop.xlane.xlu0 %1518
        %v1520 = vsel %vm860, %v989, 0.0
        %1521 = vadd.xlane.f32.xlu0 %v1520
        %v1522 = vpop.xlane.xlu0 %1521
        %v1523 = vsel %vm860, %v990, 0.0
        %1524 = vadd.xlane.f32.xlu0 %v1523
        %v1525 = vpop.xlane.xlu0 %1524
        %v1526 = vsel %vm860, %v991, 0.0
        %1527 = vadd.xlane.f32.xlu0 %v1526
        %v1528 = vpop.xlane.xlu0 %1527
        %v1529 = vsel %vm860, %v992, 0.0
        %1530 = vadd.xlane.f32.xlu0 %v1529
        %v1531 = vpop.xlane.xlu0 %1530
        %v1532 = vsel %vm860, %v993, 0.0
        %1533 = vadd.xlane.f32.xlu0 %v1532
        %v1534 = vpop.xlane.xlu0 %1533
        %v1535 = vsel %vm860, %v994, 0.0
        %1536 = vadd.xlane.f32.xlu0 %v1535
        %v1537 = vpop.xlane.xlu0 %1536
        %v1538 = vsel %vm860, %v995, 0.0
        %1539 = vadd.xlane.f32.xlu0 %v1538
        %v1540 = vpop.xlane.xlu0 %1539
        %v1541 = vsel %vm860, %v996, 0.0
        %1542 = vadd.xlane.f32.xlu0 %v1541
        %v1543 = vpop.xlane.xlu0 %1542
        %v1544 = vsel %vm860, %v997, 0.0
        %1545 = vadd.xlane.f32.xlu0 %v1544
        %v1546 = vpop.xlane.xlu0 %1545
        %v1547 = vsel %vm860, %v998, 0.0
        %1548 = vadd.xlane.f32.xlu0 %v1547
        %v1549 = vpop.xlane.xlu0 %1548
        %v1550 = vsel %vm860, %v999, 0.0
        %1551 = vadd.xlane.f32.xlu0 %v1550
        %v1552 = vpop.xlane.xlu0 %1551
        %v1553 = vsel %vm860, %v1000, 0.0
        %1554 = vadd.xlane.f32.xlu0 %v1553
        %v1555 = vpop.xlane.xlu0 %1554
        %v1556 = vsel %vm860, %v1001, 0.0
        %1557 = vadd.xlane.f32.xlu0 %v1556
        %v1558 = vpop.xlane.xlu0 %1557
        %v1559 = vsel %vm860, %v1002, 0.0
        %1560 = vadd.xlane.f32.xlu0 %v1559
        %v1561 = vpop.xlane.xlu0 %1560
        %v1562 = vrcp.pop 32.0
        %v1563 = vmul.f32 %v1516, %v1562
        %v1564 = vmul.f32 %v1519, %v1562
        %v1565 = vmul.f32 %v1522, %v1562
        %v1566 = vmul.f32 %v1525, %v1562
        %v1567 = vmul.f32 %v1528, %v1562
        %v1568 = vmul.f32 %v1531, %v1562
        %v1569 = vmul.f32 %v1534, %v1562
        %v1570 = vmul.f32 %v1537, %v1562
        %v1571 = vmul.f32 %v1540, %v1562
        %v1572 = vmul.f32 %v1543, %v1562
        %v1573 = vmul.f32 %v1546, %v1562
        %v1574 = vmul.f32 %v1549, %v1562
        %v1575 = vmul.f32 %v1552, %v1562
        %v1576 = vmul.f32 %v1555, %v1562
        %v1577 = vmul.f32 %v1558, %v1562
        %v1578 = vmul.f32 %v1561, %v1562
        %v1579 = vsub.f32 %v987, %v1563
        %v1580 = vsub.f32 %v988, %v1564
        %v1581 = vsub.f32 %v989, %v1565
        %v1582 = vsub.f32 %v990, %v1566
        %v1583 = vsub.f32 %v991, %v1567
        %v1584 = vsub.f32 %v992, %v1568
        %v1585 = vsub.f32 %v993, %v1569
        %v1586 = vsub.f32 %v994, %v1570
        %v1587 = vsub.f32 %v995, %v1571
        %v1588 = vsub.f32 %v996, %v1572
        %v1589 = vsub.f32 %v997, %v1573
        %v1590 = vsub.f32 %v998, %v1574
        %v1591 = vsub.f32 %v999, %v1575
        %v1592 = vsub.f32 %v1000, %v1576
        %v1593 = vsub.f32 %v1001, %v1577
        %v1594 = vsub.f32 %v1002, %v1578
        %v1595 = vmul.f32 %v1579, %v1579
        %v1596 = vmul.f32 %v1580, %v1580
        %v1597 = vmul.f32 %v1581, %v1581
        %v1598 = vmul.f32 %v1582, %v1582
        %v1599 = vmul.f32 %v1583, %v1583
        %v1600 = vmul.f32 %v1584, %v1584
        %v1601 = vmul.f32 %v1585, %v1585
        %v1602 = vmul.f32 %v1586, %v1586
        %v1603 = vmul.f32 %v1587, %v1587
        %v1604 = vmul.f32 %v1588, %v1588
        %v1605 = vmul.f32 %v1589, %v1589
        %v1606 = vmul.f32 %v1590, %v1590
        %v1607 = vmul.f32 %v1591, %v1591
        %v1608 = vmul.f32 %v1592, %v1592
        %v1609 = vmul.f32 %v1593, %v1593
        %v1610 = vmul.f32 %v1594, %v1594
        %v1611 = vsel %vm860, %v1595, 0.0
        %1612 = vadd.xlane.f32.xlu0 %v1611
        %v1613 = vpop.xlane.xlu0 %1612
        %v1614 = vsel %vm860, %v1596, 0.0
        %1615 = vadd.xlane.f32.xlu0 %v1614
        %v1616 = vpop.xlane.xlu0 %1615
        %v1617 = vsel %vm860, %v1597, 0.0
        %1618 = vadd.xlane.f32.xlu0 %v1617
        %v1619 = vpop.xlane.xlu0 %1618
        %v1620 = vsel %vm860, %v1598, 0.0
        %1621 = vadd.xlane.f32.xlu0 %v1620
        %v1622 = vpop.xlane.xlu0 %1621
        %v1623 = vsel %vm860, %v1599, 0.0
        %1624 = vadd.xlane.f32.xlu0 %v1623
        %v1625 = vpop.xlane.xlu0 %1624
        %v1626 = vsel %vm860, %v1600, 0.0
        %1627 = vadd.xlane.f32.xlu0 %v1626
        %v1628 = vpop.xlane.xlu0 %1627
        %v1629 = vsel %vm860, %v1601, 0.0
        %1630 = vadd.xlane.f32.xlu0 %v1629
        %v1631 = vpop.xlane.xlu0 %1630
        %v1632 = vsel %vm860, %v1602, 0.0
        %1633 = vadd.xlane.f32.xlu0 %v1632
        %v1634 = vpop.xlane.xlu0 %1633
        %v1635 = vsel %vm860, %v1603, 0.0
        %1636 = vadd.xlane.f32.xlu0 %v1635
        %v1637 = vpop.xlane.xlu0 %1636
        %v1638 = vsel %vm860, %v1604, 0.0
        %1639 = vadd.xlane.f32.xlu0 %v1638
        %v1640 = vpop.xlane.xlu0 %1639
        %v1641 = vsel %vm860, %v1605, 0.0
        %1642 = vadd.xlane.f32.xlu0 %v1641
        %v1643 = vpop.xlane.xlu0 %1642
        %v1644 = vsel %vm860, %v1606, 0.0
        %1645 = vadd.xlane.f32.xlu0 %v1644
        %v1646 = vpop.xlane.xlu0 %1645
        %v1647 = vsel %vm860, %v1607, 0.0
        %1648 = vadd.xlane.f32.xlu0 %v1647
        %v1649 = vpop.xlane.xlu0 %1648
        %v1650 = vsel %vm860, %v1608, 0.0
        %1651 = vadd.xlane.f32.xlu0 %v1650
        %v1652 = vpop.xlane.xlu0 %1651
        %v1653 = vsel %vm860, %v1609, 0.0
        %1654 = vadd.xlane.f32.xlu0 %v1653
        %v1655 = vpop.xlane.xlu0 %1654
        %v1656 = vsel %vm860, %v1610, 0.0
        %1657 = vadd.xlane.f32.xlu0 %v1656
        %v1658 = vpop.xlane.xlu0 %1657
        %v1659 = vmul.f32 %v1613, %v1562
        %v1660 = vmul.f32 %v1616, %v1562
        %v1661 = vmul.f32 %v1619, %v1562
        %v1662 = vmul.f32 %v1622, %v1562
        %v1663 = vmul.f32 %v1625, %v1562
        %v1664 = vmul.f32 %v1628, %v1562
        %v1665 = vmul.f32 %v1631, %v1562
        %v1666 = vmul.f32 %v1634, %v1562
        %v1667 = vmul.f32 %v1637, %v1562
        %v1668 = vmul.f32 %v1640, %v1562
        %v1669 = vmul.f32 %v1643, %v1562
        %v1670 = vmul.f32 %v1646, %v1562
        %v1671 = vmul.f32 %v1649, %v1562
        %v1672 = vmul.f32 %v1652, %v1562
        %v1673 = vmul.f32 %v1655, %v1562
        %v1674 = vmul.f32 %v1658, %v1562
        %v1675 = vadd.f32 %v1659, 1e-06
        %v1676 = vadd.f32 %v1660, 1e-06
        %v1677 = vadd.f32 %v1661, 1e-06
        %v1678 = vadd.f32 %v1662, 1e-06
        %v1679 = vadd.f32 %v1663, 1e-06
        %v1680 = vadd.f32 %v1664, 1e-06
        %v1681 = vadd.f32 %v1665, 1e-06
        %v1682 = vadd.f32 %v1666, 1e-06
        %v1683 = vadd.f32 %v1667, 1e-06
        %v1684 = vadd.f32 %v1668, 1e-06
        %v1685 = vadd.f32 %v1669, 1e-06
        %v1686 = vadd.f32 %v1670, 1e-06
        %v1687 = vadd.f32 %v1671, 1e-06
        %v1688 = vadd.f32 %v1672, 1e-06
        %v1689 = vadd.f32 %v1673, 1e-06
        %v1690 = vadd.f32 %v1674, 1e-06
        %v1691 = vrsqrt.pop %v1675
        %v1692 = vrsqrt.pop %v1676
        %v1693 = vrsqrt.pop %v1677
        %v1694 = vrsqrt.pop %v1678
        %v1695 = vrsqrt.pop %v1679
        %v1696 = vrsqrt.pop %v1680
        %v1697 = vrsqrt.pop %v1681
        %v1698 = vrsqrt.pop %v1682
        %v1699 = vrsqrt.pop %v1683
        %v1700 = vrsqrt.pop %v1684
        %v1701 = vrsqrt.pop %v1685
        %v1702 = vrsqrt.pop %v1686
        %v1703 = vrsqrt.pop %v1687
        %v1704 = vrsqrt.pop %v1688
        %v1705 = vrsqrt.pop %v1689
        %v1706 = vrsqrt.pop %v1690
        %v1707 = vmul.f32 %v1579, %v1691
        %v1708 = vmul.f32 %v1580, %v1692
        %v1709 = vmul.f32 %v1581, %v1693
        %v1710 = vmul.f32 %v1582, %v1694
        %v1711 = vmul.f32 %v1583, %v1695
        %v1712 = vmul.f32 %v1584, %v1696
        %v1713 = vmul.f32 %v1585, %v1697
        %v1714 = vmul.f32 %v1586, %v1698
        %v1715 = vmul.f32 %v1587, %v1699
        %v1716 = vmul.f32 %v1588, %v1700
        %v1717 = vmul.f32 %v1589, %v1701
        %v1718 = vmul.f32 %v1590, %v1702
        %v1719 = vmul.f32 %v1591, %v1703
        %v1720 = vmul.f32 %v1592, %v1704
        %v1721 = vmul.f32 %v1593, %v1705
        %v1722 = vmul.f32 %v1594, %v1706
        %v1724 = vlaneseq
        %v1725 = vshrl.u32 %v1724, 7
        %v1726 = vsub.s32 0, %v1725
        %v1727 = vrot.slane %v792, %v1726
        %v1729 = vmul.f32 %v1707, %v1727
        %v1730 = vmul.f32 %v1708, %v1727
        %v1731 = vmul.f32 %v1709, %v1727
        %v1732 = vmul.f32 %v1710, %v1727
        %v1733 = vmul.f32 %v1711, %v1727
        %v1734 = vmul.f32 %v1712, %v1727
        %v1735 = vmul.f32 %v1713, %v1727
        %v1736 = vmul.f32 %v1714, %v1727
        %v1737 = vmul.f32 %v1715, %v1727
        %v1738 = vmul.f32 %v1716, %v1727
        %v1739 = vmul.f32 %v1717, %v1727
        %v1740 = vmul.f32 %v1718, %v1727
        %v1741 = vmul.f32 %v1719, %v1727
        %v1742 = vmul.f32 %v1720, %v1727
        %v1743 = vmul.f32 %v1721, %v1727
        %v1744 = vmul.f32 %v1722, %v1727
        %v1746 = vlaneseq
        %v1747 = vshrl.u32 %v1746, 7
        %v1748 = vsub.s32 0, %v1747
        %v1749 = vrot.slane %v793, %v1748
        %v1751 = vadd.f32 %v1729, %v1749
        %v1752 = vadd.f32 %v1730, %v1749
        %v1753 = vadd.f32 %v1731, %v1749
        %v1754 = vadd.f32 %v1732, %v1749
        %v1755 = vadd.f32 %v1733, %v1749
        %v1756 = vadd.f32 %v1734, %v1749
        %v1757 = vadd.f32 %v1735, %v1749
        %v1758 = vadd.f32 %v1736, %v1749
        %v1759 = vadd.f32 %v1737, %v1749
        %v1760 = vadd.f32 %v1738, %v1749
        %v1761 = vadd.f32 %v1739, %v1749
        %v1762 = vadd.f32 %v1740, %v1749
        %v1763 = vadd.f32 %v1741, %v1749
        %v1764 = vadd.f32 %v1742, %v1749
        %v1765 = vadd.f32 %v1743, %v1749
        %v1766 = vadd.f32 %v1744, %v1749
        %v1767 = vpack.c.bf16 %v1752, %v1751
        %v1768 = vpack.c.bf16 %v1754, %v1753
        %v1769 = vpack.c.bf16 %v1756, %v1755
        %v1770 = vpack.c.bf16 %v1758, %v1757
        %v1771 = vpack.c.bf16 %v1760, %v1759
        %v1772 = vpack.c.bf16 %v1762, %v1761
        %v1773 = vpack.c.bf16 %v1764, %v1763
        %v1774 = vpack.c.bf16 %v1766, %v1765
        %v1776 = vlaneseq
        %v1777 = vshrl.u32 %v1776, 7
        %v1778 = vsub.s32 0, %v1777
        %v1779 = vrot.slane %v798, %v1778
        %v1785 = vunpack.c.l.b16 %v794
        %v1786 = vunpack.c.l.b16 %v795
        %v1787 = vunpack.c.l.b16 %v796
        %v1788 = vunpack.c.l.b16 %v797
        %v1789 = vpack.c.b16 %v1786, %v1785
        %v1790 = vpack.c.b16 %v1788, %v1787
        %v1794 = vsel %vm860, %v1767, 0
        %v1797 = vsel %vm860, %v1768, 0
        %v1800 = vsel %vm860, %v1769, 0
        %v1803 = vsel %vm860, %v1770, 0
        %v1806 = vsel %vm860, %v1771, 0
        %v1809 = vsel %vm860, %v1772, 0
        %v1812 = vsel %vm860, %v1773, 0
        %v1815 = vsel %vm860, %v1774, 0
        %1817 = vmatprep.subr.bf16.mxu0 0
        %1818 = vmatpush1.bf16.msra.mxu0 %v1789
        %1819 = vmatprep.subr.bf16.mxu0 0
        %1820 = vmatpush1.bf16.msra.mxu0 %v1790
        %1821 = vmatprep.subr.bf16.mxu0 0
        %1822 = vmatpush1.bf16.msra.mxu0 0
        %1823 = vmatprep.subr.bf16.mxu0 0
        %1824 = vmatpush1.bf16.msra.mxu0 0
        %1825 = vmatprep.subr.bf16.mxu0 0
        %1826 = vmatpush1.bf16.msra.mxu0 0
        %1827 = vmatprep.subr.bf16.mxu0 0
        %1828 = vmatpush1.bf16.msra.mxu0 0
        %1829 = vmatprep.subr.bf16.mxu0 0
        %1830 = vmatpush1.bf16.msra.mxu0 0
        %1831 = vmatprep.subr.bf16.mxu0 0
        %1832 = vmatpush1.bf16.msra.mxu0 0
        %1833 = vmatprep.subr.bf16.mxu0 0
        %1834 = vmatpush1.bf16.msra.mxu0 0
        %1835 = vmatprep.subr.bf16.mxu0 0
        %1836 = vmatpush1.bf16.msra.mxu0 0
        %1837 = vmatprep.subr.bf16.mxu0 0
        %1838 = vmatpush1.bf16.msra.mxu0 0
        %1839 = vmatprep.subr.bf16.mxu0 0
        %1840 = vmatpush1.bf16.msra.mxu0 0
        %1841 = vmatprep.subr.bf16.mxu0 0
        %1842 = vmatpush1.bf16.msra.mxu0 0
        %1843 = vmatprep.subr.bf16.mxu0 0
        %1844 = vmatpush1.bf16.msra.mxu0 0
        %1845 = vmatprep.subr.bf16.mxu0 0
        %1846 = vmatpush1.bf16.msra.mxu0 0
        %1847 = vmatprep.subr.bf16.mxu0 0
        %1848 = vmatpush1.bf16.msra.mxu0 0
        %1849 = vmatprep.mubr.bf16.mxu0 0
        %1850 = vmatmul.mubr.bf16.gmra.mrb[0].mxu0 %v1794
        %v1851 = vpop.f32.mrb[0].mxu0
        %v1852 = vadd.f32 %v1779, %v1851
        %v1853 = vpop.f32.mrb[0].mxu0
        %v1854 = vpop.f32.mrb[0].mxu0
        %v1855 = vadd.f32 %v1779, %v1854
        %v1856 = vpop.f32.mrb[0].mxu0
        %1857 = vmatprep.mubr.bf16.mxu0 0
        %1858 = vmatmul.mubr.bf16.gmra.mrb[0].mxu0 %v1797
        %v1859 = vpop.f32.mrb[0].mxu0
        %v1860 = vadd.f32 %v1779, %v1859
        %v1861 = vpop.f32.mrb[0].mxu0
        %v1862 = vpop.f32.mrb[0].mxu0
        %v1863 = vadd.f32 %v1779, %v1862
        %v1864 = vpop.f32.mrb[0].mxu0
        %1865 = vmatprep.mubr.bf16.mxu0 0
        %1866 = vmatmul.mubr.bf16.gmra.mrb[0].mxu0 %v1800
        %v1867 = vpop.f32.mrb[0].mxu0
        %v1868 = vadd.f32 %v1779, %v1867
        %v1869 = vpop.f32.mrb[0].mxu0
        %v1870 = vpop.f32.mrb[0].mxu0
        %v1871 = vadd.f32 %v1779, %v1870
        %v1872 = vpop.f32.mrb[0].mxu0
        %1873 = vmatprep.mubr.bf16.mxu0 0
        %1874 = vmatmul.mubr.bf16.gmra.mrb[0].mxu0 %v1803
        %v1875 = vpop.f32.mrb[0].mxu0
        %v1876 = vadd.f32 %v1779, %v1875
        %v1877 = vpop.f32.mrb[0].mxu0
        %v1878 = vpop.f32.mrb[0].mxu0
        %v1879 = vadd.f32 %v1779, %v1878
        %v1880 = vpop.f32.mrb[0].mxu0
        %1881 = vmatprep.mubr.bf16.mxu0 0
        %1882 = vmatmul.mubr.bf16.gmra.mrb[0].mxu0 %v1806
        %v1883 = vpop.f32.mrb[0].mxu0
        %v1884 = vadd.f32 %v1779, %v1883
        %v1885 = vpop.f32.mrb[0].mxu0
        %v1886 = vpop.f32.mrb[0].mxu0
        %v1887 = vadd.f32 %v1779, %v1886
        %v1888 = vpop.f32.mrb[0].mxu0
        %1889 = vmatprep.mubr.bf16.mxu0 0
        %1890 = vmatmul.mubr.bf16.gmra.mrb[0].mxu0 %v1809
        %v1891 = vpop.f32.mrb[0].mxu0
        %v1892 = vadd.f32 %v1779, %v1891
        %v1893 = vpop.f32.mrb[0].mxu0
        %v1894 = vpop.f32.mrb[0].mxu0
        %v1895 = vadd.f32 %v1779, %v1894
        %v1896 = vpop.f32.mrb[0].mxu0
        %1897 = vmatprep.mubr.bf16.mxu0 0
        %1898 = vmatmul.mubr.bf16.gmra.mrb[0].mxu0 %v1812
        %v1899 = vpop.f32.mrb[0].mxu0
        %v1900 = vadd.f32 %v1779, %v1899
        %v1901 = vpop.f32.mrb[0].mxu0
        %v1902 = vpop.f32.mrb[0].mxu0
        %v1903 = vadd.f32 %v1779, %v1902
        %v1904 = vpop.f32.mrb[0].mxu0
        %1905 = vmatprep.mubr.bf16.mxu0 0
        %1906 = vmatmul.mubr.bf16.gmra.mrb[0].mxu0 %v1815
        %v1907 = vpop.f32.mrb[0].mxu0
        %v1908 = vadd.f32 %v1779, %v1907
        %v1909 = vpop.f32.mrb[0].mxu0
        %v1910 = vpop.f32.mrb[0].mxu0
        %v1911 = vadd.f32 %v1779, %v1910
        %v1912 = vpop.f32.mrb[0].mxu0
        %1913 = vdwg.mxu0
        %v1914 = vmax.f32 %v1852, 0.0
        %v1915 = vmax.f32 %v1855, 0.0
        %v1916 = vmax.f32 %v1860, 0.0
        %v1917 = vmax.f32 %v1863, 0.0
        %v1918 = vmax.f32 %v1868, 0.0
        %v1919 = vmax.f32 %v1871, 0.0
        %v1920 = vmax.f32 %v1876, 0.0
        %v1921 = vmax.f32 %v1879, 0.0
        %v1922 = vmax.f32 %v1884, 0.0
        %v1923 = vmax.f32 %v1887, 0.0
        %v1924 = vmax.f32 %v1892, 0.0
        %v1925 = vmax.f32 %v1895, 0.0
        %v1926 = vmax.f32 %v1900, 0.0
        %v1927 = vmax.f32 %v1903, 0.0
        %v1928 = vmax.f32 %v1908, 0.0
        %v1929 = vmax.f32 %v1911, 0.0
        %v1930 = vpack.c.bf16 %v1915, %v1914
        %v1931 = vpack.c.bf16 %v1917, %v1916
        %v1932 = vpack.c.bf16 %v1919, %v1918
        %v1933 = vpack.c.bf16 %v1921, %v1920
        %v1934 = vpack.c.bf16 %v1923, %v1922
        %v1935 = vpack.c.bf16 %v1925, %v1924
        %v1936 = vpack.c.bf16 %v1927, %v1926
        %v1937 = vpack.c.bf16 %v1929, %v1928
        %v1939 = vlaneseq
        %v1940 = vshrl.u32 %v1939, 7
        %v1941 = vsub.s32 0, %v1940
        %v1942 = vrot.slane %v807, %v1941
        %v1952 = vunpack.c.l.b16 %v799
        %v1953 = vunpack.c.l.b16 %v800
        %v1954 = vunpack.c.l.b16 %v801
        %v1955 = vunpack.c.l.b16 %v802
        %v1956 = vunpack.c.l.b16 %v803
        %v1957 = vunpack.c.l.b16 %v804
        %v1958 = vunpack.c.l.b16 %v805
        %v1959 = vunpack.c.l.b16 %v806
        %v1960 = vpack.c.b16 %v1953, %v1952
        %v1961 = vpack.c.b16 %v1955, %v1954
        %v1962 = vpack.c.b16 %v1957, %v1956
        %v1963 = vpack.c.b16 %v1959, %v1958
        %vm1968 = vcmask 523264
        %v1970 = vsel %vm1968, %v1930, 0
        %v1973 = vsel %vm1968, %v1931, 0
        %v1976 = vsel %vm1968, %v1932, 0
        %v1979 = vsel %vm1968, %v1933, 0
        %v1982 = vsel %vm1968, %v1934, 0
        %v1985 = vsel %vm1968, %v1935, 0
        %v1988 = vsel %vm1968, %v1936, 0
        %v1991 = vsel %vm1968, %v1937, 0
        %1993 = vmatprep.subr.bf16.mxu0 0
        %1994 = vmatpush1.bf16.msra.mxu0 %v1960
        %1995 = vmatprep.subr.bf16.mxu0 0
        %1996 = vmatpush1.bf16.msra.mxu0 %v1961
        %1997 = vmatprep.subr.bf16.mxu0 0
        %1998 = vmatpush1.bf16.msra.mxu0 %v1962
        %1999 = vmatprep.subr.bf16.mxu0 0
        %2000 = vmatpush1.bf16.msra.mxu0 %v1963
        %2001 = vmatprep.subr.bf16.mxu0 0
        %2002 = vmatpush1.bf16.msra.mxu0 0
        %2003 = vmatprep.subr.bf16.mxu0 0
        %2004 = vmatpush1.bf16.msra.mxu0 0
        %2005 = vmatprep.subr.bf16.mxu0 0
        %2006 = vmatpush1.bf16.msra.mxu0 0
        %2007 = vmatprep.subr.bf16.mxu0 0
        %2008 = vmatpush1.bf16.msra.mxu0 0
        %2009 = vmatprep.subr.bf16.mxu0 0
        %2010 = vmatpush1.bf16.msra.mxu0 0
        %2011 = vmatprep.subr.bf16.mxu0 0
        %2012 = vmatpush1.bf16.msra.mxu0 0
        %2013 = vmatprep.subr.bf16.mxu0 0
        %2014 = vmatpush1.bf16.msra.mxu0 0
        %2015 = vmatprep.subr.bf16.mxu0 0
        %2016 = vmatpush1.bf16.msra.mxu0 0
        %2017 = vmatprep.subr.bf16.mxu0 0
        %2018 = vmatpush1.bf16.msra.mxu0 0
        %2019 = vmatprep.subr.bf16.mxu0 0
        %2020 = vmatpush1.bf16.msra.mxu0 0
        %2021 = vmatprep.subr.bf16.mxu0 0
        %2022 = vmatpush1.bf16.msra.mxu0 0
        %2023 = vmatprep.subr.bf16.mxu0 0
        %2024 = vmatpush1.bf16.msra.mxu0 0
        %2025 = vmatprep.mubr.bf16.mxu0 0
        %2026 = vmatmul.mubr.bf16.gmra.mrb[0].mxu0 %v1970
        %v2027 = vpop.f32.mrb[0].mxu0
        %v2028 = vadd.f32 %v1942, %v2027
        %v2029 = vpop.f32.mrb[0].mxu0
        %v2030 = vpop.f32.mrb[0].mxu0
        %v2031 = vadd.f32 %v1942, %v2030
        %v2032 = vpop.f32.mrb[0].mxu0
        %2033 = vmatprep.mubr.bf16.mxu0 0
        %2034 = vmatmul.mubr.bf16.gmra.mrb[0].mxu0 %v1973
        %v2035 = vpop.f32.mrb[0].mxu0
        %v2036 = vadd.f32 %v1942, %v2035
        %v2037 = vpop.f32.mrb[0].mxu0
        %v2038 = vpop.f32.mrb[0].mxu0
        %v2039 = vadd.f32 %v1942, %v2038
        %v2040 = vpop.f32.mrb[0].mxu0
        %2041 = vmatprep.mubr.bf16.mxu0 0
        %2042 = vmatmul.mubr.bf16.gmra.mrb[0].mxu0 %v1976
        %v2043 = vpop.f32.mrb[0].mxu0
        %v2044 = vadd.f32 %v1942, %v2043
        %v2045 = vpop.f32.mrb[0].mxu0
        %v2046 = vpop.f32.mrb[0].mxu0
        %v2047 = vadd.f32 %v1942, %v2046
        %v2048 = vpop.f32.mrb[0].mxu0
        %2049 = vmatprep.mubr.bf16.mxu0 0
        %2050 = vmatmul.mubr.bf16.gmra.mrb[0].mxu0 %v1979
        %v2051 = vpop.f32.mrb[0].mxu0
        %v2052 = vadd.f32 %v1942, %v2051
        %v2053 = vpop.f32.mrb[0].mxu0
        %v2054 = vpop.f32.mrb[0].mxu0
        %v2055 = vadd.f32 %v1942, %v2054
        %v2056 = vpop.f32.mrb[0].mxu0
        %2057 = vmatprep.mubr.bf16.mxu0 0
        %2058 = vmatmul.mubr.bf16.gmra.mrb[0].mxu0 %v1982
        %v2059 = vpop.f32.mrb[0].mxu0
        %v2060 = vadd.f32 %v1942, %v2059
        %v2061 = vpop.f32.mrb[0].mxu0
        %v2062 = vpop.f32.mrb[0].mxu0
        %v2063 = vadd.f32 %v1942, %v2062
        %v2064 = vpop.f32.mrb[0].mxu0
        %2065 = vmatprep.mubr.bf16.mxu0 0
        %2066 = vmatmul.mubr.bf16.gmra.mrb[0].mxu0 %v1985
        %v2067 = vpop.f32.mrb[0].mxu0
        %v2068 = vadd.f32 %v1942, %v2067
        %v2069 = vpop.f32.mrb[0].mxu0
        %v2070 = vpop.f32.mrb[0].mxu0
        %v2071 = vadd.f32 %v1942, %v2070
        %v2072 = vpop.f32.mrb[0].mxu0
        %2073 = vmatprep.mubr.bf16.mxu0 0
        %2074 = vmatmul.mubr.bf16.gmra.mrb[0].mxu0 %v1988
        %v2075 = vpop.f32.mrb[0].mxu0
        %v2076 = vadd.f32 %v1942, %v2075
        %v2077 = vpop.f32.mrb[0].mxu0
        %v2078 = vpop.f32.mrb[0].mxu0
        %v2079 = vadd.f32 %v1942, %v2078
        %v2080 = vpop.f32.mrb[0].mxu0
        %2081 = vmatprep.mubr.bf16.mxu0 0
        %2082 = vmatmul.mubr.bf16.gmra.mrb[0].mxu0 %v1991
        %v2083 = vpop.f32.mrb[0].mxu0
        %v2084 = vadd.f32 %v1942, %v2083
        %v2085 = vpop.f32.mrb[0].mxu0
        %v2086 = vpop.f32.mrb[0].mxu0
        %v2087 = vadd.f32 %v1942, %v2086
        %v2088 = vpop.f32.mrb[0].mxu0
        %2089 = vdwg.mxu0
        %v2090 = vadd.f32 %v987, %v2028
        %v2091 = vadd.f32 %v988, %v2031
        %v2092 = vadd.f32 %v989, %v2036
        %v2093 = vadd.f32 %v990, %v2039
        %v2094 = vadd.f32 %v991, %v2044
        %v2095 = vadd.f32 %v992, %v2047
        %v2096 = vadd.f32 %v993, %v2052
        %v2097 = vadd.f32 %v994, %v2055
        %v2098 = vadd.f32 %v995, %v2060
        %v2099 = vadd.f32 %v996, %v2063
        %v2100 = vadd.f32 %v997, %v2068
        %v2101 = vadd.f32 %v998, %v2071
        %v2102 = vadd.f32 %v999, %v2076
        %v2103 = vadd.f32 %v1000, %v2079
        %v2104 = vadd.f32 %v1001, %v2084
        %v2105 = vadd.f32 %v1002, %v2087
        %2107 = vset.pattern.permute.xlu0 0
        %2108 = vperm.xlu0 %2107, %v1498
        %v2109 = vpop.permute.xlu0 %2108
        %2112 = vset.pattern.permute.xlu0 0
        %2113 = vperm.xlu0 %2112, %v1499
        %v2114 = vpop.permute.xlu0 %2113
        %2117 = vset.pattern.permute.xlu0 0
        %2118 = vperm.xlu0 %2117, %v1500
        %v2119 = vpop.permute.xlu0 %2118
        %2122 = vset.pattern.permute.xlu0 0
        %2123 = vperm.xlu0 %2122, %v1501
        %v2124 = vpop.permute.xlu0 %2123
        %2127 = vset.pattern.permute.xlu0 0
        %2128 = vperm.xlu0 %2127, %v1502
        %v2129 = vpop.permute.xlu0 %2128
        %2132 = vset.pattern.permute.xlu0 0
        %2133 = vperm.xlu0 %2132, %v1503
        %v2134 = vpop.permute.xlu0 %2133
        %2137 = vset.pattern.permute.xlu0 0
        %2138 = vperm.xlu0 %2137, %v1504
        %v2139 = vpop.permute.xlu0 %2138
        %2142 = vset.pattern.permute.xlu0 0
        %2143 = vperm.xlu0 %2142, %v1505
        %v2144 = vpop.permute.xlu0 %2143
        %2147 = vset.pattern.permute.xlu0 0
        %2148 = vperm.xlu0 %2147, %v1506
        %v2149 = vpop.permute.xlu0 %2148
        %2152 = vset.pattern.permute.xlu0 0
        %2153 = vperm.xlu0 %2152, %v1507
        %v2154 = vpop.permute.xlu0 %2153
        %2157 = vset.pattern.permute.xlu0 0
        %2158 = vperm.xlu0 %2157, %v1508
        %v2159 = vpop.permute.xlu0 %2158
        %2162 = vset.pattern.permute.xlu0 0
        %2163 = vperm.xlu0 %2162, %v1509
        %v2164 = vpop.permute.xlu0 %2163
        %2167 = vset.pattern.permute.xlu0 0
        %2168 = vperm.xlu0 %2167, %v1510
        %v2169 = vpop.permute.xlu0 %2168
        %2172 = vset.pattern.permute.xlu0 0
        %2173 = vperm.xlu0 %2172, %v1511
        %v2174 = vpop.permute.xlu0 %2173
        %2177 = vset.pattern.permute.xlu0 0
        %2178 = vperm.xlu0 %2177, %v1512
        %v2179 = vpop.permute.xlu0 %2178
        %2182 = vset.pattern.permute.xlu0 0
        %2183 = vperm.xlu0 %2182, %v1513
        %v2184 = vpop.permute.xlu0 %2183
        %v2186 = vmul.f32 %v2090, %v2109
        %v2187 = vmul.f32 %v2091, %v2114
        %v2188 = vmul.f32 %v2092, %v2119
        %v2189 = vmul.f32 %v2093, %v2124
        %v2190 = vmul.f32 %v2094, %v2129
        %v2191 = vmul.f32 %v2095, %v2134
        %v2192 = vmul.f32 %v2096, %v2139
        %v2193 = vmul.f32 %v2097, %v2144
        %v2194 = vmul.f32 %v2098, %v2149
        %v2195 = vmul.f32 %v2099, %v2154
        %v2196 = vmul.f32 %v2100, %v2159
        %v2197 = vmul.f32 %v2101, %v2164
        %v2198 = vmul.f32 %v2102, %v2169
        %v2199 = vmul.f32 %v2103, %v2174
        %v2200 = vmul.f32 %v2104, %v2179
        %v2201 = vmul.f32 %v2105, %v2184
        %v2202 = vsub.f32 1.0, %v1498
        %v2203 = vsub.f32 1.0, %v1499
        %v2204 = vsub.f32 1.0, %v1500
        %v2205 = vsub.f32 1.0, %v1501
        %v2206 = vsub.f32 1.0, %v1502
        %v2207 = vsub.f32 1.0, %v1503
        %v2208 = vsub.f32 1.0, %v1504
        %v2209 = vsub.f32 1.0, %v1505
        %v2210 = vsub.f32 1.0, %v1506
        %v2211 = vsub.f32 1.0, %v1507
        %v2212 = vsub.f32 1.0, %v1508
        %v2213 = vsub.f32 1.0, %v1509
        %v2214 = vsub.f32 1.0, %v1510
        %v2215 = vsub.f32 1.0, %v1511
        %v2216 = vsub.f32 1.0, %v1512
        %v2217 = vsub.f32 1.0, %v1513
        %2219 = vset.pattern.permute.xlu0 0
        %2220 = vperm.xlu0 %2219, %v2202
        %v2221 = vpop.permute.xlu0 %2220
        %2224 = vset.pattern.permute.xlu0 0
        %2225 = vperm.xlu0 %2224, %v2203
        %v2226 = vpop.permute.xlu0 %2225
        %2229 = vset.pattern.permute.xlu0 0
        %2230 = vperm.xlu0 %2229, %v2204
        %v2231 = vpop.permute.xlu0 %2230
        %2234 = vset.pattern.permute.xlu0 0
        %2235 = vperm.xlu0 %2234, %v2205
        %v2236 = vpop.permute.xlu0 %2235
        %2239 = vset.pattern.permute.xlu0 0
        %2240 = vperm.xlu0 %2239, %v2206
        %v2241 = vpop.permute.xlu0 %2240
        %2244 = vset.pattern.permute.xlu0 0
        %2245 = vperm.xlu0 %2244, %v2207
        %v2246 = vpop.permute.xlu0 %2245
        %2249 = vset.pattern.permute.xlu0 0
        %2250 = vperm.xlu0 %2249, %v2208
        %v2251 = vpop.permute.xlu0 %2250
        %2254 = vset.pattern.permute.xlu0 0
        %2255 = vperm.xlu0 %2254, %v2209
        %v2256 = vpop.permute.xlu0 %2255
        %2259 = vset.pattern.permute.xlu0 0
        %2260 = vperm.xlu0 %2259, %v2210
        %v2261 = vpop.permute.xlu0 %2260
        %2264 = vset.pattern.permute.xlu0 0
        %2265 = vperm.xlu0 %2264, %v2211
        %v2266 = vpop.permute.xlu0 %2265
        %2269 = vset.pattern.permute.xlu0 0
        %2270 = vperm.xlu0 %2269, %v2212
        %v2271 = vpop.permute.xlu0 %2270
        %2274 = vset.pattern.permute.xlu0 0
        %2275 = vperm.xlu0 %2274, %v2213
        %v2276 = vpop.permute.xlu0 %2275
        %2279 = vset.pattern.permute.xlu0 0
        %2280 = vperm.xlu0 %2279, %v2214
        %v2281 = vpop.permute.xlu0 %2280
        %2284 = vset.pattern.permute.xlu0 0
        %2285 = vperm.xlu0 %2284, %v2215
        %v2286 = vpop.permute.xlu0 %2285
        %2289 = vset.pattern.permute.xlu0 0
        %2290 = vperm.xlu0 %2289, %v2216
        %v2291 = vpop.permute.xlu0 %2290
        %2294 = vset.pattern.permute.xlu0 0
        %2295 = vperm.xlu0 %2294, %v2217
        %v2296 = vpop.permute.xlu0 %2295
        %v2298 = vmul.f32 %v2221, 0.0
        %v2299 = vmul.f32 %v2226, 0.0
        %v2300 = vmul.f32 %v2231, 0.0
        %v2301 = vmul.f32 %v2236, 0.0
        %v2302 = vmul.f32 %v2241, 0.0
        %v2303 = vmul.f32 %v2246, 0.0
        %v2304 = vmul.f32 %v2251, 0.0
        %v2305 = vmul.f32 %v2256, 0.0
        %v2306 = vmul.f32 %v2261, 0.0
        %v2307 = vmul.f32 %v2266, 0.0
        %v2308 = vmul.f32 %v2271, 0.0
        %v2309 = vmul.f32 %v2276, 0.0
        %v2310 = vmul.f32 %v2281, 0.0
        %v2311 = vmul.f32 %v2286, 0.0
        %v2312 = vmul.f32 %v2291, 0.0
        %v2313 = vmul.f32 %v2296, 0.0
        %v2314 = vadd.f32 %v2186, %v2298
        %v2315 = vadd.f32 %v2187, %v2299
        %v2316 = vadd.f32 %v2188, %v2300
        %v2317 = vadd.f32 %v2189, %v2301
        %v2318 = vadd.f32 %v2190, %v2302
        %v2319 = vadd.f32 %v2191, %v2303
        %v2320 = vadd.f32 %v2192, %v2304
        %v2321 = vadd.f32 %v2193, %v2305
        %v2322 = vadd.f32 %v2194, %v2306
        %v2323 = vadd.f32 %v2195, %v2307
        %v2324 = vadd.f32 %v2196, %v2308
        %v2325 = vadd.f32 %v2197, %v2309
        %v2326 = vadd.f32 %v2198, %v2310
        %v2327 = vadd.f32 %v2199, %v2311
        %v2328 = vadd.f32 %v2200, %v2312
        %v2329 = vadd.f32 %v2201, %v2313
        %v2330 = vadd.f32 %v2090, %v774
        %v2331 = vadd.f32 %v2091, %v775
        %v2332 = vadd.f32 %v2092, %v776
        %v2333 = vadd.f32 %v2093, %v777
        %v2334 = vadd.f32 %v2094, %v778
        %v2335 = vadd.f32 %v2095, %v779
        %v2336 = vadd.f32 %v2096, %v780
        %v2337 = vadd.f32 %v2097, %v781
        %v2338 = vadd.f32 %v2098, %v782
        %v2339 = vadd.f32 %v2099, %v783
        %v2340 = vadd.f32 %v2100, %v784
        %v2341 = vadd.f32 %v2101, %v785
        %v2342 = vadd.f32 %v2102, %v786
        %v2343 = vadd.f32 %v2103, %v787
        %v2344 = vadd.f32 %v2104, %v788
        %v2345 = vadd.f32 %v2105, %v789
        %v2346 = vld [vmem:[#allocation9 + $0x1] sm:$0x1]
        %v2347 = vlaneseq
        %v2348 = vshrl.u32 %v2347, 7
        %v2349 = vsub.s32 0, %v2348
        %v2350 = vrot.slane %v2346, %v2349
        %v2351 = vadd.f32 %v2330, %v2350
        %v2352 = vadd.f32 %v2331, %v2350
        %v2353 = vadd.f32 %v2332, %v2350
        %v2354 = vadd.f32 %v2333, %v2350
        %v2355 = vadd.f32 %v2334, %v2350
        %v2356 = vadd.f32 %v2335, %v2350
        %v2357 = vadd.f32 %v2336, %v2350
        %v2358 = vadd.f32 %v2337, %v2350
        %v2359 = vadd.f32 %v2338, %v2350
        %v2360 = vadd.f32 %v2339, %v2350
        %v2361 = vadd.f32 %v2340, %v2350
        %v2362 = vadd.f32 %v2341, %v2350
        %v2363 = vadd.f32 %v2342, %v2350
        %v2364 = vadd.f32 %v2343, %v2350
        %v2365 = vadd.f32 %v2344, %v2350
        %v2366 = vadd.f32 %v2345, %v2350
        %v2367 = vmul.f32 %v2351, %v1007
        %v2368 = vmul.f32 %v2352, %v1007
        %v2369 = vmul.f32 %v2353, %v1007
        %v2370 = vmul.f32 %v2354, %v1007
        %v2371 = vmul.f32 %v2355, %v1007
        %v2372 = vmul.f32 %v2356, %v1007
        %v2373 = vmul.f32 %v2357, %v1007
        %v2374 = vmul.f32 %v2358, %v1007
        %v2375 = vmul.f32 %v2359, %v1007
        %v2376 = vmul.f32 %v2360, %v1007
        %v2377 = vmul.f32 %v2361, %v1007
        %v2378 = vmul.f32 %v2362, %v1007
        %v2379 = vmul.f32 %v2363, %v1007
        %v2380 = vmul.f32 %v2364, %v1007
        %v2381 = vmul.f32 %v2365, %v1007
        %v2382 = vmul.f32 %v2366, %v1007
        %v2383 = vsel %vm860, %v2367, 0.0
        %2384 = vadd.xlane.f32.xlu0 %v2383
        %v2385 = vpop.xlane.xlu0 %2384
        %v2386 = vsel %vm860, %v2368, 0.0
        %2387 = vadd.xlane.f32.xlu0 %v2386
        %v2388 = vpop.xlane.xlu0 %2387
        %v2389 = vsel %vm860, %v2369, 0.0
        %2390 = vadd.xlane.f32.xlu0 %v2389
        %v2391 = vpop.xlane.xlu0 %2390
        %v2392 = vsel %vm860, %v2370, 0.0
        %2393 = vadd.xlane.f32.xlu0 %v2392
        %v2394 = vpop.xlane.xlu0 %2393
        %v2395 = vsel %vm860, %v2371, 0.0
        %2396 = vadd.xlane.f32.xlu0 %v2395
        %v2397 = vpop.xlane.xlu0 %2396
        %v2398 = vsel %vm860, %v2372, 0.0
        %2399 = vadd.xlane.f32.xlu0 %v2398
        %v2400 = vpop.xlane.xlu0 %2399
        %v2401 = vsel %vm860, %v2373, 0.0
        %2402 = vadd.xlane.f32.xlu0 %v2401
        %v2403 = vpop.xlane.xlu0 %2402
        %v2404 = vsel %vm860, %v2374, 0.0
        %2405 = vadd.xlane.f32.xlu0 %v2404
        %v2406 = vpop.xlane.xlu0 %2405
        %v2407 = vsel %vm860, %v2375, 0.0
        %2408 = vadd.xlane.f32.xlu0 %v2407
        %v2409 = vpop.xlane.xlu0 %2408
        %v2410 = vsel %vm860, %v2376, 0.0
        %2411 = vadd.xlane.f32.xlu0 %v2410
        %v2412 = vpop.xlane.xlu0 %2411
        %v2413 = vsel %vm860, %v2377, 0.0
        %2414 = vadd.xlane.f32.xlu0 %v2413
        %v2415 = vpop.xlane.xlu0 %2414
        %v2416 = vsel %vm860, %v2378, 0.0
        %2417 = vadd.xlane.f32.xlu0 %v2416
        %v2418 = vpop.xlane.xlu0 %2417
        %v2419 = vsel %vm860, %v2379, 0.0
        %2420 = vadd.xlane.f32.xlu0 %v2419
        %v2421 = vpop.xlane.xlu0 %2420
        %v2422 = vsel %vm860, %v2380, 0.0
        %2423 = vadd.xlane.f32.xlu0 %v2422
        %v2424 = vpop.xlane.xlu0 %2423
        %v2425 = vsel %vm860, %v2381, 0.0
        %2426 = vadd.xlane.f32.xlu0 %v2425
        %v2427 = vpop.xlane.xlu0 %2426
        %v2428 = vsel %vm860, %v2382, 0.0
        %2429 = vadd.xlane.f32.xlu0 %v2428
        %v2430 = vpop.xlane.xlu0 %2429
        %v2431 = vadd.f32 %v2385, %v1077
        %v2432 = vadd.f32 %v2388, %v1077
        %v2433 = vadd.f32 %v2391, %v1077
        %v2434 = vadd.f32 %v2394, %v1077
        %v2435 = vadd.f32 %v2397, %v1077
        %v2436 = vadd.f32 %v2400, %v1077
        %v2437 = vadd.f32 %v2403, %v1077
        %v2438 = vadd.f32 %v2406, %v1077
        %v2439 = vadd.f32 %v2409, %v1077
        %v2440 = vadd.f32 %v2412, %v1077
        %v2441 = vadd.f32 %v2415, %v1077
        %v2442 = vadd.f32 %v2418, %v1077
        %v2443 = vadd.f32 %v2421, %v1077
        %v2444 = vadd.f32 %v2424, %v1077
        %v2445 = vadd.f32 %v2427, %v1077
        %v2446 = vadd.f32 %v2430, %v1077
        %v2447 = vxor.u32 %v2431, 2147483648
        %v2448 = vxor.u32 %v2432, 2147483648
        %v2449 = vxor.u32 %v2433, 2147483648
        %v2450 = vxor.u32 %v2434, 2147483648
        %v2451 = vxor.u32 %v2435, 2147483648
        %v2452 = vxor.u32 %v2436, 2147483648
        %v2453 = vxor.u32 %v2437, 2147483648
        %v2454 = vxor.u32 %v2438, 2147483648
        %v2455 = vxor.u32 %v2439, 2147483648
        %v2456 = vxor.u32 %v2440, 2147483648
        %v2457 = vxor.u32 %v2441, 2147483648
        %v2458 = vxor.u32 %v2442, 2147483648
        %v2459 = vxor.u32 %v2443, 2147483648
        %v2460 = vxor.u32 %v2444, 2147483648
        %v2461 = vxor.u32 %v2445, 2147483648
        %v2462 = vxor.u32 %v2446, 2147483648
        %v2463 = vmul.f32 %v2447, 1.442695
        %v2464 = vpow.pop %v2463
        %v2465 = vmul.f32 %v2448, 1.442695
        %v2466 = vpow.pop %v2465
        %v2467 = vmul.f32 %v2449, 1.442695
        %v2468 = vpow.pop %v2467
        %v2469 = vmul.f32 %v2450, 1.442695
        %v2470 = vpow.pop %v2469
        %v2471 = vmul.f32 %v2451, 1.442695
        %v2472 = vpow.pop %v2471
        %v2473 = vmul.f32 %v2452, 1.442695
        %v2474 = vpow.pop %v2473
        %v2475 = vmul.f32 %v2453, 1.442695
        %v2476 = vpow.pop %v2475
        %v2477 = vmul.f32 %v2454, 1.442695
        %v2478 = vpow.pop %v2477
        %v2479 = vmul.f32 %v2455, 1.442695
        %v2480 = vpow.pop %v2479
        %v2481 = vmul.f32 %v2456, 1.442695
        %v2482 = vpow.pop %v2481
        %v2483 = vmul.f32 %v2457, 1.442695
        %v2484 = vpow.pop %v2483
        %v2485 = vmul.f32 %v2458, 1.442695
        %v2486 = vpow.pop %v2485
        %v2487 = vmul.f32 %v2459, 1.442695
        %v2488 = vpow.pop %v2487
        %v2489 = vmul.f32 %v2460, 1.442695
        %v2490 = vpow.pop %v2489
        %v2491 = vmul.f32 %v2461, 1.442695
        %v2492 = vpow.pop %v2491
        %v2493 = vmul.f32 %v2462, 1.442695
        %v2494 = vpow.pop %v2493
        %v2495 = vadd.f32 %v2464, 1.0
        %v2496 = vadd.f32 %v2466, 1.0
        %v2497 = vadd.f32 %v2468, 1.0
        %v2498 = vadd.f32 %v2470, 1.0
        %v2499 = vadd.f32 %v2472, 1.0
        %v2500 = vadd.f32 %v2474, 1.0
        %v2501 = vadd.f32 %v2476, 1.0
        %v2502 = vadd.f32 %v2478, 1.0
        %v2503 = vadd.f32 %v2480, 1.0
        %v2504 = vadd.f32 %v2482, 1.0
        %v2505 = vadd.f32 %v2484, 1.0
        %v2506 = vadd.f32 %v2486, 1.0
        %v2507 = vadd.f32 %v2488, 1.0
        %v2508 = vadd.f32 %v2490, 1.0
        %v2509 = vadd.f32 %v2492, 1.0
        %v2510 = vadd.f32 %v2494, 1.0
        %v2511 = vrcp.pop %v2495
        %v2512 = vmul.f32 1.0, %v2511
        %v2513 = vrcp.pop %v2496
        %v2514 = vmul.f32 1.0, %v2513
        %v2515 = vrcp.pop %v2497
        %v2516 = vmul.f32 1.0, %v2515
        %v2517 = vrcp.pop %v2498
        %v2518 = vmul.f32 1.0, %v2517
        %v2519 = vrcp.pop %v2499
        %v2520 = vmul.f32 1.0, %v2519
        %v2521 = vrcp.pop %v2500
        %v2522 = vmul.f32 1.0, %v2521
        %v2523 = vrcp.pop %v2501
        %v2524 = vmul.f32 1.0, %v2523
        %v2525 = vrcp.pop %v2502
        %v2526 = vmul.f32 1.0, %v2525
        %v2527 = vrcp.pop %v2503
        %v2528 = vmul.f32 1.0, %v2527
        %v2529 = vrcp.pop %v2504
        %v2530 = vmul.f32 1.0, %v2529
        %v2531 = vrcp.pop %v2505
        %v2532 = vmul.f32 1.0, %v2531
        %v2533 = vrcp.pop %v2506
        %v2534 = vmul.f32 1.0, %v2533
        %v2535 = vrcp.pop %v2507
        %v2536 = vmul.f32 1.0, %v2535
        %v2537 = vrcp.pop %v2508
        %v2538 = vmul.f32 1.0, %v2537
        %v2539 = vrcp.pop %v2509
        %v2540 = vmul.f32 1.0, %v2539
        %v2541 = vrcp.pop %v2510
        %v2542 = vmul.f32 1.0, %v2541
        %vm2543 = vcmp.lt.f32.partialorder %v1450, 1.0
        %vm2544 = vcmp.lt.f32.partialorder %v1451, 1.0
        %vm2545 = vcmp.lt.f32.partialorder %v1452, 1.0
        %vm2546 = vcmp.lt.f32.partialorder %v1453, 1.0
        %vm2547 = vcmp.lt.f32.partialorder %v1454, 1.0
        %vm2548 = vcmp.lt.f32.partialorder %v1455, 1.0
        %vm2549 = vcmp.lt.f32.partialorder %v1456, 1.0
        %vm2550 = vcmp.lt.f32.partialorder %v1457, 1.0
        %vm2551 = vcmp.lt.f32.partialorder %v1458, 1.0
        %vm2552 = vcmp.lt.f32.partialorder %v1459, 1.0
        %vm2553 = vcmp.lt.f32.partialorder %v1460, 1.0
        %vm2554 = vcmp.lt.f32.partialorder %v1461, 1.0
        %vm2555 = vcmp.lt.f32.partialorder %v1462, 1.0
        %vm2556 = vcmp.lt.f32.partialorder %v1463, 1.0
        %vm2557 = vcmp.lt.f32.partialorder %v1464, 1.0
        %vm2558 = vcmp.lt.f32.partialorder %v1465, 1.0
        %v2559 = vsel %vm2543, 1, 0
        %v2560 = vsel %vm2544, 1, 0
        %v2561 = vsel %vm2545, 1, 0
        %v2562 = vsel %vm2546, 1, 0
        %v2563 = vsel %vm2547, 1, 0
        %v2564 = vsel %vm2548, 1, 0
        %v2565 = vsel %vm2549, 1, 0
        %v2566 = vsel %vm2550, 1, 0
        %v2567 = vsel %vm2551, 1, 0
        %v2568 = vsel %vm2552, 1, 0
        %v2569 = vsel %vm2553, 1, 0
        %v2570 = vsel %vm2554, 1, 0
        %v2571 = vsel %vm2555, 1, 0
        %v2572 = vsel %vm2556, 1, 0
        %v2573 = vsel %vm2557, 1, 0
        %v2574 = vsel %vm2558, 1, 0
        %v2575 = vcvt.s32.f32 %v2559
        %v2576 = vcvt.s32.f32 %v2560
        %v2577 = vcvt.s32.f32 %v2561
        %v2578 = vcvt.s32.f32 %v2562
        %v2579 = vcvt.s32.f32 %v2563
        %v2580 = vcvt.s32.f32 %v2564
        %v2581 = vcvt.s32.f32 %v2565
        %v2582 = vcvt.s32.f32 %v2566
        %v2583 = vcvt.s32.f32 %v2567
        %v2584 = vcvt.s32.f32 %v2568
        %v2585 = vcvt.s32.f32 %v2569
        %v2586 = vcvt.s32.f32 %v2570
        %v2587 = vcvt.s32.f32 %v2571
        %v2588 = vcvt.s32.f32 %v2572
        %v2589 = vcvt.s32.f32 %v2573
        %v2590 = vcvt.s32.f32 %v2574
        %v2591 = vmul.f32 %v2512, %v2575
        %v2592 = vmul.f32 %v2514, %v2576
        %v2593 = vmul.f32 %v2516, %v2577
        %v2594 = vmul.f32 %v2518, %v2578
        %v2595 = vmul.f32 %v2520, %v2579
        %v2596 = vmul.f32 %v2522, %v2580
        %v2597 = vmul.f32 %v2524, %v2581
        %v2598 = vmul.f32 %v2526, %v2582
        %v2599 = vmul.f32 %v2528, %v2583
        %v2600 = vmul.f32 %v2530, %v2584
        %v2601 = vmul.f32 %v2532, %v2585
        %v2602 = vmul.f32 %v2534, %v2586
        %v2603 = vmul.f32 %v2536, %v2587
        %v2604 = vmul.f32 %v2538, %v2588
        %v2605 = vmul.f32 %v2540, %v2589
        %v2606 = vmul.f32 %v2542, %v2590
        %v2607 = vadd.f32 %v1450, %v2591
        %v2608 = vadd.f32 %v1451, %v2592
        %v2609 = vadd.f32 %v1452, %v2593
        %v2610 = vadd.f32 %v1453, %v2594
        %v2611 = vadd.f32 %v1454, %v2595
        %v2612 = vadd.f32 %v1455, %v2596
        %v2613 = vadd.f32 %v1456, %v2597
        %v2614 = vadd.f32 %v1457, %v2598
        %v2615 = vadd.f32 %v1458, %v2599
        %v2616 = vadd.f32 %v1459, %v2600
        %v2617 = vadd.f32 %v1460, %v2601
        %v2618 = vadd.f32 %v1461, %v2602
        %v2619 = vadd.f32 %v1462, %v2603
        %v2620 = vadd.f32 %v1463, %v2604
        %v2621 = vadd.f32 %v1464, %v2605
        %v2622 = vadd.f32 %v1465, %v2606
        %vm2623 = vcmp.gt.f32.partialorder %v2607, 0.9
        %vm2624 = vcmp.gt.f32.partialorder %v2608, 0.9
        %vm2625 = vcmp.gt.f32.partialorder %v2609, 0.9
        %vm2626 = vcmp.gt.f32.partialorder %v2610, 0.9
        %vm2627 = vcmp.gt.f32.partialorder %v2611, 0.9
        %vm2628 = vcmp.gt.f32.partialorder %v2612, 0.9
        %vm2629 = vcmp.gt.f32.partialorder %v2613, 0.9
        %vm2630 = vcmp.gt.f32.partialorder %v2614, 0.9
        %vm2631 = vcmp.gt.f32.partialorder %v2615, 0.9
        %vm2632 = vcmp.gt.f32.partialorder %v2616, 0.9
        %vm2633 = vcmp.gt.f32.partialorder %v2617, 0.9
        %vm2634 = vcmp.gt.f32.partialorder %v2618, 0.9
        %vm2635 = vcmp.gt.f32.partialorder %v2619, 0.9
        %vm2636 = vcmp.gt.f32.partialorder %v2620, 0.9
        %vm2637 = vcmp.gt.f32.partialorder %v2621, 0.9
        %vm2638 = vcmp.gt.f32.partialorder %v2622, 0.9
        %v2639 = vsel %vm2623, 1, 0
        %v2640 = vsel %vm2624, 1, 0
        %v2641 = vsel %vm2625, 1, 0
        %v2642 = vsel %vm2626, 1, 0
        %v2643 = vsel %vm2627, 1, 0
        %v2644 = vsel %vm2628, 1, 0
        %v2645 = vsel %vm2629, 1, 0
        %v2646 = vsel %vm2630, 1, 0
        %v2647 = vsel %vm2631, 1, 0
        %v2648 = vsel %vm2632, 1, 0
        %v2649 = vsel %vm2633, 1, 0
        %v2650 = vsel %vm2634, 1, 0
        %v2651 = vsel %vm2635, 1, 0
        %v2652 = vsel %vm2636, 1, 0
        %v2653 = vsel %vm2637, 1, 0
        %v2654 = vsel %vm2638, 1, 0
        %v2655 = vcvt.s32.f32 %v2639
        %v2656 = vcvt.s32.f32 %v2640
        %v2657 = vcvt.s32.f32 %v2641
        %v2658 = vcvt.s32.f32 %v2642
        %v2659 = vcvt.s32.f32 %v2643
        %v2660 = vcvt.s32.f32 %v2644
        %v2661 = vcvt.s32.f32 %v2645
        %v2662 = vcvt.s32.f32 %v2646
        %v2663 = vcvt.s32.f32 %v2647
        %v2664 = vcvt.s32.f32 %v2648
        %v2665 = vcvt.s32.f32 %v2649
        %v2666 = vcvt.s32.f32 %v2650
        %v2667 = vcvt.s32.f32 %v2651
        %v2668 = vcvt.s32.f32 %v2652
        %v2669 = vcvt.s32.f32 %v2653
        %v2670 = vcvt.s32.f32 %v2654
        %v2671 = vmul.f32 %v2655, %v2575
        %v2672 = vmul.f32 %v2656, %v2576
        %v2673 = vmul.f32 %v2657, %v2577
        %v2674 = vmul.f32 %v2658, %v2578
        %v2675 = vmul.f32 %v2659, %v2579
        %v2676 = vmul.f32 %v2660, %v2580
        %v2677 = vmul.f32 %v2661, %v2581
        %v2678 = vmul.f32 %v2662, %v2582
        %v2679 = vmul.f32 %v2663, %v2583
        %v2680 = vmul.f32 %v2664, %v2584
        %v2681 = vmul.f32 %v2665, %v2585
        %v2682 = vmul.f32 %v2666, %v2586
        %v2683 = vmul.f32 %v2667, %v2587
        %v2684 = vmul.f32 %v2668, %v2588
        %v2685 = vmul.f32 %v2669, %v2589
        %v2686 = vmul.f32 %v2670, %v2590
        %vm2687 = vcmp.le.f32.partialorder %v2607, 0.9
        %vm2688 = vcmp.le.f32.partialorder %v2608, 0.9
        %vm2689 = vcmp.le.f32.partialorder %v2609, 0.9
        %vm2690 = vcmp.le.f32.partialorder %v2610, 0.9
        %vm2691 = vcmp.le.f32.partialorder %v2611, 0.9
        %vm2692 = vcmp.le.f32.partialorder %v2612, 0.9
        %vm2693 = vcmp.le.f32.partialorder %v2613, 0.9
        %vm2694 = vcmp.le.f32.partialorder %v2614, 0.9
        %vm2695 = vcmp.le.f32.partialorder %v2615, 0.9
        %vm2696 = vcmp.le.f32.partialorder %v2616, 0.9
        %vm2697 = vcmp.le.f32.partialorder %v2617, 0.9
        %vm2698 = vcmp.le.f32.partialorder %v2618, 0.9
        %vm2699 = vcmp.le.f32.partialorder %v2619, 0.9
        %vm2700 = vcmp.le.f32.partialorder %v2620, 0.9
        %vm2701 = vcmp.le.f32.partialorder %v2621, 0.9
        %vm2702 = vcmp.le.f32.partialorder %v2622, 0.9
        %v2703 = vsel %vm2687, 1, 0
        %v2704 = vsel %vm2688, 1, 0
        %v2705 = vsel %vm2689, 1, 0
        %v2706 = vsel %vm2690, 1, 0
        %v2707 = vsel %vm2691, 1, 0
        %v2708 = vsel %vm2692, 1, 0
        %v2709 = vsel %vm2693, 1, 0
        %v2710 = vsel %vm2694, 1, 0
        %v2711 = vsel %vm2695, 1, 0
        %v2712 = vsel %vm2696, 1, 0
        %v2713 = vsel %vm2697, 1, 0
        %v2714 = vsel %vm2698, 1, 0
        %v2715 = vsel %vm2699, 1, 0
        %v2716 = vsel %vm2700, 1, 0
        %v2717 = vsel %vm2701, 1, 0
        %v2718 = vsel %vm2702, 1, 0
        %v2719 = vcvt.s32.f32 %v2703
        %v2720 = vcvt.s32.f32 %v2704
        %v2721 = vcvt.s32.f32 %v2705
        %v2722 = vcvt.s32.f32 %v2706
        %v2723 = vcvt.s32.f32 %v2707
        %v2724 = vcvt.s32.f32 %v2708
        %v2725 = vcvt.s32.f32 %v2709
        %v2726 = vcvt.s32.f32 %v2710
        %v2727 = vcvt.s32.f32 %v2711
        %v2728 = vcvt.s32.f32 %v2712
        %v2729 = vcvt.s32.f32 %v2713
        %v2730 = vcvt.s32.f32 %v2714
        %v2731 = vcvt.s32.f32 %v2715
        %v2732 = vcvt.s32.f32 %v2716
        %v2733 = vcvt.s32.f32 %v2717
        %v2734 = vcvt.s32.f32 %v2718
        %v2735 = vmul.f32 %v2719, %v2575
        %v2736 = vmul.f32 %v2720, %v2576
        %v2737 = vmul.f32 %v2721, %v2577
        %v2738 = vmul.f32 %v2722, %v2578
        %v2739 = vmul.f32 %v2723, %v2579
        %v2740 = vmul.f32 %v2724, %v2580
        %v2741 = vmul.f32 %v2725, %v2581
        %v2742 = vmul.f32 %v2726, %v2582
        %v2743 = vmul.f32 %v2727, %v2583
        %v2744 = vmul.f32 %v2728, %v2584
        %v2745 = vmul.f32 %v2729, %v2585
        %v2746 = vmul.f32 %v2730, %v2586
        %v2747 = vmul.f32 %v2731, %v2587
        %v2748 = vmul.f32 %v2732, %v2588
        %v2749 = vmul.f32 %v2733, %v2589
        %v2750 = vmul.f32 %v2734, %v2590
        %v2751 = vmul.f32 %v2512, %v2735
        %v2752 = vmul.f32 %v2514, %v2736
        %v2753 = vmul.f32 %v2516, %v2737
        %v2754 = vmul.f32 %v2518, %v2738
        %v2755 = vmul.f32 %v2520, %v2739
        %v2756 = vmul.f32 %v2522, %v2740
        %v2757 = vmul.f32 %v2524, %v2741
        %v2758 = vmul.f32 %v2526, %v2742
        %v2759 = vmul.f32 %v2528, %v2743
        %v2760 = vmul.f32 %v2530, %v2744
        %v2761 = vmul.f32 %v2532, %v2745
        %v2762 = vmul.f32 %v2534, %v2746
        %v2763 = vmul.f32 %v2536, %v2747
        %v2764 = vmul.f32 %v2538, %v2748
        %v2765 = vmul.f32 %v2540, %v2749
        %v2766 = vmul.f32 %v2542, %v2750
        %v2767 = vadd.f32 %v1450, %v2751
        %v2768 = vadd.f32 %v1451, %v2752
        %v2769 = vadd.f32 %v1452, %v2753
        %v2770 = vadd.f32 %v1453, %v2754
        %v2771 = vadd.f32 %v1454, %v2755
        %v2772 = vadd.f32 %v1455, %v2756
        %v2773 = vadd.f32 %v1456, %v2757
        %v2774 = vadd.f32 %v1457, %v2758
        %v2775 = vadd.f32 %v1458, %v2759
        %v2776 = vadd.f32 %v1459, %v2760
        %v2777 = vadd.f32 %v1460, %v2761
        %v2778 = vadd.f32 %v1461, %v2762
        %v2779 = vadd.f32 %v1462, %v2763
        %v2780 = vadd.f32 %v1463, %v2764
        %v2781 = vadd.f32 %v1464, %v2765
        %v2782 = vadd.f32 %v1465, %v2766
        %v2783 = vsub.f32 1.0, %v2767
        %v2784 = vsub.f32 1.0, %v2768
        %v2785 = vsub.f32 1.0, %v2769
        %v2786 = vsub.f32 1.0, %v2770
        %v2787 = vsub.f32 1.0, %v2771
        %v2788 = vsub.f32 1.0, %v2772
        %v2789 = vsub.f32 1.0, %v2773
        %v2790 = vsub.f32 1.0, %v2774
        %v2791 = vsub.f32 1.0, %v2775
        %v2792 = vsub.f32 1.0, %v2776
        %v2793 = vsub.f32 1.0, %v2777
        %v2794 = vsub.f32 1.0, %v2778
        %v2795 = vsub.f32 1.0, %v2779
        %v2796 = vsub.f32 1.0, %v2780
        %v2797 = vsub.f32 1.0, %v2781
        %v2798 = vsub.f32 1.0, %v2782
        %v2799 = vmul.f32 %v2671, %v2783
        %v2800 = vmul.f32 %v2672, %v2784
        %v2801 = vmul.f32 %v2673, %v2785
        %v2802 = vmul.f32 %v2674, %v2786
        %v2803 = vmul.f32 %v2675, %v2787
        %v2804 = vmul.f32 %v2676, %v2788
        %v2805 = vmul.f32 %v2677, %v2789
        %v2806 = vmul.f32 %v2678, %v2790
        %v2807 = vmul.f32 %v2679, %v2791
        %v2808 = vmul.f32 %v2680, %v2792
        %v2809 = vmul.f32 %v2681, %v2793
        %v2810 = vmul.f32 %v2682, %v2794
        %v2811 = vmul.f32 %v2683, %v2795
        %v2812 = vmul.f32 %v2684, %v2796
        %v2813 = vmul.f32 %v2685, %v2797
        %v2814 = vmul.f32 %v2686, %v2798
        %v2815 = vadd.f32 %v1418, %v2799
        %v2816 = vadd.f32 %v1419, %v2800
        %v2817 = vadd.f32 %v1420, %v2801
        %v2818 = vadd.f32 %v1421, %v2802
        %v2819 = vadd.f32 %v1422, %v2803
        %v2820 = vadd.f32 %v1423, %v2804
        %v2821 = vadd.f32 %v1424, %v2805
        %v2822 = vadd.f32 %v1425, %v2806
        %v2823 = vadd.f32 %v1426, %v2807
        %v2824 = vadd.f32 %v1427, %v2808
        %v2825 = vadd.f32 %v1428, %v2809
        %v2826 = vadd.f32 %v1429, %v2810
        %v2827 = vadd.f32 %v1430, %v2811
        %v2828 = vadd.f32 %v1431, %v2812
        %v2829 = vadd.f32 %v1432, %v2813
        %v2830 = vadd.f32 %v1433, %v2814
        %v2831 = vadd.f32 %v1482, %v2735
        %v2832 = vadd.f32 %v1483, %v2736
        %v2833 = vadd.f32 %v1484, %v2737
        %v2834 = vadd.f32 %v1485, %v2738
        %v2835 = vadd.f32 %v1486, %v2739
        %v2836 = vadd.f32 %v1487, %v2740
        %v2837 = vadd.f32 %v1488, %v2741
        %v2838 = vadd.f32 %v1489, %v2742
        %v2839 = vadd.f32 %v1490, %v2743
        %v2840 = vadd.f32 %v1491, %v2744
        %v2841 = vadd.f32 %v1492, %v2745
        %v2842 = vadd.f32 %v1493, %v2746
        %v2843 = vadd.f32 %v1494, %v2747
        %v2844 = vadd.f32 %v1495, %v2748
        %v2845 = vadd.f32 %v1496, %v2749
        %v2846 = vadd.f32 %v1497, %v2750
        %v2847 = vadd.f32 %v2831, %v2671
        %v2848 = vadd.f32 %v2832, %v2672
        %v2849 = vadd.f32 %v2833, %v2673
        %v2850 = vadd.f32 %v2834, %v2674
        %v2851 = vadd.f32 %v2835, %v2675
        %v2852 = vadd.f32 %v2836, %v2676
        %v2853 = vadd.f32 %v2837, %v2677
        %v2854 = vadd.f32 %v2838, %v2678
        %v2855 = vadd.f32 %v2839, %v2679
        %v2856 = vadd.f32 %v2840, %v2680
        %v2857 = vadd.f32 %v2841, %v2681
        %v2858 = vadd.f32 %v2842, %v2682
        %v2859 = vadd.f32 %v2843, %v2683
        %v2860 = vadd.f32 %v2844, %v2684
        %v2861 = vadd.f32 %v2845, %v2685
        %v2862 = vadd.f32 %v2846, %v2686
        %v2863 = vmul.f32 %v2671, %v2815
        %v2864 = vmul.f32 %v2672, %v2816
        %v2865 = vmul.f32 %v2673, %v2817
        %v2866 = vmul.f32 %v2674, %v2818
        %v2867 = vmul.f32 %v2675, %v2819
        %v2868 = vmul.f32 %v2676, %v2820
        %v2869 = vmul.f32 %v2677, %v2821
        %v2870 = vmul.f32 %v2678, %v2822
        %v2871 = vmul.f32 %v2679, %v2823
        %v2872 = vmul.f32 %v2680, %v2824
        %v2873 = vmul.f32 %v2681, %v2825
        %v2874 = vmul.f32 %v2682, %v2826
        %v2875 = vmul.f32 %v2683, %v2827
        %v2876 = vmul.f32 %v2684, %v2828
        %v2877 = vmul.f32 %v2685, %v2829
        %v2878 = vmul.f32 %v2686, %v2830
        %v2879 = vadd.f32 %v2751, %v2863
        %v2880 = vadd.f32 %v2752, %v2864
        %v2881 = vadd.f32 %v2753, %v2865
        %v2882 = vadd.f32 %v2754, %v2866
        %v2883 = vadd.f32 %v2755, %v2867
        %v2884 = vadd.f32 %v2756, %v2868
        %v2885 = vadd.f32 %v2757, %v2869
        %v2886 = vadd.f32 %v2758, %v2870
        %v2887 = vadd.f32 %v2759, %v2871
        %v2888 = vadd.f32 %v2760, %v2872
        %v2889 = vadd.f32 %v2761, %v2873
        %v2890 = vadd.f32 %v2762, %v2874
        %v2891 = vadd.f32 %v2763, %v2875
        %v2892 = vadd.f32 %v2764, %v2876
        %v2893 = vadd.f32 %v2765, %v2877
        %v2894 = vadd.f32 %v2766, %v2878
        %v2895 = vsel %vm860, %v2351, 0.0
        %2896 = vadd.xlane.f32.xlu0 %v2895
        %v2897 = vpop.xlane.xlu0 %2896
        %v2898 = vsel %vm860, %v2352, 0.0
        %2899 = vadd.xlane.f32.xlu0 %v2898
        %v2900 = vpop.xlane.xlu0 %2899
        %v2901 = vsel %vm860, %v2353, 0.0
        %2902 = vadd.xlane.f32.xlu0 %v2901
        %v2903 = vpop.xlane.xlu0 %2902
        %v2904 = vsel %vm860, %v2354, 0.0
        %2905 = vadd.xlane.f32.xlu0 %v2904
        %v2906 = vpop.xlane.xlu0 %2905
        %v2907 = vsel %vm860, %v2355, 0.0
        %2908 = vadd.xlane.f32.xlu0 %v2907
        %v2909 = vpop.xlane.xlu0 %2908
        %v2910 = vsel %vm860, %v2356, 0.0
        %2911 = vadd.xlane.f32.xlu0 %v2910
        %v2912 = vpop.xlane.xlu0 %2911
        %v2913 = vsel %vm860, %v2357, 0.0
        %2914 = vadd.xlane.f32.xlu0 %v2913
        %v2915 = vpop.xlane.xlu0 %2914
        %v2916 = vsel %vm860, %v2358, 0.0
        %2917 = vadd.xlane.f32.xlu0 %v2916
        %v2918 = vpop.xlane.xlu0 %2917
        %v2919 = vsel %vm860, %v2359, 0.0
        %2920 = vadd.xlane.f32.xlu0 %v2919
        %v2921 = vpop.xlane.xlu0 %2920
        %v2922 = vsel %vm860, %v2360, 0.0
        %2923 = vadd.xlane.f32.xlu0 %v2922
        %v2924 = vpop.xlane.xlu0 %2923
        %v2925 = vsel %vm860, %v2361, 0.0
        %2926 = vadd.xlane.f32.xlu0 %v2925
        %v2927 = vpop.xlane.xlu0 %2926
        %v2928 = vsel %vm860, %v2362, 0.0
        %2929 = vadd.xlane.f32.xlu0 %v2928
        %v2930 = vpop.xlane.xlu0 %2929
        %v2931 = vsel %vm860, %v2363, 0.0
        %2932 = vadd.xlane.f32.xlu0 %v2931
        %v2933 = vpop.xlane.xlu0 %2932
        %v2934 = vsel %vm860, %v2364, 0.0
        %2935 = vadd.xlane.f32.xlu0 %v2934
        %v2936 = vpop.xlane.xlu0 %2935
        %v2937 = vsel %vm860, %v2365, 0.0
        %2938 = vadd.xlane.f32.xlu0 %v2937
        %v2939 = vpop.xlane.xlu0 %2938
        %v2940 = vsel %vm860, %v2366, 0.0
        %2941 = vadd.xlane.f32.xlu0 %v2940
        %v2942 = vpop.xlane.xlu0 %2941
        %v2943 = vmul.f32 %v2897, %v1562
        %v2944 = vmul.f32 %v2900, %v1562
        %v2945 = vmul.f32 %v2903, %v1562
        %v2946 = vmul.f32 %v2906, %v1562
        %v2947 = vmul.f32 %v2909, %v1562
        %v2948 = vmul.f32 %v2912, %v1562
        %v2949 = vmul.f32 %v2915, %v1562
        %v2950 = vmul.f32 %v2918, %v1562
        %v2951 = vmul.f32 %v2921, %v1562
        %v2952 = vmul.f32 %v2924, %v1562
        %v2953 = vmul.f32 %v2927, %v1562
        %v2954 = vmul.f32 %v2930, %v1562
        %v2955 = vmul.f32 %v2933, %v1562
        %v2956 = vmul.f32 %v2936, %v1562
        %v2957 = vmul.f32 %v2939, %v1562
        %v2958 = vmul.f32 %v2942, %v1562
        %v2959 = vsub.f32 %v2351, %v2943
        %v2960 = vsub.f32 %v2352, %v2944
        %v2961 = vsub.f32 %v2353, %v2945
        %v2962 = vsub.f32 %v2354, %v2946
        %v2963 = vsub.f32 %v2355, %v2947
        %v2964 = vsub.f32 %v2356, %v2948
        %v2965 = vsub.f32 %v2357, %v2949
        %v2966 = vsub.f32 %v2358, %v2950
        %v2967 = vsub.f32 %v2359, %v2951
        %v2968 = vsub.f32 %v2360, %v2952
        %v2969 = vsub.f32 %v2361, %v2953
        %v2970 = vsub.f32 %v2362, %v2954
        %v2971 = vsub.f32 %v2363, %v2955
        %v2972 = vsub.f32 %v2364, %v2956
        %v2973 = vsub.f32 %v2365, %v2957
        %v2974 = vsub.f32 %v2366, %v2958
        %v2975 = vmul.f32 %v2959, %v2959
        %v2976 = vmul.f32 %v2960, %v2960
        %v2977 = vmul.f32 %v2961, %v2961
        %v2978 = vmul.f32 %v2962, %v2962
        %v2979 = vmul.f32 %v2963, %v2963
        %v2980 = vmul.f32 %v2964, %v2964
        %v2981 = vmul.f32 %v2965, %v2965
        %v2982 = vmul.f32 %v2966, %v2966
        %v2983 = vmul.f32 %v2967, %v2967
        %v2984 = vmul.f32 %v2968, %v2968
        %v2985 = vmul.f32 %v2969, %v2969
        %v2986 = vmul.f32 %v2970, %v2970
        %v2987 = vmul.f32 %v2971, %v2971
        %v2988 = vmul.f32 %v2972, %v2972
        %v2989 = vmul.f32 %v2973, %v2973
        %v2990 = vmul.f32 %v2974, %v2974
        %v2991 = vsel %vm860, %v2975, 0.0
        %2992 = vadd.xlane.f32.xlu0 %v2991
        %v2993 = vpop.xlane.xlu0 %2992
        %v2994 = vsel %vm860, %v2976, 0.0
        %2995 = vadd.xlane.f32.xlu0 %v2994
        %v2996 = vpop.xlane.xlu0 %2995
        %v2997 = vsel %vm860, %v2977, 0.0
        %2998 = vadd.xlane.f32.xlu0 %v2997
        %v2999 = vpop.xlane.xlu0 %2998
        %v3000 = vsel %vm860, %v2978, 0.0
        %3001 = vadd.xlane.f32.xlu0 %v3000
        %v3002 = vpop.xlane.xlu0 %3001
        %v3003 = vsel %vm860, %v2979, 0.0
        %3004 = vadd.xlane.f32.xlu0 %v3003
        %v3005 = vpop.xlane.xlu0 %3004
        %v3006 = vsel %vm860, %v2980, 0.0
        %3007 = vadd.xlane.f32.xlu0 %v3006
        %v3008 = vpop.xlane.xlu0 %3007
        %v3009 = vsel %vm860, %v2981, 0.0
        %3010 = vadd.xlane.f32.xlu0 %v3009
        %v3011 = vpop.xlane.xlu0 %3010
        %v3012 = vsel %vm860, %v2982, 0.0
        %3013 = vadd.xlane.f32.xlu0 %v3012
        %v3014 = vpop.xlane.xlu0 %3013
        %v3015 = vsel %vm860, %v2983, 0.0
        %3016 = vadd.xlane.f32.xlu0 %v3015
        %v3017 = vpop.xlane.xlu0 %3016
        %v3018 = vsel %vm860, %v2984, 0.0
        %3019 = vadd.xlane.f32.xlu0 %v3018
        %v3020 = vpop.xlane.xlu0 %3019
        %v3021 = vsel %vm860, %v2985, 0.0
        %3022 = vadd.xlane.f32.xlu0 %v3021
        %v3023 = vpop.xlane.xlu0 %3022
        %v3024 = vsel %vm860, %v2986, 0.0
        %3025 = vadd.xlane.f32.xlu0 %v3024
        %v3026 = vpop.xlane.xlu0 %3025
        %v3027 = vsel %vm860, %v2987, 0.0
        %3028 = vadd.xlane.f32.xlu0 %v3027
        %v3029 = vpop.xlane.xlu0 %3028
        %v3030 = vsel %vm860, %v2988, 0.0
        %3031 = vadd.xlane.f32.xlu0 %v3030
        %v3032 = vpop.xlane.xlu0 %3031
        %v3033 = vsel %vm860, %v2989, 0.0
        %3034 = vadd.xlane.f32.xlu0 %v3033
        %v3035 = vpop.xlane.xlu0 %3034
        %v3036 = vsel %vm860, %v2990, 0.0
        %3037 = vadd.xlane.f32.xlu0 %v3036
        %v3038 = vpop.xlane.xlu0 %3037
        %v3039 = vmul.f32 %v2993, %v1562
        %v3040 = vmul.f32 %v2996, %v1562
        %v3041 = vmul.f32 %v2999, %v1562
        %v3042 = vmul.f32 %v3002, %v1562
        %v3043 = vmul.f32 %v3005, %v1562
        %v3044 = vmul.f32 %v3008, %v1562
        %v3045 = vmul.f32 %v3011, %v1562
        %v3046 = vmul.f32 %v3014, %v1562
        %v3047 = vmul.f32 %v3017, %v1562
        %v3048 = vmul.f32 %v3020, %v1562
        %v3049 = vmul.f32 %v3023, %v1562
        %v3050 = vmul.f32 %v3026, %v1562
        %v3051 = vmul.f32 %v3029, %v1562
        %v3052 = vmul.f32 %v3032, %v1562
        %v3053 = vmul.f32 %v3035, %v1562
        %v3054 = vmul.f32 %v3038, %v1562
        %v3055 = vadd.f32 %v3039, 1e-06
        %v3056 = vadd.f32 %v3040, 1e-06
        %v3057 = vadd.f32 %v3041, 1e-06
        %v3058 = vadd.f32 %v3042, 1e-06
        %v3059 = vadd.f32 %v3043, 1e-06
        %v3060 = vadd.f32 %v3044, 1e-06
        %v3061 = vadd.f32 %v3045, 1e-06
        %v3062 = vadd.f32 %v3046, 1e-06
        %v3063 = vadd.f32 %v3047, 1e-06
        %v3064 = vadd.f32 %v3048, 1e-06
        %v3065 = vadd.f32 %v3049, 1e-06
        %v3066 = vadd.f32 %v3050, 1e-06
        %v3067 = vadd.f32 %v3051, 1e-06
        %v3068 = vadd.f32 %v3052, 1e-06
        %v3069 = vadd.f32 %v3053, 1e-06
        %v3070 = vadd.f32 %v3054, 1e-06
        %v3071 = vrsqrt.pop %v3055
        %v3072 = vrsqrt.pop %v3056
        %v3073 = vrsqrt.pop %v3057
        %v3074 = vrsqrt.pop %v3058
        %v3075 = vrsqrt.pop %v3059
        %v3076 = vrsqrt.pop %v3060
        %v3077 = vrsqrt.pop %v3061
        %v3078 = vrsqrt.pop %v3062
        %v3079 = vrsqrt.pop %v3063
        %v3080 = vrsqrt.pop %v3064
        %v3081 = vrsqrt.pop %v3065
        %v3082 = vrsqrt.pop %v3066
        %v3083 = vrsqrt.pop %v3067
        %v3084 = vrsqrt.pop %v3068
        %v3085 = vrsqrt.pop %v3069
        %v3086 = vrsqrt.pop %v3070
        %v3087 = vmul.f32 %v2959, %v3071
        %v3088 = vmul.f32 %v2960, %v3072
        %v3089 = vmul.f32 %v2961, %v3073
        %v3090 = vmul.f32 %v2962, %v3074
        %v3091 = vmul.f32 %v2963, %v3075
        %v3092 = vmul.f32 %v2964, %v3076
        %v3093 = vmul.f32 %v2965, %v3077
        %v3094 = vmul.f32 %v2966, %v3078
        %v3095 = vmul.f32 %v2967, %v3079
        %v3096 = vmul.f32 %v2968, %v3080
        %v3097 = vmul.f32 %v2969, %v3081
        %v3098 = vmul.f32 %v2970, %v3082
        %v3099 = vmul.f32 %v2971, %v3083
        %v3100 = vmul.f32 %v2972, %v3084
        %v3101 = vmul.f32 %v2973, %v3085
        %v3102 = vmul.f32 %v2974, %v3086
        %v3103 = vmul.f32 %v3087, %v1727
        %v3104 = vmul.f32 %v3088, %v1727
        %v3105 = vmul.f32 %v3089, %v1727
        %v3106 = vmul.f32 %v3090, %v1727
        %v3107 = vmul.f32 %v3091, %v1727
        %v3108 = vmul.f32 %v3092, %v1727
        %v3109 = vmul.f32 %v3093, %v1727
        %v3110 = vmul.f32 %v3094, %v1727
        %v3111 = vmul.f32 %v3095, %v1727
        %v3112 = vmul.f32 %v3096, %v1727
        %v3113 = vmul.f32 %v3097, %v1727
        %v3114 = vmul.f32 %v3098, %v1727
        %v3115 = vmul.f32 %v3099, %v1727
        %v3116 = vmul.f32 %v3100, %v1727
        %v3117 = vmul.f32 %v3101, %v1727
        %v3118 = vmul.f32 %v3102, %v1727
        %v3119 = vadd.f32 %v3103, %v1749
        %v3120 = vadd.f32 %v3104, %v1749
        %v3121 = vadd.f32 %v3105, %v1749
        %v3122 = vadd.f32 %v3106, %v1749
        %v3123 = vadd.f32 %v3107, %v1749
        %v3124 = vadd.f32 %v3108, %v1749
        %v3125 = vadd.f32 %v3109, %v1749
        %v3126 = vadd.f32 %v3110, %v1749
        %v3127 = vadd.f32 %v3111, %v1749
        %v3128 = vadd.f32 %v3112, %v1749
        %v3129 = vadd.f32 %v3113, %v1749
        %v3130 = vadd.f32 %v3114, %v1749
        %v3131 = vadd.f32 %v3115, %v1749
        %v3132 = vadd.f32 %v3116, %v1749
        %v3133 = vadd.f32 %v3117, %v1749
        %v3134 = vadd.f32 %v3118, %v1749
        %v3135 = vpack.c.bf16 %v3120, %v3119
        %v3136 = vpack.c.bf16 %v3122, %v3121
        %v3137 = vpack.c.bf16 %v3124, %v3123
        %v3138 = vpack.c.bf16 %v3126, %v3125
        %v3139 = vpack.c.bf16 %v3128, %v3127
        %v3140 = vpack.c.bf16 %v3130, %v3129
        %v3141 = vpack.c.bf16 %v3132, %v3131
        %v3142 = vpack.c.bf16 %v3134, %v3133
        %v3144 = vsel %vm860, %v3135, 0
        %v3147 = vsel %vm860, %v3136, 0
        %v3150 = vsel %vm860, %v3137, 0
        %v3153 = vsel %vm860, %v3138, 0
        %v3156 = vsel %vm860, %v3139, 0
        %v3159 = vsel %vm860, %v3140, 0
        %v3162 = vsel %vm860, %v3141, 0
        %v3165 = vsel %vm860, %v3142, 0
        %3167 = vmatprep.subr.bf16.mxu0 0
        %3168 = vmatpush1.bf16.msra.mxu0 %v1789
        %3169 = vmatprep.subr.bf16.mxu0 0
        %3170 = vmatpush1.bf16.msra.mxu0 %v1790
        %3171 = vmatprep.subr.bf16.mxu0 0
        %3172 = vmatpush1.bf16.msra.mxu0 0
        %3173 = vmatprep.subr.bf16.mxu0 0
        %3174 = vmatpush1.bf16.msra.mxu0 0
        %3175 = vmatprep.subr.bf16.mxu0 0
        %3176 = vmatpush1.bf16.msra.mxu0 0
        %3177 = vmatprep.subr.bf16.mxu0 0
        %3178 = vmatpush1.bf16.msra.mxu0 0
        %3179 = vmatprep.subr.bf16.mxu0 0
        %3180 = vmatpush1.bf16.msra.mxu0 0
        %3181 = vmatprep.subr.bf16.mxu0 0
        %3182 = vmatpush1.bf16.msra.mxu0 0
        %3183 = vmatprep.subr.bf16.mxu0 0
        %3184 = vmatpush1.bf16.msra.mxu0 0
        %3185 = vmatprep.subr.bf16.mxu0 0
        %3186 = vmatpush1.bf16.msra.mxu0 0
        %3187 = vmatprep.subr.bf16.mxu0 0
        %3188 = vmatpush1.bf16.msra.mxu0 0
        %3189 = vmatprep.subr.bf16.mxu0 0
        %3190 = vmatpush1.bf16.msra.mxu0 0
        %3191 = vmatprep.subr.bf16.mxu0 0
        %3192 = vmatpush1.bf16.msra.mxu0 0
        %3193 = vmatprep.subr.bf16.mxu0 0
        %3194 = vmatpush1.bf16.msra.mxu0 0
        %3195 = vmatprep.subr.bf16.mxu0 0
        %3196 = vmatpush1.bf16.msra.mxu0 0
        %3197 = vmatprep.subr.bf16.mxu0 0
        %3198 = vmatpush1.bf16.msra.mxu0 0
        %3199 = vmatprep.mubr.bf16.mxu0 0
        %3200 = vmatmul.mubr.bf16.gmra.mrb[0].mxu0 %v3144
        %v3201 = vpop.f32.mrb[0].mxu0
        %v3202 = vadd.f32 %v1779, %v3201
        %v3203 = vpop.f32.mrb[0].mxu0
        %v3204 = vpop.f32.mrb[0].mxu0
        %v3205 = vadd.f32 %v1779, %v3204
        %v3206 = vpop.f32.mrb[0].mxu0
        %3207 = vmatprep.mubr.bf16.mxu0 0
        %3208 = vmatmul.mubr.bf16.gmra.mrb[0].mxu0 %v3147
        %v3209 = vpop.f32.mrb[0].mxu0
        %v3210 = vadd.f32 %v1779, %v3209
        %v3211 = vpop.f32.mrb[0].mxu0
        %v3212 = vpop.f32.mrb[0].mxu0
        %v3213 = vadd.f32 %v1779, %v3212
        %v3214 = vpop.f32.mrb[0].mxu0
        %3215 = vmatprep.mubr.bf16.mxu0 0
        %3216 = vmatmul.mubr.bf16.gmra.mrb[0].mxu0 %v3150
        %v3217 = vpop.f32.mrb[0].mxu0
        %v3218 = vadd.f32 %v1779, %v3217
        %v3219 = vpop.f32.mrb[0].mxu0
        %v3220 = vpop.f32.mrb[0].mxu0
        %v3221 = vadd.f32 %v1779, %v3220
        %v3222 = vpop.f32.mrb[0].mxu0
        %3223 = vmatprep.mubr.bf16.mxu0 0
        %3224 = vmatmul.mubr.bf16.gmra.mrb[0].mxu0 %v3153
        %v3225 = vpop.f32.mrb[0].mxu0
        %v3226 = vadd.f32 %v1779, %v3225
        %v3227 = vpop.f32.mrb[0].mxu0
        %v3228 = vpop.f32.mrb[0].mxu0
        %v3229 = vadd.f32 %v1779, %v3228
        %v3230 = vpop.f32.mrb[0].mxu0
        %3231 = vmatprep.mubr.bf16.mxu0 0
        %3232 = vmatmul.mubr.bf16.gmra.mrb[0].mxu0 %v3156
        %v3233 = vpop.f32.mrb[0].mxu0
        %v3234 = vadd.f32 %v1779, %v3233
        %v3235 = vpop.f32.mrb[0].mxu0
        %v3236 = vpop.f32.mrb[0].mxu0
        %v3237 = vadd.f32 %v1779, %v3236
        %v3238 = vpop.f32.mrb[0].mxu0
        %3239 = vmatprep.mubr.bf16.mxu0 0
        %3240 = vmatmul.mubr.bf16.gmra.mrb[0].mxu0 %v3159
        %v3241 = vpop.f32.mrb[0].mxu0
        %v3242 = vadd.f32 %v1779, %v3241
        %v3243 = vpop.f32.mrb[0].mxu0
        %v3244 = vpop.f32.mrb[0].mxu0
        %v3245 = vadd.f32 %v1779, %v3244
        %v3246 = vpop.f32.mrb[0].mxu0
        %3247 = vmatprep.mubr.bf16.mxu0 0
        %3248 = vmatmul.mubr.bf16.gmra.mrb[0].mxu0 %v3162
        %v3249 = vpop.f32.mrb[0].mxu0
        %v3250 = vadd.f32 %v1779, %v3249
        %v3251 = vpop.f32.mrb[0].mxu0
        %v3252 = vpop.f32.mrb[0].mxu0
        %v3253 = vadd.f32 %v1779, %v3252
        %v3254 = vpop.f32.mrb[0].mxu0
        %3255 = vmatprep.mubr.bf16.mxu0 0
        %3256 = vmatmul.mubr.bf16.gmra.mrb[0].mxu0 %v3165
        %v3257 = vpop.f32.mrb[0].mxu0
        %v3258 = vadd.f32 %v1779, %v3257
        %v3259 = vpop.f32.mrb[0].mxu0
        %v3260 = vpop.f32.mrb[0].mxu0
        %v3261 = vadd.f32 %v1779, %v3260
        %v3262 = vpop.f32.mrb[0].mxu0
        %3263 = vdwg.mxu0
        %v3264 = vmax.f32 %v3202, 0.0
        %v3265 = vmax.f32 %v3205, 0.0
        %v3266 = vmax.f32 %v3210, 0.0
        %v3267 = vmax.f32 %v3213, 0.0
        %v3268 = vmax.f32 %v3218, 0.0
        %v3269 = vmax.f32 %v3221, 0.0
        %v3270 = vmax.f32 %v3226, 0.0
        %v3271 = vmax.f32 %v3229, 0.0
        %v3272 = vmax.f32 %v3234, 0.0
        %v3273 = vmax.f32 %v3237, 0.0
        %v3274 = vmax.f32 %v3242, 0.0
        %v3275 = vmax.f32 %v3245, 0.0
        %v3276 = vmax.f32 %v3250, 0.0
        %v3277 = vmax.f32 %v3253, 0.0
        %v3278 = vmax.f32 %v3258, 0.0
        %v3279 = vmax.f32 %v3261, 0.0
        %v3280 = vpack.c.bf16 %v3265, %v3264
        %v3281 = vpack.c.bf16 %v3267, %v3266
        %v3282 = vpack.c.bf16 %v3269, %v3268
        %v3283 = vpack.c.bf16 %v3271, %v3270
        %v3284 = vpack.c.bf16 %v3273, %v3272
        %v3285 = vpack.c.bf16 %v3275, %v3274
        %v3286 = vpack.c.bf16 %v3277, %v3276
        %v3287 = vpack.c.bf16 %v3279, %v3278
        %v3289 = vsel %vm1968, %v3280, 0
        %v3292 = vsel %vm1968, %v3281, 0
        %v3295 = vsel %vm1968, %v3282, 0
        %v3298 = vsel %vm1968, %v3283, 0
        %v3301 = vsel %vm1968, %v3284, 0
        %v3304 = vsel %vm1968, %v3285, 0
        %v3307 = vsel %vm1968, %v3286, 0
        %v3310 = vsel %vm1968, %v3287, 0
        %3312 = vmatprep.subr.bf16.mxu0 0
        %3313 = vmatpush1.bf16.msra.mxu0 %v1960
        %3314 = vmatprep.subr.bf16.mxu0 0
        %3315 = vmatpush1.bf16.msra.mxu0 %v1961
        %3316 = vmatprep.subr.bf16.mxu0 0
        %3317 = vmatpush1.bf16.msra.mxu0 %v1962
        %3318 = vmatprep.subr.bf16.mxu0 0
        %3319 = vmatpush1.bf16.msra.mxu0 %v1963
        %3320 = vmatprep.subr.bf16.mxu0 0
        %3321 = vmatpush1.bf16.msra.mxu0 0
        %3322 = vmatprep.subr.bf16.mxu0 0
        %3323 = vmatpush1.bf16.msra.mxu0 0
        %3324 = vmatprep.subr.bf16.mxu0 0
        %3325 = vmatpush1.bf16.msra.mxu0 0
        %3326 = vmatprep.subr.bf16.mxu0 0
        %3327 = vmatpush1.bf16.msra.mxu0 0
        %3328 = vmatprep.subr.bf16.mxu0 0
        %3329 = vmatpush1.bf16.msra.mxu0 0
        %3330 = vmatprep.subr.bf16.mxu0 0
        %3331 = vmatpush1.bf16.msra.mxu0 0
        %3332 = vmatprep.subr.bf16.mxu0 0
        %3333 = vmatpush1.bf16.msra.mxu0 0
        %3334 = vmatprep.subr.bf16.mxu0 0
        %3335 = vmatpush1.bf16.msra.mxu0 0
        %3336 = vmatprep.subr.bf16.mxu0 0
        %3337 = vmatpush1.bf16.msra.mxu0 0
        %3338 = vmatprep.subr.bf16.mxu0 0
        %3339 = vmatpush1.bf16.msra.mxu0 0
        %3340 = vmatprep.subr.bf16.mxu0 0
        %3341 = vmatpush1.bf16.msra.mxu0 0
        %3342 = vmatprep.subr.bf16.mxu0 0
        %3343 = vmatpush1.bf16.msra.mxu0 0
        %3344 = vmatprep.mubr.bf16.mxu0 0
        %3345 = vmatmul.mubr.bf16.gmra.mrb[0].mxu0 %v3289
        %v3346 = vpop.f32.mrb[0].mxu0
        %v3347 = vadd.f32 %v1942, %v3346
        %v3348 = vpop.f32.mrb[0].mxu0
        %v3349 = vpop.f32.mrb[0].mxu0
        %v3350 = vadd.f32 %v1942, %v3349
        %v3351 = vpop.f32.mrb[0].mxu0
        %3352 = vmatprep.mubr.bf16.mxu0 0
        %3353 = vmatmul.mubr.bf16.gmra.mrb[0].mxu0 %v3292
        %v3354 = vpop.f32.mrb[0].mxu0
        %v3355 = vadd.f32 %v1942, %v3354
        %v3356 = vpop.f32.mrb[0].mxu0
        %v3357 = vpop.f32.mrb[0].mxu0
        %v3358 = vadd.f32 %v1942, %v3357
        %v3359 = vpop.f32.mrb[0].mxu0
        %3360 = vmatprep.mubr.bf16.mxu0 0
        %3361 = vmatmul.mubr.bf16.gmra.mrb[0].mxu0 %v3295
        %v3362 = vpop.f32.mrb[0].mxu0
        %v3363 = vadd.f32 %v1942, %v3362
        %v3364 = vpop.f32.mrb[0].mxu0
        %v3365 = vpop.f32.mrb[0].mxu0
        %v3366 = vadd.f32 %v1942, %v3365
        %v3367 = vpop.f32.mrb[0].mxu0
        %3368 = vmatprep.mubr.bf16.mxu0 0
        %3369 = vmatmul.mubr.bf16.gmra.mrb[0].mxu0 %v3298
        %v3370 = vpop.f32.mrb[0].mxu0
        %v3371 = vadd.f32 %v1942, %v3370
        %v3372 = vpop.f32.mrb[0].mxu0
        %v3373 = vpop.f32.mrb[0].mxu0
        %v3374 = vadd.f32 %v1942, %v3373
        %v3375 = vpop.f32.mrb[0].mxu0
        %3376 = vmatprep.mubr.bf16.mxu0 0
        %3377 = vmatmul.mubr.bf16.gmra.mrb[0].mxu0 %v3301
        %v3378 = vpop.f32.mrb[0].mxu0
        %v3379 = vadd.f32 %v1942, %v3378
        %v3380 = vpop.f32.mrb[0].mxu0
        %v3381 = vpop.f32.mrb[0].mxu0
        %v3382 = vadd.f32 %v1942, %v3381
        %v3383 = vpop.f32.mrb[0].mxu0
        %3384 = vmatprep.mubr.bf16.mxu0 0
        %3385 = vmatmul.mubr.bf16.gmra.mrb[0].mxu0 %v3304
        %v3386 = vpop.f32.mrb[0].mxu0
        %v3387 = vadd.f32 %v1942, %v3386
        %v3388 = vpop.f32.mrb[0].mxu0
        %v3389 = vpop.f32.mrb[0].mxu0
        %v3390 = vadd.f32 %v1942, %v3389
        %v3391 = vpop.f32.mrb[0].mxu0
        %3392 = vmatprep.mubr.bf16.mxu0 0
        %3393 = vmatmul.mubr.bf16.gmra.mrb[0].mxu0 %v3307
        %v3394 = vpop.f32.mrb[0].mxu0
        %v3395 = vadd.f32 %v1942, %v3394
        %v3396 = vpop.f32.mrb[0].mxu0
        %v3397 = vpop.f32.mrb[0].mxu0
        %v3398 = vadd.f32 %v1942, %v3397
        %v3399 = vpop.f32.mrb[0].mxu0
        %3400 = vmatprep.mubr.bf16.mxu0 0
        %3401 = vmatmul.mubr.bf16.gmra.mrb[0].mxu0 %v3310
        %v3402 = vpop.f32.mrb[0].mxu0
        %v3403 = vadd.f32 %v1942, %v3402
        %v3404 = vpop.f32.mrb[0].mxu0
        %v3405 = vpop.f32.mrb[0].mxu0
        %v3406 = vadd.f32 %v1942, %v3405
        %v3407 = vpop.f32.mrb[0].mxu0
        %3408 = vdwg.mxu0
        %v3409 = vadd.f32 %v2351, %v3347
        %v3410 = vadd.f32 %v2352, %v3350
        %v3411 = vadd.f32 %v2353, %v3355
        %v3412 = vadd.f32 %v2354, %v3358
        %v3413 = vadd.f32 %v2355, %v3363
        %v3414 = vadd.f32 %v2356, %v3366
        %v3415 = vadd.f32 %v2357, %v3371
        %v3416 = vadd.f32 %v2358, %v3374
        %v3417 = vadd.f32 %v2359, %v3379
        %v3418 = vadd.f32 %v2360, %v3382
        %v3419 = vadd.f32 %v2361, %v3387
        %v3420 = vadd.f32 %v2362, %v3390
        %v3421 = vadd.f32 %v2363, %v3395
        %v3422 = vadd.f32 %v2364, %v3398
        %v3423 = vadd.f32 %v2365, %v3403
        %v3424 = vadd.f32 %v2366, %v3406
        %3426 = vset.pattern.permute.xlu0 0
        %3427 = vperm.xlu0 %3426, %v2879
        %v3428 = vpop.permute.xlu0 %3427
        %3431 = vset.pattern.permute.xlu0 0
        %3432 = vperm.xlu0 %3431, %v2880
        %v3433 = vpop.permute.xlu0 %3432
        %3436 = vset.pattern.permute.xlu0 0
        %3437 = vperm.xlu0 %3436, %v2881
        %v3438 = vpop.permute.xlu0 %3437
        %3441 = vset.pattern.permute.xlu0 0
        %3442 = vperm.xlu0 %3441, %v2882
        %v3443 = vpop.permute.xlu0 %3442
        %3446 = vset.pattern.permute.xlu0 0
        %3447 = vperm.xlu0 %3446, %v2883
        %v3448 = vpop.permute.xlu0 %3447
        %3451 = vset.pattern.permute.xlu0 0
        %3452 = vperm.xlu0 %3451, %v2884
        %v3453 = vpop.permute.xlu0 %3452
        %3456 = vset.pattern.permute.xlu0 0
        %3457 = vperm.xlu0 %3456, %v2885
        %v3458 = vpop.permute.xlu0 %3457
        %3461 = vset.pattern.permute.xlu0 0
        %3462 = vperm.xlu0 %3461, %v2886
        %v3463 = vpop.permute.xlu0 %3462
        %3466 = vset.pattern.permute.xlu0 0
        %3467 = vperm.xlu0 %3466, %v2887
        %v3468 = vpop.permute.xlu0 %3467
        %3471 = vset.pattern.permute.xlu0 0
        %3472 = vperm.xlu0 %3471, %v2888
        %v3473 = vpop.permute.xlu0 %3472
        %3476 = vset.pattern.permute.xlu0 0
        %3477 = vperm.xlu0 %3476, %v2889
        %v3478 = vpop.permute.xlu0 %3477
        %3481 = vset.pattern.permute.xlu0 0
        %3482 = vperm.xlu0 %3481, %v2890
        %v3483 = vpop.permute.xlu0 %3482
        %3486 = vset.pattern.permute.xlu0 0
        %3487 = vperm.xlu0 %3486, %v2891
        %v3488 = vpop.permute.xlu0 %3487
        %3491 = vset.pattern.permute.xlu0 0
        %3492 = vperm.xlu0 %3491, %v2892
        %v3493 = vpop.permute.xlu0 %3492
        %3496 = vset.pattern.permute.xlu0 0
        %3497 = vperm.xlu0 %3496, %v2893
        %v3498 = vpop.permute.xlu0 %3497
        %3501 = vset.pattern.permute.xlu0 0
        %3502 = vperm.xlu0 %3501, %v2894
        %v3503 = vpop.permute.xlu0 %3502
        %v3505 = vmul.f32 %v3409, %v3428
        %v3506 = vmul.f32 %v3410, %v3433
        %v3507 = vmul.f32 %v3411, %v3438
        %v3508 = vmul.f32 %v3412, %v3443
        %v3509 = vmul.f32 %v3413, %v3448
        %v3510 = vmul.f32 %v3414, %v3453
        %v3511 = vmul.f32 %v3415, %v3458
        %v3512 = vmul.f32 %v3416, %v3463
        %v3513 = vmul.f32 %v3417, %v3468
        %v3514 = vmul.f32 %v3418, %v3473
        %v3515 = vmul.f32 %v3419, %v3478
        %v3516 = vmul.f32 %v3420, %v3483
        %v3517 = vmul.f32 %v3421, %v3488
        %v3518 = vmul.f32 %v3422, %v3493
        %v3519 = vmul.f32 %v3423, %v3498
        %v3520 = vmul.f32 %v3424, %v3503
        %v3521 = vsub.f32 1.0, %v2879
        %v3522 = vsub.f32 1.0, %v2880
        %v3523 = vsub.f32 1.0, %v2881
        %v3524 = vsub.f32 1.0, %v2882
        %v3525 = vsub.f32 1.0, %v2883
        %v3526 = vsub.f32 1.0, %v2884
        %v3527 = vsub.f32 1.0, %v2885
        %v3528 = vsub.f32 1.0, %v2886
        %v3529 = vsub.f32 1.0, %v2887
        %v3530 = vsub.f32 1.0, %v2888
        %v3531 = vsub.f32 1.0, %v2889
        %v3532 = vsub.f32 1.0, %v2890
        %v3533 = vsub.f32 1.0, %v2891
        %v3534 = vsub.f32 1.0, %v2892
        %v3535 = vsub.f32 1.0, %v2893
        %v3536 = vsub.f32 1.0, %v2894
        %3538 = vset.pattern.permute.xlu0 0
        %3539 = vperm.xlu0 %3538, %v3521
        %v3540 = vpop.permute.xlu0 %3539
        %3543 = vset.pattern.permute.xlu0 0
        %3544 = vperm.xlu0 %3543, %v3522
        %v3545 = vpop.permute.xlu0 %3544
        %3548 = vset.pattern.permute.xlu0 0
        %3549 = vperm.xlu0 %3548, %v3523
        %v3550 = vpop.permute.xlu0 %3549
        %3553 = vset.pattern.permute.xlu0 0
        %3554 = vperm.xlu0 %3553, %v3524
        %v3555 = vpop.permute.xlu0 %3554
        %3558 = vset.pattern.permute.xlu0 0
        %3559 = vperm.xlu0 %3558, %v3525
        %v3560 = vpop.permute.xlu0 %3559
        %3563 = vset.pattern.permute.xlu0 0
        %3564 = vperm.xlu0 %3563, %v3526
        %v3565 = vpop.permute.xlu0 %3564
        %3568 = vset.pattern.permute.xlu0 0
        %3569 = vperm.xlu0 %3568, %v3527
        %v3570 = vpop.permute.xlu0 %3569
        %3573 = vset.pattern.permute.xlu0 0
        %3574 = vperm.xlu0 %3573, %v3528
        %v3575 = vpop.permute.xlu0 %3574
        %3578 = vset.pattern.permute.xlu0 0
        %3579 = vperm.xlu0 %3578, %v3529
        %v3580 = vpop.permute.xlu0 %3579
        %3583 = vset.pattern.permute.xlu0 0
        %3584 = vperm.xlu0 %3583, %v3530
        %v3585 = vpop.permute.xlu0 %3584
        %3588 = vset.pattern.permute.xlu0 0
        %3589 = vperm.xlu0 %3588, %v3531
        %v3590 = vpop.permute.xlu0 %3589
        %3593 = vset.pattern.permute.xlu0 0
        %3594 = vperm.xlu0 %3593, %v3532
        %v3595 = vpop.permute.xlu0 %3594
        %3598 = vset.pattern.permute.xlu0 0
        %3599 = vperm.xlu0 %3598, %v3533
        %v3600 = vpop.permute.xlu0 %3599
        %3603 = vset.pattern.permute.xlu0 0
        %3604 = vperm.xlu0 %3603, %v3534
        %v3605 = vpop.permute.xlu0 %3604
        %3608 = vset.pattern.permute.xlu0 0
        %3609 = vperm.xlu0 %3608, %v3535
        %v3610 = vpop.permute.xlu0 %3609
        %3613 = vset.pattern.permute.xlu0 0
        %3614 = vperm.xlu0 %3613, %v3536
        %v3615 = vpop.permute.xlu0 %3614
        %v3617 = vmul.f32 %v2314, %v3540
        %v3618 = vmul.f32 %v2315, %v3545
        %v3619 = vmul.f32 %v2316, %v3550
        %v3620 = vmul.f32 %v2317, %v3555
        %v3621 = vmul.f32 %v2318, %v3560
        %v3622 = vmul.f32 %v2319, %v3565
        %v3623 = vmul.f32 %v2320, %v3570
        %v3624 = vmul.f32 %v2321, %v3575
        %v3625 = vmul.f32 %v2322, %v3580
        %v3626 = vmul.f32 %v2323, %v3585
        %v3627 = vmul.f32 %v2324, %v3590
        %v3628 = vmul.f32 %v2325, %v3595
        %v3629 = vmul.f32 %v2326, %v3600
        %v3630 = vmul.f32 %v2327, %v3605
        %v3631 = vmul.f32 %v2328, %v3610
        %v3632 = vmul.f32 %v2329, %v3615
        %v3633 = vadd.f32 %v3505, %v3617
        %v3634 = vadd.f32 %v3506, %v3618
        %v3635 = vadd.f32 %v3507, %v3619
        %v3636 = vadd.f32 %v3508, %v3620
        %v3637 = vadd.f32 %v3509, %v3621
        %v3638 = vadd.f32 %v3510, %v3622
        %v3639 = vadd.f32 %v3511, %v3623
        %v3640 = vadd.f32 %v3512, %v3624
        %v3641 = vadd.f32 %v3513, %v3625
        %v3642 = vadd.f32 %v3514, %v3626
        %v3643 = vadd.f32 %v3515, %v3627
        %v3644 = vadd.f32 %v3516, %v3628
        %v3645 = vadd.f32 %v3517, %v3629
        %v3646 = vadd.f32 %v3518, %v3630
        %v3647 = vadd.f32 %v3519, %v3631
        %v3648 = vadd.f32 %v3520, %v3632
        %v3649 = vld [vmem:[#allocation21] sm:$0x1]
        %v3650 = vld [vmem:[#allocation23] sm:$0x1]
        %v3651 = vsel %vm860, %v3633, 0.0
        %3652 = vadd.xlane.f32.xlu0 %v3651
        %v3653 = vpop.xlane.xlu0 %3652
        %v3654 = vsel %vm860, %v3634, 0.0
        %3655 = vadd.xlane.f32.xlu0 %v3654
        %v3656 = vpop.xlane.xlu0 %3655
        %v3657 = vsel %vm860, %v3635, 0.0
        %3658 = vadd.xlane.f32.xlu0 %v3657
        %v3659 = vpop.xlane.xlu0 %3658
        %v3660 = vsel %vm860, %v3636, 0.0
        %3661 = vadd.xlane.f32.xlu0 %v3660
        %v3662 = vpop.xlane.xlu0 %3661
        %v3663 = vsel %vm860, %v3637, 0.0
        %3664 = vadd.xlane.f32.xlu0 %v3663
        %v3665 = vpop.xlane.xlu0 %3664
        %v3666 = vsel %vm860, %v3638, 0.0
        %3667 = vadd.xlane.f32.xlu0 %v3666
        %v3668 = vpop.xlane.xlu0 %3667
        %v3669 = vsel %vm860, %v3639, 0.0
        %3670 = vadd.xlane.f32.xlu0 %v3669
        %v3671 = vpop.xlane.xlu0 %3670
        %v3672 = vsel %vm860, %v3640, 0.0
        %3673 = vadd.xlane.f32.xlu0 %v3672
        %v3674 = vpop.xlane.xlu0 %3673
        %v3675 = vsel %vm860, %v3641, 0.0
        %3676 = vadd.xlane.f32.xlu0 %v3675
        %v3677 = vpop.xlane.xlu0 %3676
        %v3678 = vsel %vm860, %v3642, 0.0
        %3679 = vadd.xlane.f32.xlu0 %v3678
        %v3680 = vpop.xlane.xlu0 %3679
        %v3681 = vsel %vm860, %v3643, 0.0
        %3682 = vadd.xlane.f32.xlu0 %v3681
        %v3683 = vpop.xlane.xlu0 %3682
        %v3684 = vsel %vm860, %v3644, 0.0
        %3685 = vadd.xlane.f32.xlu0 %v3684
        %v3686 = vpop.xlane.xlu0 %3685
        %v3687 = vsel %vm860, %v3645, 0.0
        %3688 = vadd.xlane.f32.xlu0 %v3687
        %v3689 = vpop.xlane.xlu0 %3688
        %v3690 = vsel %vm860, %v3646, 0.0
        %3691 = vadd.xlane.f32.xlu0 %v3690
        %v3692 = vpop.xlane.xlu0 %3691
        %v3693 = vsel %vm860, %v3647, 0.0
        %3694 = vadd.xlane.f32.xlu0 %v3693
        %v3695 = vpop.xlane.xlu0 %3694
        %v3696 = vsel %vm860, %v3648, 0.0
        %3697 = vadd.xlane.f32.xlu0 %v3696
        %v3698 = vpop.xlane.xlu0 %3697
        %v3699 = vmul.f32 %v3653, %v1562
        %v3700 = vmul.f32 %v3656, %v1562
        %v3701 = vmul.f32 %v3659, %v1562
        %v3702 = vmul.f32 %v3662, %v1562
        %v3703 = vmul.f32 %v3665, %v1562
        %v3704 = vmul.f32 %v3668, %v1562
        %v3705 = vmul.f32 %v3671, %v1562
        %v3706 = vmul.f32 %v3674, %v1562
        %v3707 = vmul.f32 %v3677, %v1562
        %v3708 = vmul.f32 %v3680, %v1562
        %v3709 = vmul.f32 %v3683, %v1562
        %v3710 = vmul.f32 %v3686, %v1562
        %v3711 = vmul.f32 %v3689, %v1562
        %v3712 = vmul.f32 %v3692, %v1562
        %v3713 = vmul.f32 %v3695, %v1562
        %v3714 = vmul.f32 %v3698, %v1562
        %v3715 = vsub.f32 %v3633, %v3699
        %v3716 = vsub.f32 %v3634, %v3700
        %v3717 = vsub.f32 %v3635, %v3701
        %v3718 = vsub.f32 %v3636, %v3702
        %v3719 = vsub.f32 %v3637, %v3703
        %v3720 = vsub.f32 %v3638, %v3704
        %v3721 = vsub.f32 %v3639, %v3705
        %v3722 = vsub.f32 %v3640, %v3706
        %v3723 = vsub.f32 %v3641, %v3707
        %v3724 = vsub.f32 %v3642, %v3708
        %v3725 = vsub.f32 %v3643, %v3709
        %v3726 = vsub.f32 %v3644, %v3710
        %v3727 = vsub.f32 %v3645, %v3711
        %v3728 = vsub.f32 %v3646, %v3712
        %v3729 = vsub.f32 %v3647, %v3713
        %v3730 = vsub.f32 %v3648, %v3714
        %v3731 = vmul.f32 %v3715, %v3715
        %v3732 = vmul.f32 %v3716, %v3716
        %v3733 = vmul.f32 %v3717, %v3717
        %v3734 = vmul.f32 %v3718, %v3718
        %v3735 = vmul.f32 %v3719, %v3719
        %v3736 = vmul.f32 %v3720, %v3720
        %v3737 = vmul.f32 %v3721, %v3721
        %v3738 = vmul.f32 %v3722, %v3722
        %v3739 = vmul.f32 %v3723, %v3723
        %v3740 = vmul.f32 %v3724, %v3724
        %v3741 = vmul.f32 %v3725, %v3725
        %v3742 = vmul.f32 %v3726, %v3726
        %v3743 = vmul.f32 %v3727, %v3727
        %v3744 = vmul.f32 %v3728, %v3728
        %v3745 = vmul.f32 %v3729, %v3729
        %v3746 = vmul.f32 %v3730, %v3730
        %v3747 = vsel %vm860, %v3731, 0.0
        %3748 = vadd.xlane.f32.xlu0 %v3747
        %v3749 = vpop.xlane.xlu0 %3748
        %v3750 = vsel %vm860, %v3732, 0.0
        %3751 = vadd.xlane.f32.xlu0 %v3750
        %v3752 = vpop.xlane.xlu0 %3751
        %v3753 = vsel %vm860, %v3733, 0.0
        %3754 = vadd.xlane.f32.xlu0 %v3753
        %v3755 = vpop.xlane.xlu0 %3754
        %v3756 = vsel %vm860, %v3734, 0.0
        %3757 = vadd.xlane.f32.xlu0 %v3756
        %v3758 = vpop.xlane.xlu0 %3757
        %v3759 = vsel %vm860, %v3735, 0.0
        %3760 = vadd.xlane.f32.xlu0 %v3759
        %v3761 = vpop.xlane.xlu0 %3760
        %v3762 = vsel %vm860, %v3736, 0.0
        %3763 = vadd.xlane.f32.xlu0 %v3762
        %v3764 = vpop.xlane.xlu0 %3763
        %v3765 = vsel %vm860, %v3737, 0.0
        %3766 = vadd.xlane.f32.xlu0 %v3765
        %v3767 = vpop.xlane.xlu0 %3766
        %v3768 = vsel %vm860, %v3738, 0.0
        %3769 = vadd.xlane.f32.xlu0 %v3768
        %v3770 = vpop.xlane.xlu0 %3769
        %v3771 = vsel %vm860, %v3739, 0.0
        %3772 = vadd.xlane.f32.xlu0 %v3771
        %v3773 = vpop.xlane.xlu0 %3772
        %v3774 = vsel %vm860, %v3740, 0.0
        %3775 = vadd.xlane.f32.xlu0 %v3774
        %v3776 = vpop.xlane.xlu0 %3775
        %v3777 = vsel %vm860, %v3741, 0.0
        %3778 = vadd.xlane.f32.xlu0 %v3777
        %v3779 = vpop.xlane.xlu0 %3778
        %v3780 = vsel %vm860, %v3742, 0.0
        %3781 = vadd.xlane.f32.xlu0 %v3780
        %v3782 = vpop.xlane.xlu0 %3781
        %v3783 = vsel %vm860, %v3743, 0.0
        %3784 = vadd.xlane.f32.xlu0 %v3783
        %v3785 = vpop.xlane.xlu0 %3784
        %v3786 = vsel %vm860, %v3744, 0.0
        %3787 = vadd.xlane.f32.xlu0 %v3786
        %v3788 = vpop.xlane.xlu0 %3787
        %v3789 = vsel %vm860, %v3745, 0.0
        %3790 = vadd.xlane.f32.xlu0 %v3789
        %v3791 = vpop.xlane.xlu0 %3790
        %v3792 = vsel %vm860, %v3746, 0.0
        %3793 = vadd.xlane.f32.xlu0 %v3792
        %v3794 = vpop.xlane.xlu0 %3793
        %v3795 = vmul.f32 %v3749, %v1562
        %v3796 = vmul.f32 %v3752, %v1562
        %v3797 = vmul.f32 %v3755, %v1562
        %v3798 = vmul.f32 %v3758, %v1562
        %v3799 = vmul.f32 %v3761, %v1562
        %v3800 = vmul.f32 %v3764, %v1562
        %v3801 = vmul.f32 %v3767, %v1562
        %v3802 = vmul.f32 %v3770, %v1562
        %v3803 = vmul.f32 %v3773, %v1562
        %v3804 = vmul.f32 %v3776, %v1562
        %v3805 = vmul.f32 %v3779, %v1562
        %v3806 = vmul.f32 %v3782, %v1562
        %v3807 = vmul.f32 %v3785, %v1562
        %v3808 = vmul.f32 %v3788, %v1562
        %v3809 = vmul.f32 %v3791, %v1562
        %v3810 = vmul.f32 %v3794, %v1562
        %v3811 = vadd.f32 %v3795, 1e-06
        %v3812 = vadd.f32 %v3796, 1e-06
        %v3813 = vadd.f32 %v3797, 1e-06
        %v3814 = vadd.f32 %v3798, 1e-06
        %v3815 = vadd.f32 %v3799, 1e-06
        %v3816 = vadd.f32 %v3800, 1e-06
        %v3817 = vadd.f32 %v3801, 1e-06
        %v3818 = vadd.f32 %v3802, 1e-06
        %v3819 = vadd.f32 %v3803, 1e-06
        %v3820 = vadd.f32 %v3804, 1e-06
        %v3821 = vadd.f32 %v3805, 1e-06
        %v3822 = vadd.f32 %v3806, 1e-06
        %v3823 = vadd.f32 %v3807, 1e-06
        %v3824 = vadd.f32 %v3808, 1e-06
        %v3825 = vadd.f32 %v3809, 1e-06
        %v3826 = vadd.f32 %v3810, 1e-06
        %v3827 = vrsqrt.pop %v3811
        %v3828 = vrsqrt.pop %v3812
        %v3829 = vrsqrt.pop %v3813
        %v3830 = vrsqrt.pop %v3814
        %v3831 = vrsqrt.pop %v3815
        %v3832 = vrsqrt.pop %v3816
        %v3833 = vrsqrt.pop %v3817
        %v3834 = vrsqrt.pop %v3818
        %v3835 = vrsqrt.pop %v3819
        %v3836 = vrsqrt.pop %v3820
        %v3837 = vrsqrt.pop %v3821
        %v3838 = vrsqrt.pop %v3822
        %v3839 = vrsqrt.pop %v3823
        %v3840 = vrsqrt.pop %v3824
        %v3841 = vrsqrt.pop %v3825
        %v3842 = vrsqrt.pop %v3826
        %v3843 = vmul.f32 %v3715, %v3827
        %v3844 = vmul.f32 %v3716, %v3828
        %v3845 = vmul.f32 %v3717, %v3829
        %v3846 = vmul.f32 %v3718, %v3830
        %v3847 = vmul.f32 %v3719, %v3831
        %v3848 = vmul.f32 %v3720, %v3832
        %v3849 = vmul.f32 %v3721, %v3833
        %v3850 = vmul.f32 %v3722, %v3834
        %v3851 = vmul.f32 %v3723, %v3835
        %v3852 = vmul.f32 %v3724, %v3836
        %v3853 = vmul.f32 %v3725, %v3837
        %v3854 = vmul.f32 %v3726, %v3838
        %v3855 = vmul.f32 %v3727, %v3839
        %v3856 = vmul.f32 %v3728, %v3840
        %v3857 = vmul.f32 %v3729, %v3841
        %v3858 = vmul.f32 %v3730, %v3842
        %v3860 = vlaneseq
        %v3861 = vshrl.u32 %v3860, 7
        %v3862 = vsub.s32 0, %v3861
        %v3863 = vrot.slane %v3649, %v3862
        %v3865 = vmul.f32 %v3843, %v3863
        %v3866 = vmul.f32 %v3844, %v3863
        %v3867 = vmul.f32 %v3845, %v3863
        %v3868 = vmul.f32 %v3846, %v3863
        %v3869 = vmul.f32 %v3847, %v3863
        %v3870 = vmul.f32 %v3848, %v3863
        %v3871 = vmul.f32 %v3849, %v3863
        %v3872 = vmul.f32 %v3850, %v3863
        %v3873 = vmul.f32 %v3851, %v3863
        %v3874 = vmul.f32 %v3852, %v3863
        %v3875 = vmul.f32 %v3853, %v3863
        %v3876 = vmul.f32 %v3854, %v3863
        %v3877 = vmul.f32 %v3855, %v3863
        %v3878 = vmul.f32 %v3856, %v3863
        %v3879 = vmul.f32 %v3857, %v3863
        %v3880 = vmul.f32 %v3858, %v3863
        %v3882 = vlaneseq
        %v3883 = vshrl.u32 %v3882, 7
        %v3884 = vsub.s32 0, %v3883
        %v3885 = vrot.slane %v3650, %v3884
        %v3887 = vadd.f32 %v3865, %v3885
        %v3888 = vadd.f32 %v3866, %v3885
        %v3889 = vadd.f32 %v3867, %v3885
        %v3890 = vadd.f32 %v3868, %v3885
        %v3891 = vadd.f32 %v3869, %v3885
        %v3892 = vadd.f32 %v3870, %v3885
        %v3893 = vadd.f32 %v3871, %v3885
        %v3894 = vadd.f32 %v3872, %v3885
        %v3895 = vadd.f32 %v3873, %v3885
        %v3896 = vadd.f32 %v3874, %v3885
        %v3897 = vadd.f32 %v3875, %v3885
        %v3898 = vadd.f32 %v3876, %v3885
        %v3899 = vadd.f32 %v3877, %v3885
        %v3900 = vadd.f32 %v3878, %v3885
        %v3901 = vadd.f32 %v3879, %v3885
        %v3902 = vadd.f32 %v3880, %v3885
        %3903 = vst.msk [vmem:[%s733] sm:$0xff] %vm860, %v3887
        %3904 = vst.msk [vmem:[%s733 + $0x8] sm:$0xff] %vm860, %v3888
        %3905 = vst.msk [vmem:[%s733 + $0x10] sm:$0xff] %vm860, %v3889
        %3906 = vst.msk [vmem:[%s733 + $0x18] sm:$0xff] %vm860, %v3890
        %3907 = vst.msk [vmem:[%s733 + $0x20] sm:$0xff] %vm860, %v3891
        %3908 = vst.msk [vmem:[%s733 + $0x28] sm:$0xff] %vm860, %v3892
        %3909 = vst.msk [vmem:[%s733 + $0x30] sm:$0xff] %vm860, %v3893
        %3910 = vst.msk [vmem:[%s733 + $0x38] sm:$0xff] %vm860, %v3894
        %3911 = vst.msk [vmem:[%s733 + $0x40] sm:$0xff] %vm860, %v3895
        %3912 = vst.msk [vmem:[%s733 + $0x48] sm:$0xff] %vm860, %v3896
        %3913 = vst.msk [vmem:[%s733 + $0x50] sm:$0xff] %vm860, %v3897
        %3914 = vst.msk [vmem:[%s733 + $0x58] sm:$0xff] %vm860, %v3898
        %3915 = vst.msk [vmem:[%s733 + $0x60] sm:$0xff] %vm860, %v3899
        %3916 = vst.msk [vmem:[%s733 + $0x68] sm:$0xff] %vm860, %v3900
        %3917 = vst.msk [vmem:[%s733 + $0x70] sm:$0xff] %vm860, %v3901
        %3918 = vst.msk [vmem:[%s733 + $0x78] sm:$0xff] %vm860, %v3902
        %vm3919 = vcmask 7168
        %3920 = vst.msk [vmem:[%s740] sm:$0xff] %vm3919, %v2815
        %3921 = vst.msk [vmem:[%s740 + $0x8] sm:$0xff] %vm3919, %v2816
        %3922 = vst.msk [vmem:[%s740 + $0x10] sm:$0xff] %vm3919, %v2817
        %3923 = vst.msk [vmem:[%s740 + $0x18] sm:$0xff] %vm3919, %v2818
        %3924 = vst.msk [vmem:[%s740 + $0x20] sm:$0xff] %vm3919, %v2819
        %3925 = vst.msk [vmem:[%s740 + $0x28] sm:$0xff] %vm3919, %v2820
        %3926 = vst.msk [vmem:[%s740 + $0x30] sm:$0xff] %vm3919, %v2821
        %3927 = vst.msk [vmem:[%s740 + $0x38] sm:$0xff] %vm3919, %v2822
        %3928 = vst.msk [vmem:[%s740 + $0x40] sm:$0xff] %vm3919, %v2823
        %3929 = vst.msk [vmem:[%s740 + $0x48] sm:$0xff] %vm3919, %v2824
        %3930 = vst.msk [vmem:[%s740 + $0x50] sm:$0xff] %vm3919, %v2825
        %3931 = vst.msk [vmem:[%s740 + $0x58] sm:$0xff] %vm3919, %v2826
        %3932 = vst.msk [vmem:[%s740 + $0x60] sm:$0xff] %vm3919, %v2827
        %3933 = vst.msk [vmem:[%s740 + $0x68] sm:$0xff] %vm3919, %v2828
        %3934 = vst.msk [vmem:[%s740 + $0x70] sm:$0xff] %vm3919, %v2829
        %3935 = vst.msk [vmem:[%s740 + $0x78] sm:$0xff] %vm3919, %v2830
        %3936 = vst.msk [vmem:[%s747] sm:$0xff] %vm3919, %v2847
        %3937 = vst.msk [vmem:[%s747 + $0x8] sm:$0xff] %vm3919, %v2848
        %3938 = vst.msk [vmem:[%s747 + $0x10] sm:$0xff] %vm3919, %v2849
        %3939 = vst.msk [vmem:[%s747 + $0x18] sm:$0xff] %vm3919, %v2850
        %3940 = vst.msk [vmem:[%s747 + $0x20] sm:$0xff] %vm3919, %v2851
        %3941 = vst.msk [vmem:[%s747 + $0x28] sm:$0xff] %vm3919, %v2852
        %3942 = vst.msk [vmem:[%s747 + $0x30] sm:$0xff] %vm3919, %v2853
        %3943 = vst.msk [vmem:[%s747 + $0x38] sm:$0xff] %vm3919, %v2854
        %3944 = vst.msk [vmem:[%s747 + $0x40] sm:$0xff] %vm3919, %v2855
        %3945 = vst.msk [vmem:[%s747 + $0x48] sm:$0xff] %vm3919, %v2856
        %3946 = vst.msk [vmem:[%s747 + $0x50] sm:$0xff] %vm3919, %v2857
        %3947 = vst.msk [vmem:[%s747 + $0x58] sm:$0xff] %vm3919, %v2858
        %3948 = vst.msk [vmem:[%s747 + $0x60] sm:$0xff] %vm3919, %v2859
        %3949 = vst.msk [vmem:[%s747 + $0x68] sm:$0xff] %vm3919, %v2860
        %3950 = vst.msk [vmem:[%s747 + $0x70] sm:$0xff] %vm3919, %v2861
        %3951 = vst.msk [vmem:[%s747 + $0x78] sm:$0xff] %vm3919, %v2862
        %s3952 = sand.u32 %s373, 1
        %s3953 = scalar_lea.sflag [#allocation5], %s3952
        %s3954 = sand.u32 %s373, 1
        %s3955 = smul.addr %s3954, 128
        %s3956 = scalar_lea.vmem [#allocation24], %s3955
        %s3957 = sand.u32 %s45, 1
        %s3958 = scalar_lea.sflag [#allocation26], %s3957
        %s3959 = sand.u32 %s401, 1
        %s3960 = smul.addr %s3959, 128
        %s3961 = scalar_lea.vmem [#allocation25], %s3960
        %s3962 = sand.u32 %s45, 1
        %s3963 = scalar_lea.sflag [#allocation26], %s3962
        %s3964 = sand.u32 %s429, 1
        %s3965 = smul.addr %s3964, 128
        %s3966 = scalar_lea.vmem [#allocation27], %s3965
        // Predicated region
        $region129: #{tpu_custom_call.1} parent=75 // pred_check
          %p3967 = pneg %p383
        $region130: #{tpu_custom_call.1} parent=75 // pred_check_branch
          %3969 = sbr.rel (%p3967) target = $region132
        $region131: #{tpu_custom_call.1} parent=75 // pred_region
          %s3970 = smul.u32 16, %s49
          %s3972 = ssub.s32 2048, 2048
          %3973 = vsyncadd %s3953, %s3972
          %s3974 = smul.addr %s50, 16
          %s3975 = sadd.s32 %s3970, %s3974
          %s3976 = smul.addr %s3975, 128
          %s3977 = scalar_lea.hbm %s14, %s3976
          %s3978 = sshll.u32 %s3956, 4
          %s3979 = int_to_ptr.vmem [resolvable:$true] %s3978
          %3984 = dma.vmem_to_hbm [thread:$0]  %s3979, 2048, %s3977, %s3953, 128, 128, 8
        $region132: #{tpu_custom_call.1} parent=75 // pred_fallthru
          _
        // Predicated region
        $region133: #{tpu_custom_call.1} parent=75 // pred_check
          %p3985 = pneg %p411
        $region134: #{tpu_custom_call.1} parent=75 // pred_check_branch
          %3987 = sbr.rel (%p3985) target = $region136
        $region135: #{tpu_custom_call.1} parent=75 // pred_region
          %s3988 = smul.u32 16, %s49
          %s3990 = ssub.s32 2048, 2048
          %3991 = vsyncadd %s3958, %s3990
          %s3992 = smul.addr %s50, 16
          %s3993 = sadd.s32 %s3988, %s3992
          %s3994 = smul.addr %s3993, 128
          %s3995 = scalar_lea.hbm %s15, %s3994
          %s3996 = sshll.u32 %s3961, 4
          %s3997 = int_to_ptr.vmem [resolvable:$true] %s3996
          %4002 = dma.vmem_to_hbm [thread:$0]  %s3997, 2048, %s3995, %s3958, 128, 128, 8
        $region136: #{tpu_custom_call.1} parent=75 // pred_fallthru
          _
        // Predicated region
        $region137: #{tpu_custom_call.1} parent=75 // pred_check
          %p4003 = pneg %p439
        $region138: #{tpu_custom_call.1} parent=75 // pred_check_branch
          %4005 = sbr.rel (%p4003) target = $region140
        $region139: #{tpu_custom_call.1} parent=75 // pred_region
          %s4006 = smul.u32 16, %s49
          %s4008 = ssub.s32 2048, 2048
          %4009 = vsyncadd %s3963, %s4008
          %s4010 = smul.addr %s50, 16
          %s4011 = sadd.s32 %s4006, %s4010
          %s4012 = smul.addr %s4011, 128
          %s4013 = scalar_lea.hbm %s16, %s4012
          %s4014 = sshll.u32 %s3966, 4
          %s4015 = int_to_ptr.vmem [resolvable:$true] %s4014
          %4020 = dma.vmem_to_hbm [thread:$0]  %s4015, 2048, %s4013, %s3963, 128, 128, 8
        $region140: #{tpu_custom_call.1} parent=75 // pred_fallthru
          _
      $region76: #{tpu_custom_call.1} parent=5 // pred_fallthru
        _
      %p4021 = scmp.le.s32.totalorder 2, %s40
      // Predicated region
      $region141: #{tpu_custom_call.1} parent=5 // pred_check
        %p4022 = pneg %p4021
      $region142: #{tpu_custom_call.1} parent=5 // pred_check_branch
        %4024 = sbr.rel (%p4022) target = $region144
      $region143: #{tpu_custom_call.1} parent=5 // pred_region
        %s4025 = ssub.s32 %s40, 2
        // Predicated region
        $region145: #{tpu_custom_call.1} parent=143 // pred_check
          %p4026 = pneg %p389
        $region146: #{tpu_custom_call.1} parent=143 // pred_check_branch
          %4028 = sbr.rel (%p4026) target = $region148
        $region147: #{tpu_custom_call.1} parent=143 // pred_region
          %s4029 = sand.u32 %s374, 1
          %s4030 = scalar_lea.sflag [#allocation5], %s4029
          %s4031 = sand.u32 %s374, 1
          %s4032 = smul.addr %s4031, 128
          %s4033 = scalar_lea.vmem [#allocation24], %s4032
          %4034 = dma.done %s4030, 2048
        $region148: #{tpu_custom_call.1} parent=143 // pred_fallthru
          _
        // Predicated region
        $region149: #{tpu_custom_call.1} parent=143 // pred_check
          %p4035 = pneg %p417
        $region150: #{tpu_custom_call.1} parent=143 // pred_check_branch
          %4037 = sbr.rel (%p4035) target = $region152
        $region151: #{tpu_custom_call.1} parent=143 // pred_region
          %s4038 = sand.u32 %s46, 1
          %s4039 = scalar_lea.sflag [#allocation26], %s4038
          %s4040 = sand.u32 %s402, 1
          %s4041 = smul.addr %s4040, 128
          %s4042 = scalar_lea.vmem [#allocation25], %s4041
          %4043 = dma.done %s4039, 2048
        $region152: #{tpu_custom_call.1} parent=143 // pred_fallthru
          _
        // Predicated region
        $region153: #{tpu_custom_call.1} parent=143 // pred_check
          %p4044 = pneg %p445
        $region154: #{tpu_custom_call.1} parent=143 // pred_check_branch
          %4046 = sbr.rel (%p4044) target = $region156
        $region155: #{tpu_custom_call.1} parent=143 // pred_region
          %s4047 = sand.u32 %s46, 1
          %s4048 = scalar_lea.sflag [#allocation26], %s4047
          %s4049 = sand.u32 %s430, 1
          %s4050 = smul.addr %s4049, 128
          %s4051 = scalar_lea.vmem [#allocation27], %s4050
          %4052 = dma.done %s4048, 2048
        $region156: #{tpu_custom_call.1} parent=143 // pred_fallthru
          _
      $region144: #{tpu_custom_call.1} parent=5 // pred_fallthru
        _
    $region6: #{tpu_custom_call.1} parent=1 // loop_footer
      %s44 = sadd.s32 1, %s40
    $region7: #{tpu_custom_call.1} parent=1 // loop_footer_branch
      %39 = sbr.rel target = $region3
    $region8: #{tpu_custom_call.1} parent=1 // loop_exit
      _
    %4053 = vsyncpa [#allocation4], 1
    %s4054 = scalar_lea.sflag [#allocation4], 1
    %4055 = vsyncpa %s4054, 1
    %4056 = vsyncpa [#allocation7], 1
    %4057 = vsyncpa [#allocation10], 1
    %4058 = vsyncpa [#allocation13], 1
    %4059 = vsyncpa [#allocation16], 1
    %4060 = vsyncpa [#allocation19], 1
    %4061 = vsyncpa [#allocation22], 1
    %4062 = vsyncpa [#allocation5], 1
    %s4063 = scalar_lea.sflag [#allocation5], 1
    %4064 = vsyncpa %s4063, 1
    %4065 = vsyncpa [#allocation26], 1
    %s4066 = scalar_lea.sflag [#allocation26], 1
    %4067 = vsyncpa %s4066, 1

</llo_original>
